<compile_context>
chip_gen: v6e
topology: v6e:2x2x1
jax: 0.10.0
libtpu: 0.0.40
codegen_flags: <defaults>
</compile_context>

<pallas_src>
import jax
import jax.numpy as jnp
from jax.experimental import pallas as pl
from jax.experimental.pallas import tpu as pltpu

FILTERS = [16, 32, 64, 128, 256, 32]
BN_EPS = 1e-5
_ROW_TILE_TARGET = 4096   # packed rows per x block (x Cp lanes x 2 B ~ 1-2 MiB)


# ----------------------------- Pallas kernel -------------------------------

def _fused_stage_kernel(x_ref, w1_ref, w2_ref, av_ref, pw1_ref, pw2_ref, pv_ref,
                        o_ref, acc_ref):
    """attention-mask + global-avg-pool + projector, fused.

    x_ref   : (1, TR, Cp)  lane-packed pixels, bf16 (Cp = g*C, g pixels/row)
    w1/w2   : (Cp, Cp)     block-diagonal 1x1-conv weights, bf16
                           (BN2d scale already folded into w1 columns)
    av      : (2, Cp)      row 0 = folded BN2d shift t1, row 1 = conv2 bias b2
    pw1     : (Cp, C)      g stacked copies of (proj_w1 * bn1d_scale / HW)
    pw2     : (C, C)       second projector linear weight
    pv      : (2, C)       row 0 = folded BN1d shift, row 1 = linear2 bias
    o_ref   : (1, 1, C)    projector output for this sample
    acc_ref : (1, Cp)      running masked-feature sum (VMEM scratch, f32)
    """
    r = pl.program_id(1)

    @pl.when(r == 0)
    def _():
        acc_ref[...] = jnp.zeros_like(acc_ref)

    xb = x_ref[0]                                          # (TR, Cp) bf16
    # bf16 x bf16 MXU matmuls with f32 accumulation.
    h = jnp.dot(xb, w1_ref[...], preferred_element_type=jnp.float32)
    h = jnp.maximum(h + av_ref[0:1, :], 0.0)
    z = (jnp.dot(h.astype(jnp.bfloat16), w2_ref[...],
                 preferred_element_type=jnp.float32) + av_ref[1:2, :])
    # sigmoid = 1 / (1 + exp(-z)): one EUP exp + approx reciprocal (no divide).
    mask = pl.reciprocal(1.0 + jnp.exp(-z), approx=True)
    masked = mask * xb.astype(jnp.float32)                 # stays in VMEM
    acc_ref[...] += jnp.sum(masked, axis=0, keepdims=True)

    @pl.when(r == pl.num_programs(1) - 1)
    def _():
        # acc @ (g stacked copies of pw1/HW) unpacks the lane groups and does
        # the global-average-pool + first projector linear in one MXU op.
        ph = jnp.dot(acc_ref[...], pw1_ref[...],
                     preferred_element_type=jnp.float32)
        ph = jnp.maximum(ph + pv_ref[0:1, :], 0.0)
        out = (jnp.dot(ph, pw2_ref[...], preferred_element_type=jnp.float32)
               + pv_ref[1:2, :])
        o_ref[0] = out.astype(o_ref.dtype)


# ----------------------------- Pallas wrapper ------------------------------

def _mxu_pack_width():
    """Lane-pack target: 256 fills the 2x256^2 MXU on v6e/v7x; 128 on <= v5."""
    try:
        kind = jax.devices()[0].device_kind.lower()
    except Exception:
        return 128
    if any(v in kind for v in ("v2", "v3", "v4", "v5")):
        return 128
    return 256


def _pick_row_tile(rows):
    """Return (row_tile, padded_rows).

    Prefer an exact multiple-of-8 divisor near the target (no padding); else
    pad rows up to a multiple of the target tile.  Zero-padded pixels are
    inert: sigmoid(z) * 0 == 0, so the masked-sum accumulation is unaffected.
    """
    if rows <= _ROW_TILE_TARGET:
        return rows, rows
    for t in range(_ROW_TILE_TARGET, _ROW_TILE_TARGET // 2 - 1, -8):
        if rows % t == 0:
            return t, rows
    tr = _ROW_TILE_TARGET
    return tr, ((rows + tr - 1) // tr) * tr


def fused_mask_pool_project(feat_nhwc, sp):
    """mask_feature_maps(feat, i) followed by Projector(), in one kernel."""
    N, H, W, C = feat_nhwc.shape
    HW = H * W
    Cp = sp["w1d"].shape[0]
    g = Cp // C                              # pixels packed per Cp-wide row

    # Pack g pixels per row; pad the pixel count so every lane/MXU column is
    # used even for awkward spatial sizes (zero pixels contribute 0).
    hw_pad = -(-HW // g) * g
    x2 = feat_nhwc.reshape(N, HW, C)
    if hw_pad != HW:
        x2 = jnp.pad(x2, ((0, 0), (0, hw_pad - HW), (0, 0)))
    R = hw_pad // g
    TR, Rp = _pick_row_tile(R)
    xp = x2.reshape(N, R, Cp)
    if Rp != R:
        xp = jnp.pad(xp, ((0, 0), (0, Rp - R), (0, 0)))
    xp = xp.astype(jnp.bfloat16)             # the only large HBM stream: 2 B/elem

    cost = pl.CostEstimate(
        flops=int(4 * N * Rp * Cp * Cp + 2 * N * (Cp * C + C * C)),
        transcendentals=int(N * Rp * Cp),
        bytes_accessed=int(N * Rp * Cp * 2 + 2 * Cp * Cp * 2 + 2 * Cp * 4
                           + Cp * C * 4 + C * C * 4 + 2 * C * 4 + N * C * 4),
    )

    # Size the scoped-VMEM limit from the actual (double-buffered) blocks so
    # large row tiles stay safe within v7x's 64 MiB physical VMEM.
    x_blk_bytes = TR * Cp * 2
    const_bytes = (2 * Cp * Cp * 2 + 2 * Cp * 4 + Cp * C * 4
                   + C * C * 4 + 2 * C * 4)
    need = 2 * (2 * x_blk_bytes + 2 * const_bytes) + Cp * 4 + (4 << 20)
    vmem_limit = int(min(64 << 20, max(32 << 20, need)))

    # TODO(synk): for v7x with N==1 (or odd N) the batch-'parallel' axis leaves
    # one TensorCore idle; splitting the row axis across cores with per-core
    # partial accumulators + a combine step would recover it.
    out = pl.pallas_call(
        _fused_stage_kernel,
        out_shape=jax.ShapeDtypeStruct((N, 1, C), jnp.float32),
        grid=(N, Rp // TR),
        in_specs=[
            pl.BlockSpec((1, TR, Cp), lambda n, r: (n, r, 0)),
            pl.BlockSpec((Cp, Cp), lambda n, r: (0, 0)),
            pl.BlockSpec((Cp, Cp), lambda n, r: (0, 0)),
            pl.BlockSpec((2, Cp), lambda n, r: (0, 0)),
            pl.BlockSpec((Cp, C), lambda n, r: (0, 0)),
            pl.BlockSpec((C, C), lambda n, r: (0, 0)),
            pl.BlockSpec((2, C), lambda n, r: (0, 0)),
        ],
        out_specs=pl.BlockSpec((1, 1, C), lambda n, r: (n, 0, 0)),
        scratch_shapes=[pltpu.VMEM((1, Cp), jnp.float32)],
        compiler_params=pltpu.CompilerParams(
            dimension_semantics=("parallel", "arbitrary"),
            vmem_limit_bytes=vmem_limit),
        cost_estimate=cost,
    )(xp, sp["w1d"], sp["w2d"], sp["av"], sp["pw1"], sp["pw2"], sp["pv"])
    return out.reshape(N, C)


# ----------------------- synthetic UNet encoder (glue) ----------------------

def _conv_nhwc(x, w, b):
    y = jax.lax.conv_general_dilated(
        x, w, window_strides=(1, 1), padding="SAME",
        dimension_numbers=("NHWC", "HWIO", "NHWC"))
    return y + b


def _avgpool2(x):
    N, H, W, C = x.shape
    return x.reshape(N, H // 2, 2, W // 2, 2, C).mean(axis=(2, 4))


def unet_conv0(x, params):
    return jax.nn.relu(_conv_nhwc(x, params["conv0_w"], params["conv0_b"]))


def unet_down(x, dp):
    return jax.nn.relu(_conv_nhwc(_avgpool2(x), dp["w"], dp["b"]))


def unet_rec(x, params):
    # TODO(synk): the real wrapped UNet (and its decoder) is not specified in
    # the given source; a 1x1 reconstruction head on conv_0 features stands in
    # for `rec = self.unet(x)`.
    e0 = unet_conv0(x, params)
    return _conv_nhwc(e0, params["rec_w"], params["rec_b"])


# ----------------------------- parameter setup ------------------------------

def _fold_bn(bias, gamma, beta, mean, var):
    s = gamma / jnp.sqrt(var + BN_EPS)
    t = (bias - mean) * s + beta
    return s.reshape(1, -1), t.reshape(1, -1)


def _init_linear(key, c_in, c_out):
    kw, kb = jax.random.split(key)
    lim = 1.0 / jnp.sqrt(c_in)
    w = jax.random.uniform(kw, (c_in, c_out), jnp.float32, -lim, lim)
    b = jax.random.uniform(kb, (c_out,), jnp.float32, -lim, lim)
    return w, b


def _init_bn(key, c):
    k1, k2, k3, k4 = jax.random.split(key, 4)
    gamma = jax.random.uniform(k1, (c,), jnp.float32, 0.5, 1.5)
    beta = 0.1 * jax.random.normal(k2, (c,), jnp.float32)
    mean = 0.1 * jax.random.normal(k3, (c,), jnp.float32)
    var = jax.random.uniform(k4, (c,), jnp.float32, 0.5, 1.5)
    return gamma, beta, mean, var


def _init_conv(key, kh, kw, c_in, c_out):
    kkw, kkb = jax.random.split(key)
    lim = 1.0 / jnp.sqrt(c_in * kh * kw)
    w = jax.random.uniform(kkw, (kh, kw, c_in, c_out), jnp.float32, -lim, lim)
    b = jax.random.uniform(kkb, (c_out,), jnp.float32, -lim, lim)
    return w, b


def _pack_stage(attn, proj, c, hw, pack):
    """Precompute (once, at init) the lane-packed / folded kernel weights."""
    g = max(1, pack // c)
    eye_g = jnp.eye(g, dtype=jnp.float32)
    w1s = attn["w1"] * attn["s1"]                    # fold BN2d scale into cols
    w1d = jnp.kron(eye_g, w1s).astype(jnp.bfloat16)
    w2d = jnp.kron(eye_g, attn["w2"]).astype(jnp.bfloat16)
    av = jnp.concatenate([jnp.tile(attn["t1"], (1, g)),
                          jnp.tile(attn["b2"], (1, g))], axis=0)      # (2, g*c)
    pw1 = jnp.tile(proj["w1"] * proj["s1"] * (1.0 / hw), (g, 1))      # (g*c, c)
    pv = jnp.concatenate([proj["t1"], proj["b2"]], axis=0)            # (2, c)
    return {"w1d": w1d, "w2d": w2d, "av": av,
            "pw1": pw1, "pw2": proj["w2"], "pv": pv}


def init_params(key, in_ch, spatial):
    f = FILTERS
    keys = iter(jax.random.split(key, 40))
    params = {}
    params["conv0_w"], params["conv0_b"] = _init_conv(next(keys), 3, 3, in_ch, f[0])
    params["down"] = []
    for c_in, c_out in [(f[0], f[0]), (f[0], f[1]), (f[1], f[2]), (f[2], f[3])]:
        w, b = _init_conv(next(keys), 3, 3, c_in, c_out)
        params["down"].append({"w": w, "b": b})
    params["rec_w"], params["rec_b"] = _init_conv(next(keys), 1, 1, f[0], in_ch)

    # TODO(synk): BatchNorm layers are implemented in eval/inference mode
    # (folded into per-channel scale/shift); training-mode batch statistics
    # would require an extra reduction pass.
    pack = _mxu_pack_width()
    params["attn"], params["proj"], params["stage"] = [], [], []
    for i in range(4):
        c = f[i]
        hw = (spatial // (2 ** (i + 1))) ** 2
        w1, b1 = _init_linear(next(keys), c, c)
        ga, be, mu, va = _init_bn(next(keys), c)
        s1, t1 = _fold_bn(b1, ga, be, mu, va)
        w2, b2 = _init_linear(next(keys), c, c)
        attn = {"w1": w1, "s1": s1, "t1": t1, "w2": w2, "b2": b2.reshape(1, -1)}
        params["attn"].append(attn)

        w1p, b1p = _init_linear(next(keys), c, c)
        gp, bep, mup, vap = _init_bn(next(keys), c)
        s1p, t1p = _fold_bn(b1p, gp, bep, mup, vap)
        w2p, b2p = _init_linear(next(keys), c, c)
        proj = {"w1": w1p, "s1": s1p, "t1": t1p,
                "w2": w2p, "b2": b2p.reshape(1, -1)}
        params["proj"].append(proj)

        params["stage"].append(_pack_stage(attn, proj, c, hw, pack))
    return params


# ------------------------------- forward pass -------------------------------

def mtan_rec_unet_forward(x_nchw, params):
    x = jnp.transpose(x_nchw, (0, 2, 3, 1))                    # NCHW -> NHWC
    rec = unet_rec(x, params)                                  # rec = unet(x)

    feat = unet_conv0(x, params)                               # x = conv_0(x)
    outs = []
    for i in range(4):
        feat = unet_down(feat, params["down"][i])              # out_i = down_i(...)
        # TODO(synk): the PyTorch forward feeds the (tensor, None) tuple from
        # mask_feature_maps straight into Projector (which would raise at
        # runtime); we pass the refined feature tensor, the intended semantics.
        outs.append(fused_mask_pool_project(feat, params["stage"][i]))
    latent = jnp.concatenate(outs, axis=-1)
    return jnp.transpose(rec, (0, 3, 1, 2)), latent            # rec back to NCHW


# pure-JAX reference (same bf16 matmul inputs / f32 accumulation as the kernel)
def _reference(x_nchw, params):
    x = jnp.transpose(x_nchw, (0, 2, 3, 1))
    rec = unet_rec(x, params)
    feat = unet_conv0(x, params)
    outs = []
    for i in range(4):
        feat = unet_down(feat, params["down"][i])
        p = params["attn"][i]
        N, H, W, C = feat.shape
        fb = feat.reshape(-1, C).astype(jnp.bfloat16)
        w1s = (p["w1"] * p["s1"]).astype(jnp.bfloat16)
        h = jnp.maximum(
            jnp.dot(fb, w1s, preferred_element_type=jnp.float32) + p["t1"], 0.0)
        z = jnp.dot(h.astype(jnp.bfloat16), p["w2"].astype(jnp.bfloat16),
                    preferred_element_type=jnp.float32) + p["b2"]
        masked = jax.nn.sigmoid(z) * fb.astype(jnp.float32)
        pooled = masked.reshape(N, H * W, C).mean(axis=1)
        q = params["proj"][i]
        h2 = jnp.maximum(pooled @ (q["w1"] * q["s1"]) + q["t1"], 0.0)
        outs.append(h2 @ q["w2"] + q["b2"])
    return jnp.transpose(rec, (0, 3, 1, 2)), jnp.concatenate(outs, axis=-1)


if __name__ == "__main__":
    key = jax.random.PRNGKey(0)
    k_x, k_p = jax.random.split(key)

    N, C_IN, S = 2, 4, 16
    x = jax.random.normal(k_x, (N, C_IN, S, S), jnp.float32)   # NCHW input
    params = init_params(k_p, C_IN, S)

    fwd = jax.jit(mtan_rec_unet_forward)
    rec, latent = fwd(x, params)
    jax.block_until_ready((rec, latent))

    assert rec.shape == (N, C_IN, S, S), rec.shape
    assert latent.shape == (N, sum(FILTERS[:4])), latent.shape   # (2, 240)

    rec_ref, latent_ref = _reference(x, params)
    assert jnp.allclose(rec, rec_ref, rtol=1e-5, atol=1e-5)
    # bf16 matmul inputs + approx-reciprocal sigmoid => looser latent tolerance.
    assert jnp.allclose(latent, latent_ref, rtol=1e-2, atol=1e-2), (
        float(jnp.max(jnp.abs(latent - latent_ref))))

    print("KERNEL_OK")
</pallas_src>

<mosaic_0001>
module attributes {stable_mosaic.version = 11 : i64} {
  func.func @_fused_stage_kernel(%arg0: i32, %arg1: i32, %arg2: memref<1x1x256xbf16, #tpu.memory_space<vmem>>, %arg3: memref<256x256xbf16, #tpu.memory_space<vmem>>, %arg4: memref<256x256xbf16, #tpu.memory_space<vmem>>, %arg5: memref<2x256xf32, #tpu.memory_space<vmem>>, %arg6: memref<256x128xf32, #tpu.memory_space<vmem>>, %arg7: memref<128x128xf32, #tpu.memory_space<vmem>>, %arg8: memref<2x128xf32, #tpu.memory_space<vmem>>, %arg9: memref<1x1x128xf32, #tpu.memory_space<vmem>>, %arg10: memref<1x256xf32, #tpu.memory_space<vmem>>) attributes {dimension_semantics = [#tpu.dimension_semantics<parallel>, #tpu.dimension_semantics<arbitrary>], iteration_bounds = array<i64: 2, 1>, scalar_prefetch = 0 : i64, scratch_operands = 1 : i64, tpu.core_type = #tpu.core_type<tc>, window_params = [{transform_indices = @transform_0, window_bounds = array<i64: 1, 1, 256>}, {pipeline_mode = #tpu.pipeline_mode<synchronous>, transform_indices = @transform_1, window_bounds = array<i64: 256, 256>}, {pipeline_mode = #tpu.pipeline_mode<synchronous>, transform_indices = @transform_2, window_bounds = array<i64: 256, 256>}, {pipeline_mode = #tpu.pipeline_mode<synchronous>, transform_indices = @transform_3, window_bounds = array<i64: 2, 256>}, {pipeline_mode = #tpu.pipeline_mode<synchronous>, transform_indices = @transform_4, window_bounds = array<i64: 256, 128>}, {pipeline_mode = #tpu.pipeline_mode<synchronous>, transform_indices = @transform_5, window_bounds = array<i64: 128, 128>}, {pipeline_mode = #tpu.pipeline_mode<synchronous>, transform_indices = @transform_6, window_bounds = array<i64: 2, 128>}, {transform_indices = @transform_7, window_bounds = array<i64: 1, 1, 128>}]} {
    %c0_i32 = arith.constant 0 : i32
    %0 = arith.cmpi eq, %arg1, %c0_i32 : i32
    %1 = arith.extui %0 : i1 to i32
    %c0_i32_0 = arith.constant 0 : i32
    %2 = arith.cmpi ne, %1, %c0_i32_0 : i32
    scf.if %2 {
      %cst_21 = arith.constant 0.000000e+00 : f32
      %32 = vector.broadcast %cst_21 : f32 to vector<1x256xf32>
      %c0_22 = arith.constant 0 : index
      %c0_23 = arith.constant 0 : index
      %33 = vector.load %arg10[%c0_22, %c0_23] : memref<1x256xf32, #tpu.memory_space<vmem>>, vector<1x256xf32>
      tpu.vector_store %arg10[%c0_22, %c0_23], %32 {strides = array<i32>} : memref<1x256xf32, #tpu.memory_space<vmem>>, vector<1x256xf32>,
    } else {
    }
    %c0 = arith.constant 0 : index
    %c0_1 = arith.constant 0 : index
    %c0_2 = arith.constant 0 : index
    %3 = vector.load %arg2[%c0, %c0_1, %c0_2] : memref<1x1x256xbf16, #tpu.memory_space<vmem>>, vector<1x1x256xbf16>
    %4 = vector.shape_cast %3 : vector<1x1x256xbf16> to vector<1x256xbf16>
    %c0_3 = arith.constant 0 : index
    %c0_4 = arith.constant 0 : index
    %5 = vector.load %arg3[%c0_3, %c0_4] : memref<256x256xbf16, #tpu.memory_space<vmem>>, vector<256x256xbf16>
    %cst = arith.constant dense<0.000000e+00> : vector<1x256xf32>
    %6 = tpu.matmul %4, %5, %cst {dimension_numbers = #tpu.dot_dimension_numbers<[1], [0], [0], [1], [0, 0, 1, 1], [], []>} : vector<1x256xbf16>, vector<256x256xbf16>, vector<1x256xf32> -> vector<1x256xf32>
    %c0_5 = arith.constant 0 : index
    %c0_6 = arith.constant 0 : index
    %7 = vector.load %arg5[%c0_5, %c0_6] : memref<2x256xf32, #tpu.memory_space<vmem>>, vector<1x256xf32>
    %8 = arith.addf %6, %7 : vector<1x256xf32>
    %cst_7 = arith.constant 0.000000e+00 : f32
    %9 = vector.broadcast %cst_7 : f32 to vector<1x256xf32>
    %10 = arith.maximumf %8, %9 : vector<1x256xf32>
    %11 = arith.truncf %10 : vector<1x256xf32> to vector<1x256xbf16>
    %c0_8 = arith.constant 0 : index
    %c0_9 = arith.constant 0 : index
    %12 = vector.load %arg4[%c0_8, %c0_9] : memref<256x256xbf16, #tpu.memory_space<vmem>>, vector<256x256xbf16>
    %cst_10 = arith.constant dense<0.000000e+00> : vector<1x256xf32>
    %13 = tpu.matmul %11, %12, %cst_10 {dimension_numbers = #tpu.dot_dimension_numbers<[1], [0], [0], [1], [0, 0, 1, 1], [], []>} : vector<1x256xbf16>, vector<256x256xbf16>, vector<1x256xf32> -> vector<1x256xf32>
    %c1 = arith.constant 1 : index
    %c0_11 = arith.constant 0 : index
    %14 = vector.load %arg5[%c1, %c0_11] : memref<2x256xf32, #tpu.memory_space<vmem>>, vector<1x256xf32>
    %15 = arith.addf %13, %14 : vector<1x256xf32>
    %cst_12 = arith.constant 0.000000e+00 : f32
    %16 = vector.broadcast %cst_12 : f32 to vector<1x256xf32>
    %17 = arith.subf %16, %15 : vector<1x256xf32>
    %18 = math.exp %17 : vector<1x256xf32>
    %cst_13 = arith.constant 1.000000e+00 : f32
    %19 = vector.broadcast %cst_13 : f32 to vector<1x256xf32>
    %20 = arith.addf %19, %18 : vector<1x256xf32>
    %21 = tpu.reciprocal %20 {approx = true} : vector<1x256xf32> -> vector<1x256xf32>
    %22 = arith.extf %4 : vector<1x256xbf16> to vector<1x256xf32>
    %23 = arith.mulf %21, %22 : vector<1x256xf32>
    %c0_14 = arith.constant 0 : index
    %c0_15 = arith.constant 0 : index
    %24 = vector.load %arg10[%c0_14, %c0_15] : memref<1x256xf32, #tpu.memory_space<vmem>>, vector<1x256xf32>
    %cst_16 = arith.constant dense<0.000000e+00> : vector<256xf32>
    %25 = vector.multi_reduction <add>, %23, %cst_16 [0] : vector<1x256xf32> to vector<256xf32>
    %26 = vector.shape_cast %25 : vector<256xf32> to vector<1x256xf32>
    %27 = arith.addf %24, %26 : vector<1x256xf32>
    %c0_17 = arith.constant 0 : index
    %c0_18 = arith.constant 0 : index
    %28 = vector.load %arg10[%c0_17, %c0_18] : memref<1x256xf32, #tpu.memory_space<vmem>>, vector<1x256xf32>
    tpu.vector_store %arg10[%c0_17, %c0_18], %27 {strides = array<i32>} : memref<1x256xf32, #tpu.memory_space<vmem>>, vector<1x256xf32>,
    %c0_i32_19 = arith.constant 0 : i32
    %29 = arith.cmpi eq, %arg1, %c0_i32_19 : i32
    %30 = arith.extui %29 : i1 to i32
    %c0_i32_20 = arith.constant 0 : i32
    %31 = arith.cmpi ne, %30, %c0_i32_20 : i32
    scf.if %31 {
      %c0_21 = arith.constant 0 : index
      %c0_22 = arith.constant 0 : index
      %32 = vector.load %arg10[%c0_21, %c0_22] : memref<1x256xf32, #tpu.memory_space<vmem>>, vector<1x256xf32>
      %c0_23 = arith.constant 0 : index
      %c0_24 = arith.constant 0 : index
      %33 = vector.load %arg6[%c0_23, %c0_24] : memref<256x128xf32, #tpu.memory_space<vmem>>, vector<256x128xf32>
      %cst_25 = arith.constant dense<0.000000e+00> : vector<1x128xf32>
      %34 = tpu.matmul %32, %33, %cst_25 {dimension_numbers = #tpu.dot_dimension_numbers<[1], [0], [0], [1], [0, 0, 1, 1], [], []>} : vector<1x256xf32>, vector<256x128xf32>, vector<1x128xf32> -> vector<1x128xf32>
      %c0_26 = arith.constant 0 : index
      %c0_27 = arith.constant 0 : index
      %35 = vector.load %arg8[%c0_26, %c0_27] : memref<2x128xf32, #tpu.memory_space<vmem>>, vector<1x128xf32>
      %36 = arith.addf %34, %35 : vector<1x128xf32>
      %cst_28 = arith.constant 0.000000e+00 : f32
      %37 = vector.broadcast %cst_28 : f32 to vector<1x128xf32>
      %38 = arith.maximumf %36, %37 : vector<1x128xf32>
      %c0_29 = arith.constant 0 : index
      %c0_30 = arith.constant 0 : index
      %39 = vector.load %arg7[%c0_29, %c0_30] : memref<128x128xf32, #tpu.memory_space<vmem>>, vector<128x128xf32>
      %cst_31 = arith.constant dense<0.000000e+00> : vector<1x128xf32>
      %40 = tpu.matmul %38, %39, %cst_31 {dimension_numbers = #tpu.dot_dimension_numbers<[1], [0], [0], [1], [0, 0, 1, 1], [], []>} : vector<1x128xf32>, vector<128x128xf32>, vector<1x128xf32> -> vector<1x128xf32>
      %c1_32 = arith.constant 1 : index
      %c0_33 = arith.constant 0 : index
      %41 = vector.load %arg8[%c1_32, %c0_33] : memref<2x128xf32, #tpu.memory_space<vmem>>, vector<1x128xf32>
      %42 = arith.addf %40, %41 : vector<1x128xf32>
      %c0_34 = arith.constant 0 : index
      %c0_35 = arith.constant 0 : index
      %c0_36 = arith.constant 0 : index
      %43 = vector.load %arg9[%c0_34, %c0_35, %c0_36] : memref<1x1x128xf32, #tpu.memory_space<vmem>>, vector<1x1x128xf32>
      %44 = vector.shape_cast %43 : vector<1x1x128xf32> to vector<1x128xf32>
      %45 = vector.shape_cast %42 : vector<1x128xf32> to vector<1x1x128xf32>
      tpu.vector_store %arg9[%c0_34, %c0_35, %c0_36], %45 {strides = array<i32>} : memref<1x1x128xf32, #tpu.memory_space<vmem>>, vector<1x1x128xf32>,
    } else {
    }
    return
  }
  func.func @transform_0(%arg0: i32, %arg1: i32) -> (i32, i32, i32) {
    %c0_i32 = arith.constant 0 : i32
    %c0_i32_0 = arith.constant 0 : i32
    return %arg0, %arg1, %c0_i32 : i32, i32, i32
  }
  func.func @transform_1(%arg0: i32, %arg1: i32) -> (i32, i32) {
    %c0_i32 = arith.constant 0 : i32
    %c0_i32_0 = arith.constant 0 : i32
    %c0_i32_1 = arith.constant 0 : i32
    return %c0_i32, %c0_i32_0 : i32, i32
  }
  func.func @transform_2(%arg0: i32, %arg1: i32) -> (i32, i32) {
    %c0_i32 = arith.constant 0 : i32
    %c0_i32_0 = arith.constant 0 : i32
    %c0_i32_1 = arith.constant 0 : i32
    return %c0_i32, %c0_i32_0 : i32, i32
  }
  func.func @transform_3(%arg0: i32, %arg1: i32) -> (i32, i32) {
    %c0_i32 = arith.constant 0 : i32
    %c0_i32_0 = arith.constant 0 : i32
    %c0_i32_1 = arith.constant 0 : i32
    return %c0_i32, %c0_i32_0 : i32, i32
  }
  func.func @transform_4(%arg0: i32, %arg1: i32) -> (i32, i32) {
    %c0_i32 = arith.constant 0 : i32
    %c0_i32_0 = arith.constant 0 : i32
    %c0_i32_1 = arith.constant 0 : i32
    return %c0_i32, %c0_i32_0 : i32, i32
  }
  func.func @transform_5(%arg0: i32, %arg1: i32) -> (i32, i32) {
    %c0_i32 = arith.constant 0 : i32
    %c0_i32_0 = arith.constant 0 : i32
    %c0_i32_1 = arith.constant 0 : i32
    return %c0_i32, %c0_i32_0 : i32, i32
  }
  func.func @transform_6(%arg0: i32, %arg1: i32) -> (i32, i32) {
    %c0_i32 = arith.constant 0 : i32
    %c0_i32_0 = arith.constant 0 : i32
    %c0_i32_1 = arith.constant 0 : i32
    return %c0_i32, %c0_i32_0 : i32, i32
  }
  func.func @transform_7(%arg0: i32, %arg1: i32) -> (i32, i32, i32) {
    %c0_i32 = arith.constant 0 : i32
    %c0_i32_0 = arith.constant 0 : i32
    %c0_i32_1 = arith.constant 0 : i32
    return %arg0, %c0_i32, %c0_i32_0 : i32, i32, i32
  }
}

module attributes {stable_mosaic.version = 11 : i64} {
  func.func @_fused_stage_kernel(%arg0: i32, %arg1: i32, %arg2: memref<1x1x256xbf16, #tpu.memory_space<vmem>>, %arg3: memref<256x256xbf16, #tpu.memory_space<vmem>>, %arg4: memref<256x256xbf16, #tpu.memory_space<vmem>>, %arg5: memref<2x256xf32, #tpu.memory_space<vmem>>, %arg6: memref<256x64xf32, #tpu.memory_space<vmem>>, %arg7: memref<64x64xf32, #tpu.memory_space<vmem>>, %arg8: memref<2x64xf32, #tpu.memory_space<vmem>>, %arg9: memref<1x1x64xf32, #tpu.memory_space<vmem>>, %arg10: memref<1x256xf32, #tpu.memory_space<vmem>>) attributes {dimension_semantics = [#tpu.dimension_semantics<parallel>, #tpu.dimension_semantics<arbitrary>], iteration_bounds = array<i64: 2, 1>, scalar_prefetch = 0 : i64, scratch_operands = 1 : i64, tpu.core_type = #tpu.core_type<tc>, window_params = [{transform_indices = @transform_0, window_bounds = array<i64: 1, 1, 256>}, {pipeline_mode = #tpu.pipeline_mode<synchronous>, transform_indices = @transform_1, window_bounds = array<i64: 256, 256>}, {pipeline_mode = #tpu.pipeline_mode<synchronous>, transform_indices = @transform_2, window_bounds = array<i64: 256, 256>}, {pipeline_mode = #tpu.pipeline_mode<synchronous>, transform_indices = @transform_3, window_bounds = array<i64: 2, 256>}, {pipeline_mode = #tpu.pipeline_mode<synchronous>, transform_indices = @transform_4, window_bounds = array<i64: 256, 64>}, {pipeline_mode = #tpu.pipeline_mode<synchronous>, transform_indices = @transform_5, window_bounds = array<i64: 64, 64>}, {pipeline_mode = #tpu.pipeline_mode<synchronous>, transform_indices = @transform_6, window_bounds = array<i64: 2, 64>}, {transform_indices = @transform_7, window_bounds = array<i64: 1, 1, 64>}]} {
    %c0_i32 = arith.constant 0 : i32
    %0 = arith.cmpi eq, %arg1, %c0_i32 : i32
    %1 = arith.extui %0 : i1 to i32
    %c0_i32_0 = arith.constant 0 : i32
    %2 = arith.cmpi ne, %1, %c0_i32_0 : i32
    scf.if %2 {
      %cst_21 = arith.constant 0.000000e+00 : f32
      %32 = vector.broadcast %cst_21 : f32 to vector<1x256xf32>
      %c0_22 = arith.constant 0 : index
      %c0_23 = arith.constant 0 : index
      %33 = vector.load %arg10[%c0_22, %c0_23] : memref<1x256xf32, #tpu.memory_space<vmem>>, vector<1x256xf32>
      tpu.vector_store %arg10[%c0_22, %c0_23], %32 {strides = array<i32>} : memref<1x256xf32, #tpu.memory_space<vmem>>, vector<1x256xf32>,
    } else {
    }
    %c0 = arith.constant 0 : index
    %c0_1 = arith.constant 0 : index
    %c0_2 = arith.constant 0 : index
    %3 = vector.load %arg2[%c0, %c0_1, %c0_2] : memref<1x1x256xbf16, #tpu.memory_space<vmem>>, vector<1x1x256xbf16>
    %4 = vector.shape_cast %3 : vector<1x1x256xbf16> to vector<1x256xbf16>
    %c0_3 = arith.constant 0 : index
    %c0_4 = arith.constant 0 : index
    %5 = vector.load %arg3[%c0_3, %c0_4] : memref<256x256xbf16, #tpu.memory_space<vmem>>, vector<256x256xbf16>
    %cst = arith.constant dense<0.000000e+00> : vector<1x256xf32>
    %6 = tpu.matmul %4, %5, %cst {dimension_numbers = #tpu.dot_dimension_numbers<[1], [0], [0], [1], [0, 0, 1, 1], [], []>} : vector<1x256xbf16>, vector<256x256xbf16>, vector<1x256xf32> -> vector<1x256xf32>
    %c0_5 = arith.constant 0 : index
    %c0_6 = arith.constant 0 : index
    %7 = vector.load %arg5[%c0_5, %c0_6] : memref<2x256xf32, #tpu.memory_space<vmem>>, vector<1x256xf32>
    %8 = arith.addf %6, %7 : vector<1x256xf32>
    %cst_7 = arith.constant 0.000000e+00 : f32
    %9 = vector.broadcast %cst_7 : f32 to vector<1x256xf32>
    %10 = arith.maximumf %8, %9 : vector<1x256xf32>
    %11 = arith.truncf %10 : vector<1x256xf32> to vector<1x256xbf16>
    %c0_8 = arith.constant 0 : index
    %c0_9 = arith.constant 0 : index
    %12 = vector.load %arg4[%c0_8, %c0_9] : memref<256x256xbf16, #tpu.memory_space<vmem>>, vector<256x256xbf16>
    %cst_10 = arith.constant dense<0.000000e+00> : vector<1x256xf32>
    %13 = tpu.matmul %11, %12, %cst_10 {dimension_numbers = #tpu.dot_dimension_numbers<[1], [0], [0], [1], [0, 0, 1, 1], [], []>} : vector<1x256xbf16>, vector<256x256xbf16>, vector<1x256xf32> -> vector<1x256xf32>
    %c1 = arith.constant 1 : index
    %c0_11 = arith.constant 0 : index
    %14 = vector.load %arg5[%c1, %c0_11] : memref<2x256xf32, #tpu.memory_space<vmem>>, vector<1x256xf32>
    %15 = arith.addf %13, %14 : vector<1x256xf32>
    %cst_12 = arith.constant 0.000000e+00 : f32
    %16 = vector.broadcast %cst_12 : f32 to vector<1x256xf32>
    %17 = arith.subf %16, %15 : vector<1x256xf32>
    %18 = math.exp %17 : vector<1x256xf32>
    %cst_13 = arith.constant 1.000000e+00 : f32
    %19 = vector.broadcast %cst_13 : f32 to vector<1x256xf32>
    %20 = arith.addf %19, %18 : vector<1x256xf32>
    %21 = tpu.reciprocal %20 {approx = true} : vector<1x256xf32> -> vector<1x256xf32>
    %22 = arith.extf %4 : vector<1x256xbf16> to vector<1x256xf32>
    %23 = arith.mulf %21, %22 : vector<1x256xf32>
    %c0_14 = arith.constant 0 : index
    %c0_15 = arith.constant 0 : index
    %24 = vector.load %arg10[%c0_14, %c0_15] : memref<1x256xf32, #tpu.memory_space<vmem>>, vector<1x256xf32>
    %cst_16 = arith.constant dense<0.000000e+00> : vector<256xf32>
    %25 = vector.multi_reduction <add>, %23, %cst_16 [0] : vector<1x256xf32> to vector<256xf32>
    %26 = vector.shape_cast %25 : vector<256xf32> to vector<1x256xf32>
    %27 = arith.addf %24, %26 : vector<1x256xf32>
    %c0_17 = arith.constant 0 : index
    %c0_18 = arith.constant 0 : index
    %28 = vector.load %arg10[%c0_17, %c0_18] : memref<1x256xf32, #tpu.memory_space<vmem>>, vector<1x256xf32>
    tpu.vector_store %arg10[%c0_17, %c0_18], %27 {strides = array<i32>} : memref<1x256xf32, #tpu.memory_space<vmem>>, vector<1x256xf32>,
    %c0_i32_19 = arith.constant 0 : i32
    %29 = arith.cmpi eq, %arg1, %c0_i32_19 : i32
    %30 = arith.extui %29 : i1 to i32
    %c0_i32_20 = arith.constant 0 : i32
    %31 = arith.cmpi ne, %30, %c0_i32_20 : i32
    scf.if %31 {
      %c0_21 = arith.constant 0 : index
      %c0_22 = arith.constant 0 : index
      %32 = vector.load %arg10[%c0_21, %c0_22] : memref<1x256xf32, #tpu.memory_space<vmem>>, vector<1x256xf32>
      %c0_23 = arith.constant 0 : index
      %c0_24 = arith.constant 0 : index
      %33 = vector.load %arg6[%c0_23, %c0_24] : memref<256x64xf32, #tpu.memory_space<vmem>>, vector<256x64xf32>
      %cst_25 = arith.constant dense<0.000000e+00> : vector<1x64xf32>
      %34 = tpu.matmul %32, %33, %cst_25 {dimension_numbers = #tpu.dot_dimension_numbers<[1], [0], [0], [1], [0, 0, 1, 1], [], []>} : vector<1x256xf32>, vector<256x64xf32>, vector<1x64xf32> -> vector<1x64xf32>
      %c0_26 = arith.constant 0 : index
      %c0_27 = arith.constant 0 : index
      %35 = vector.load %arg8[%c0_26, %c0_27] : memref<2x64xf32, #tpu.memory_space<vmem>>, vector<1x64xf32>
      %36 = arith.addf %34, %35 : vector<1x64xf32>
      %cst_28 = arith.constant 0.000000e+00 : f32
      %37 = vector.broadcast %cst_28 : f32 to vector<1x64xf32>
      %38 = arith.maximumf %36, %37 : vector<1x64xf32>
      %c0_29 = arith.constant 0 : index
      %c0_30 = arith.constant 0 : index
      %39 = vector.load %arg7[%c0_29, %c0_30] : memref<64x64xf32, #tpu.memory_space<vmem>>, vector<64x64xf32>
      %cst_31 = arith.constant dense<0.000000e+00> : vector<1x64xf32>
      %40 = tpu.matmul %38, %39, %cst_31 {dimension_numbers = #tpu.dot_dimension_numbers<[1], [0], [0], [1], [0, 0, 1, 1], [], []>} : vector<1x64xf32>, vector<64x64xf32>, vector<1x64xf32> -> vector<1x64xf32>
      %c1_32 = arith.constant 1 : index
      %c0_33 = arith.constant 0 : index
      %41 = vector.load %arg8[%c1_32, %c0_33] : memref<2x64xf32, #tpu.memory_space<vmem>>, vector<1x64xf32>
      %42 = arith.addf %40, %41 : vector<1x64xf32>
      %c0_34 = arith.constant 0 : index
      %c0_35 = arith.constant 0 : index
      %c0_36 = arith.constant 0 : index
      %43 = vector.load %arg9[%c0_34, %c0_35, %c0_36] : memref<1x1x64xf32, #tpu.memory_space<vmem>>, vector<1x1x64xf32>
      %44 = vector.shape_cast %43 : vector<1x1x64xf32> to vector<1x64xf32>
      %45 = vector.shape_cast %42 : vector<1x64xf32> to vector<1x1x64xf32>
      tpu.vector_store %arg9[%c0_34, %c0_35, %c0_36], %45 {strides = array<i32>} : memref<1x1x64xf32, #tpu.memory_space<vmem>>, vector<1x1x64xf32>,
    } else {
    }
    return
  }
  func.func @transform_0(%arg0: i32, %arg1: i32) -> (i32, i32, i32) {
    %c0_i32 = arith.constant 0 : i32
    %c0_i32_0 = arith.constant 0 : i32
    return %arg0, %arg1, %c0_i32 : i32, i32, i32
  }
  func.func @transform_1(%arg0: i32, %arg1: i32) -> (i32, i32) {
    %c0_i32 = arith.constant 0 : i32
    %c0_i32_0 = arith.constant 0 : i32
    %c0_i32_1 = arith.constant 0 : i32
    return %c0_i32, %c0_i32_0 : i32, i32
  }
  func.func @transform_2(%arg0: i32, %arg1: i32) -> (i32, i32) {
    %c0_i32 = arith.constant 0 : i32
    %c0_i32_0 = arith.constant 0 : i32
    %c0_i32_1 = arith.constant 0 : i32
    return %c0_i32, %c0_i32_0 : i32, i32
  }
  func.func @transform_3(%arg0: i32, %arg1: i32) -> (i32, i32) {
    %c0_i32 = arith.constant 0 : i32
    %c0_i32_0 = arith.constant 0 : i32
    %c0_i32_1 = arith.constant 0 : i32
    return %c0_i32, %c0_i32_0 : i32, i32
  }
  func.func @transform_4(%arg0: i32, %arg1: i32) -> (i32, i32) {
    %c0_i32 = arith.constant 0 : i32
    %c0_i32_0 = arith.constant 0 : i32
    %c0_i32_1 = arith.constant 0 : i32
    return %c0_i32, %c0_i32_0 : i32, i32
  }
  func.func @transform_5(%arg0: i32, %arg1: i32) -> (i32, i32) {
    %c0_i32 = arith.constant 0 : i32
    %c0_i32_0 = arith.constant 0 : i32
    %c0_i32_1 = arith.constant 0 : i32
    return %c0_i32, %c0_i32_0 : i32, i32
  }
  func.func @transform_6(%arg0: i32, %arg1: i32) -> (i32, i32) {
    %c0_i32 = arith.constant 0 : i32
    %c0_i32_0 = arith.constant 0 : i32
    %c0_i32_1 = arith.constant 0 : i32
    return %c0_i32, %c0_i32_0 : i32, i32
  }
  func.func @transform_7(%arg0: i32, %arg1: i32) -> (i32, i32, i32) {
    %c0_i32 = arith.constant 0 : i32
    %c0_i32_0 = arith.constant 0 : i32
    %c0_i32_1 = arith.constant 0 : i32
    return %arg0, %c0_i32, %c0_i32_0 : i32, i32, i32
  }
}

module attributes {stable_mosaic.version = 11 : i64} {
  func.func @_fused_stage_kernel(%arg0: i32, %arg1: i32, %arg2: memref<1x2x256xbf16, #tpu.memory_space<vmem>>, %arg3: memref<256x256xbf16, #tpu.memory_space<vmem>>, %arg4: memref<256x256xbf16, #tpu.memory_space<vmem>>, %arg5: memref<2x256xf32, #tpu.memory_space<vmem>>, %arg6: memref<256x32xf32, #tpu.memory_space<vmem>>, %arg7: memref<32x32xf32, #tpu.memory_space<vmem>>, %arg8: memref<2x32xf32, #tpu.memory_space<vmem>>, %arg9: memref<1x1x32xf32, #tpu.memory_space<vmem>>, %arg10: memref<1x256xf32, #tpu.memory_space<vmem>>) attributes {dimension_semantics = [#tpu.dimension_semantics<parallel>, #tpu.dimension_semantics<arbitrary>], iteration_bounds = array<i64: 2, 1>, scalar_prefetch = 0 : i64, scratch_operands = 1 : i64, tpu.core_type = #tpu.core_type<tc>, window_params = [{transform_indices = @transform_0, window_bounds = array<i64: 1, 2, 256>}, {pipeline_mode = #tpu.pipeline_mode<synchronous>, transform_indices = @transform_1, window_bounds = array<i64: 256, 256>}, {pipeline_mode = #tpu.pipeline_mode<synchronous>, transform_indices = @transform_2, window_bounds = array<i64: 256, 256>}, {pipeline_mode = #tpu.pipeline_mode<synchronous>, transform_indices = @transform_3, window_bounds = array<i64: 2, 256>}, {pipeline_mode = #tpu.pipeline_mode<synchronous>, transform_indices = @transform_4, window_bounds = array<i64: 256, 32>}, {pipeline_mode = #tpu.pipeline_mode<synchronous>, transform_indices = @transform_5, window_bounds = array<i64: 32, 32>}, {pipeline_mode = #tpu.pipeline_mode<synchronous>, transform_indices = @transform_6, window_bounds = array<i64: 2, 32>}, {transform_indices = @transform_7, window_bounds = array<i64: 1, 1, 32>}]} {
    %c0_i32 = arith.constant 0 : i32
    %0 = arith.cmpi eq, %arg1, %c0_i32 : i32
    %1 = arith.extui %0 : i1 to i32
    %c0_i32_0 = arith.constant 0 : i32
    %2 = arith.cmpi ne, %1, %c0_i32_0 : i32
    scf.if %2 {
      %cst_21 = arith.constant 0.000000e+00 : f32
      %34 = vector.broadcast %cst_21 : f32 to vector<1x256xf32>
      %c0_22 = arith.constant 0 : index
      %c0_23 = arith.constant 0 : index
      %35 = vector.load %arg10[%c0_22, %c0_23] : memref<1x256xf32, #tpu.memory_space<vmem>>, vector<1x256xf32>
      tpu.vector_store %arg10[%c0_22, %c0_23], %34 {strides = array<i32>} : memref<1x256xf32, #tpu.memory_space<vmem>>, vector<1x256xf32>,
    } else {
    }
    %c0 = arith.constant 0 : index
    %c0_1 = arith.constant 0 : index
    %c0_2 = arith.constant 0 : index
    %3 = vector.load %arg2[%c0, %c0_1, %c0_2] : memref<1x2x256xbf16, #tpu.memory_space<vmem>>, vector<1x2x256xbf16>
    %4 = vector.shape_cast %3 : vector<1x2x256xbf16> to vector<2x256xbf16>
    %c0_3 = arith.constant 0 : index
    %c0_4 = arith.constant 0 : index
    %5 = vector.load %arg3[%c0_3, %c0_4] : memref<256x256xbf16, #tpu.memory_space<vmem>>, vector<256x256xbf16>
    %cst = arith.constant dense<0.000000e+00> : vector<2x256xf32>
    %6 = tpu.matmul %4, %5, %cst {dimension_numbers = #tpu.dot_dimension_numbers<[1], [0], [0], [1], [0, 0, 1, 1], [], []>} : vector<2x256xbf16>, vector<256x256xbf16>, vector<2x256xf32> -> vector<2x256xf32>
    %c0_5 = arith.constant 0 : index
    %c0_6 = arith.constant 0 : index
    %7 = vector.load %arg5[%c0_5, %c0_6] : memref<2x256xf32, #tpu.memory_space<vmem>>, vector<1x256xf32>
    %8 = vector.broadcast %7 : vector<1x256xf32> to vector<2x256xf32>
    %9 = arith.addf %6, %8 : vector<2x256xf32>
    %cst_7 = arith.constant 0.000000e+00 : f32
    %10 = vector.broadcast %cst_7 : f32 to vector<2x256xf32>
    %11 = arith.maximumf %9, %10 : vector<2x256xf32>
    %12 = arith.truncf %11 : vector<2x256xf32> to vector<2x256xbf16>
    %c0_8 = arith.constant 0 : index
    %c0_9 = arith.constant 0 : index
    %13 = vector.load %arg4[%c0_8, %c0_9] : memref<256x256xbf16, #tpu.memory_space<vmem>>, vector<256x256xbf16>
    %cst_10 = arith.constant dense<0.000000e+00> : vector<2x256xf32>
    %14 = tpu.matmul %12, %13, %cst_10 {dimension_numbers = #tpu.dot_dimension_numbers<[1], [0], [0], [1], [0, 0, 1, 1], [], []>} : vector<2x256xbf16>, vector<256x256xbf16>, vector<2x256xf32> -> vector<2x256xf32>
    %c1 = arith.constant 1 : index
    %c0_11 = arith.constant 0 : index
    %15 = vector.load %arg5[%c1, %c0_11] : memref<2x256xf32, #tpu.memory_space<vmem>>, vector<1x256xf32>
    %16 = vector.broadcast %15 : vector<1x256xf32> to vector<2x256xf32>
    %17 = arith.addf %14, %16 : vector<2x256xf32>
    %cst_12 = arith.constant 0.000000e+00 : f32
    %18 = vector.broadcast %cst_12 : f32 to vector<2x256xf32>
    %19 = arith.subf %18, %17 : vector<2x256xf32>
    %20 = math.exp %19 : vector<2x256xf32>
    %cst_13 = arith.constant 1.000000e+00 : f32
    %21 = vector.broadcast %cst_13 : f32 to vector<2x256xf32>
    %22 = arith.addf %21, %20 : vector<2x256xf32>
    %23 = tpu.reciprocal %22 {approx = true} : vector<2x256xf32> -> vector<2x256xf32>
    %24 = arith.extf %4 : vector<2x256xbf16> to vector<2x256xf32>
    %25 = arith.mulf %23, %24 : vector<2x256xf32>
    %c0_14 = arith.constant 0 : index
    %c0_15 = arith.constant 0 : index
    %26 = vector.load %arg10[%c0_14, %c0_15] : memref<1x256xf32, #tpu.memory_space<vmem>>, vector<1x256xf32>
    %cst_16 = arith.constant dense<0.000000e+00> : vector<256xf32>
    %27 = vector.multi_reduction <add>, %25, %cst_16 [0] : vector<2x256xf32> to vector<256xf32>
    %28 = vector.shape_cast %27 : vector<256xf32> to vector<1x256xf32>
    %29 = arith.addf %26, %28 : vector<1x256xf32>
    %c0_17 = arith.constant 0 : index
    %c0_18 = arith.constant 0 : index
    %30 = vector.load %arg10[%c0_17, %c0_18] : memref<1x256xf32, #tpu.memory_space<vmem>>, vector<1x256xf32>
    tpu.vector_store %arg10[%c0_17, %c0_18], %29 {strides = array<i32>} : memref<1x256xf32, #tpu.memory_space<vmem>>, vector<1x256xf32>,
    %c0_i32_19 = arith.constant 0 : i32
    %31 = arith.cmpi eq, %arg1, %c0_i32_19 : i32
    %32 = arith.extui %31 : i1 to i32
    %c0_i32_20 = arith.constant 0 : i32
    %33 = arith.cmpi ne, %32, %c0_i32_20 : i32
    scf.if %33 {
      %c0_21 = arith.constant 0 : index
      %c0_22 = arith.constant 0 : index
      %34 = vector.load %arg10[%c0_21, %c0_22] : memref<1x256xf32, #tpu.memory_space<vmem>>, vector<1x256xf32>
      %c0_23 = arith.constant 0 : index
      %c0_24 = arith.constant 0 : index
      %35 = vector.load %arg6[%c0_23, %c0_24] : memref<256x32xf32, #tpu.memory_space<vmem>>, vector<256x32xf32>
      %cst_25 = arith.constant dense<0.000000e+00> : vector<1x32xf32>
      %36 = tpu.matmul %34, %35, %cst_25 {dimension_numbers = #tpu.dot_dimension_numbers<[1], [0], [0], [1], [0, 0, 1, 1], [], []>} : vector<1x256xf32>, vector<256x32xf32>, vector<1x32xf32> -> vector<1x32xf32>
      %c0_26 = arith.constant 0 : index
      %c0_27 = arith.constant 0 : index
      %37 = vector.load %arg8[%c0_26, %c0_27] : memref<2x32xf32, #tpu.memory_space<vmem>>, vector<1x32xf32>
      %38 = arith.addf %36, %37 : vector<1x32xf32>
      %cst_28 = arith.constant 0.000000e+00 : f32
      %39 = vector.broadcast %cst_28 : f32 to vector<1x32xf32>
      %40 = arith.maximumf %38, %39 : vector<1x32xf32>
      %c0_29 = arith.constant 0 : index
      %c0_30 = arith.constant 0 : index
      %41 = vector.load %arg7[%c0_29, %c0_30] : memref<32x32xf32, #tpu.memory_space<vmem>>, vector<32x32xf32>
      %cst_31 = arith.constant dense<0.000000e+00> : vector<1x32xf32>
      %42 = tpu.matmul %40, %41, %cst_31 {dimension_numbers = #tpu.dot_dimension_numbers<[1], [0], [0], [1], [0, 0, 1, 1], [], []>} : vector<1x32xf32>, vector<32x32xf32>, vector<1x32xf32> -> vector<1x32xf32>
      %c1_32 = arith.constant 1 : index
      %c0_33 = arith.constant 0 : index
      %43 = vector.load %arg8[%c1_32, %c0_33] : memref<2x32xf32, #tpu.memory_space<vmem>>, vector<1x32xf32>
      %44 = arith.addf %42, %43 : vector<1x32xf32>
      %c0_34 = arith.constant 0 : index
      %c0_35 = arith.constant 0 : index
      %c0_36 = arith.constant 0 : index
      %45 = vector.load %arg9[%c0_34, %c0_35, %c0_36] : memref<1x1x32xf32, #tpu.memory_space<vmem>>, vector<1x1x32xf32>
      %46 = vector.shape_cast %45 : vector<1x1x32xf32> to vector<1x32xf32>
      %47 = vector.shape_cast %44 : vector<1x32xf32> to vector<1x1x32xf32>
      tpu.vector_store %arg9[%c0_34, %c0_35, %c0_36], %47 {strides = array<i32>} : memref<1x1x32xf32, #tpu.memory_space<vmem>>, vector<1x1x32xf32>,
    } else {
    }
    return
  }
  func.func @transform_0(%arg0: i32, %arg1: i32) -> (i32, i32, i32) {
    %c0_i32 = arith.constant 0 : i32
    %c0_i32_0 = arith.constant 0 : i32
    return %arg0, %arg1, %c0_i32 : i32, i32, i32
  }
  func.func @transform_1(%arg0: i32, %arg1: i32) -> (i32, i32) {
    %c0_i32 = arith.constant 0 : i32
    %c0_i32_0 = arith.constant 0 : i32
    %c0_i32_1 = arith.constant 0 : i32
    return %c0_i32, %c0_i32_0 : i32, i32
  }
  func.func @transform_2(%arg0: i32, %arg1: i32) -> (i32, i32) {
    %c0_i32 = arith.constant 0 : i32
    %c0_i32_0 = arith.constant 0 : i32
    %c0_i32_1 = arith.constant 0 : i32
    return %c0_i32, %c0_i32_0 : i32, i32
  }
  func.func @transform_3(%arg0: i32, %arg1: i32) -> (i32, i32) {
    %c0_i32 = arith.constant 0 : i32
    %c0_i32_0 = arith.constant 0 : i32
    %c0_i32_1 = arith.constant 0 : i32
    return %c0_i32, %c0_i32_0 : i32, i32
  }
  func.func @transform_4(%arg0: i32, %arg1: i32) -> (i32, i32) {
    %c0_i32 = arith.constant 0 : i32
    %c0_i32_0 = arith.constant 0 : i32
    %c0_i32_1 = arith.constant 0 : i32
    return %c0_i32, %c0_i32_0 : i32, i32
  }
  func.func @transform_5(%arg0: i32, %arg1: i32) -> (i32, i32) {
    %c0_i32 = arith.constant 0 : i32
    %c0_i32_0 = arith.constant 0 : i32
    %c0_i32_1 = arith.constant 0 : i32
    return %c0_i32, %c0_i32_0 : i32, i32
  }
  func.func @transform_6(%arg0: i32, %arg1: i32) -> (i32, i32) {
    %c0_i32 = arith.constant 0 : i32
    %c0_i32_0 = arith.constant 0 : i32
    %c0_i32_1 = arith.constant 0 : i32
    return %c0_i32, %c0_i32_0 : i32, i32
  }
  func.func @transform_7(%arg0: i32, %arg1: i32) -> (i32, i32, i32) {
    %c0_i32 = arith.constant 0 : i32
    %c0_i32_0 = arith.constant 0 : i32
    %c0_i32_1 = arith.constant 0 : i32
    return %arg0, %c0_i32, %c0_i32_0 : i32, i32, i32
  }
}

module attributes {stable_mosaic.version = 11 : i64} {
  func.func @_fused_stage_kernel(%arg0: i32, %arg1: i32, %arg2: memref<1x4x256xbf16, #tpu.memory_space<vmem>>, %arg3: memref<256x256xbf16, #tpu.memory_space<vmem>>, %arg4: memref<256x256xbf16, #tpu.memory_space<vmem>>, %arg5: memref<2x256xf32, #tpu.memory_space<vmem>>, %arg6: memref<256x16xf32, #tpu.memory_space<vmem>>, %arg7: memref<16x16xf32, #tpu.memory_space<vmem>>, %arg8: memref<2x16xf32, #tpu.memory_space<vmem>>, %arg9: memref<1x1x16xf32, #tpu.memory_space<vmem>>, %arg10: memref<1x256xf32, #tpu.memory_space<vmem>>) attributes {dimension_semantics = [#tpu.dimension_semantics<parallel>, #tpu.dimension_semantics<arbitrary>], iteration_bounds = array<i64: 2, 1>, scalar_prefetch = 0 : i64, scratch_operands = 1 : i64, tpu.core_type = #tpu.core_type<tc>, window_params = [{transform_indices = @transform_0, window_bounds = array<i64: 1, 4, 256>}, {pipeline_mode = #tpu.pipeline_mode<synchronous>, transform_indices = @transform_1, window_bounds = array<i64: 256, 256>}, {pipeline_mode = #tpu.pipeline_mode<synchronous>, transform_indices = @transform_2, window_bounds = array<i64: 256, 256>}, {pipeline_mode = #tpu.pipeline_mode<synchronous>, transform_indices = @transform_3, window_bounds = array<i64: 2, 256>}, {pipeline_mode = #tpu.pipeline_mode<synchronous>, transform_indices = @transform_4, window_bounds = array<i64: 256, 16>}, {pipeline_mode = #tpu.pipeline_mode<synchronous>, transform_indices = @transform_5, window_bounds = array<i64: 16, 16>}, {pipeline_mode = #tpu.pipeline_mode<synchronous>, transform_indices = @transform_6, window_bounds = array<i64: 2, 16>}, {transform_indices = @transform_7, window_bounds = array<i64: 1, 1, 16>}]} {
    %c0_i32 = arith.constant 0 : i32
    %0 = arith.cmpi eq, %arg1, %c0_i32 : i32
    %1 = arith.extui %0 : i1 to i32
    %c0_i32_0 = arith.constant 0 : i32
    %2 = arith.cmpi ne, %1, %c0_i32_0 : i32
    scf.if %2 {
      %cst_21 = arith.constant 0.000000e+00 : f32
      %34 = vector.broadcast %cst_21 : f32 to vector<1x256xf32>
      %c0_22 = arith.constant 0 : index
      %c0_23 = arith.constant 0 : index
      %35 = vector.load %arg10[%c0_22, %c0_23] : memref<1x256xf32, #tpu.memory_space<vmem>>, vector<1x256xf32>
      tpu.vector_store %arg10[%c0_22, %c0_23], %34 {strides = array<i32>} : memref<1x256xf32, #tpu.memory_space<vmem>>, vector<1x256xf32>,
    } else {
    }
    %c0 = arith.constant 0 : index
    %c0_1 = arith.constant 0 : index
    %c0_2 = arith.constant 0 : index
    %3 = vector.load %arg2[%c0, %c0_1, %c0_2] : memref<1x4x256xbf16, #tpu.memory_space<vmem>>, vector<1x4x256xbf16>
    %4 = vector.shape_cast %3 : vector<1x4x256xbf16> to vector<4x256xbf16>
    %c0_3 = arith.constant 0 : index
    %c0_4 = arith.constant 0 : index
    %5 = vector.load %arg3[%c0_3, %c0_4] : memref<256x256xbf16, #tpu.memory_space<vmem>>, vector<256x256xbf16>
    %cst = arith.constant dense<0.000000e+00> : vector<4x256xf32>
    %6 = tpu.matmul %4, %5, %cst {dimension_numbers = #tpu.dot_dimension_numbers<[1], [0], [0], [1], [0, 0, 1, 1], [], []>} : vector<4x256xbf16>, vector<256x256xbf16>, vector<4x256xf32> -> vector<4x256xf32>
    %c0_5 = arith.constant 0 : index
    %c0_6 = arith.constant 0 : index
    %7 = vector.load %arg5[%c0_5, %c0_6] : memref<2x256xf32, #tpu.memory_space<vmem>>, vector<1x256xf32>
    %8 = vector.broadcast %7 : vector<1x256xf32> to vector<4x256xf32>
    %9 = arith.addf %6, %8 : vector<4x256xf32>
    %cst_7 = arith.constant 0.000000e+00 : f32
    %10 = vector.broadcast %cst_7 : f32 to vector<4x256xf32>
    %11 = arith.maximumf %9, %10 : vector<4x256xf32>
    %12 = arith.truncf %11 : vector<4x256xf32> to vector<4x256xbf16>
    %c0_8 = arith.constant 0 : index
    %c0_9 = arith.constant 0 : index
    %13 = vector.load %arg4[%c0_8, %c0_9] : memref<256x256xbf16, #tpu.memory_space<vmem>>, vector<256x256xbf16>
    %cst_10 = arith.constant dense<0.000000e+00> : vector<4x256xf32>
    %14 = tpu.matmul %12, %13, %cst_10 {dimension_numbers = #tpu.dot_dimension_numbers<[1], [0], [0], [1], [0, 0, 1, 1], [], []>} : vector<4x256xbf16>, vector<256x256xbf16>, vector<4x256xf32> -> vector<4x256xf32>
    %c1 = arith.constant 1 : index
    %c0_11 = arith.constant 0 : index
    %15 = vector.load %arg5[%c1, %c0_11] : memref<2x256xf32, #tpu.memory_space<vmem>>, vector<1x256xf32>
    %16 = vector.broadcast %15 : vector<1x256xf32> to vector<4x256xf32>
    %17 = arith.addf %14, %16 : vector<4x256xf32>
    %cst_12 = arith.constant 0.000000e+00 : f32
    %18 = vector.broadcast %cst_12 : f32 to vector<4x256xf32>
    %19 = arith.subf %18, %17 : vector<4x256xf32>
    %20 = math.exp %19 : vector<4x256xf32>
    %cst_13 = arith.constant 1.000000e+00 : f32
    %21 = vector.broadcast %cst_13 : f32 to vector<4x256xf32>
    %22 = arith.addf %21, %20 : vector<4x256xf32>
    %23 = tpu.reciprocal %22 {approx = true} : vector<4x256xf32> -> vector<4x256xf32>
    %24 = arith.extf %4 : vector<4x256xbf16> to vector<4x256xf32>
    %25 = arith.mulf %23, %24 : vector<4x256xf32>
    %c0_14 = arith.constant 0 : index
    %c0_15 = arith.constant 0 : index
    %26 = vector.load %arg10[%c0_14, %c0_15] : memref<1x256xf32, #tpu.memory_space<vmem>>, vector<1x256xf32>
    %cst_16 = arith.constant dense<0.000000e+00> : vector<256xf32>
    %27 = vector.multi_reduction <add>, %25, %cst_16 [0] : vector<4x256xf32> to vector<256xf32>
    %28 = vector.shape_cast %27 : vector<256xf32> to vector<1x256xf32>
    %29 = arith.addf %26, %28 : vector<1x256xf32>
    %c0_17 = arith.constant 0 : index
    %c0_18 = arith.constant 0 : index
    %30 = vector.load %arg10[%c0_17, %c0_18] : memref<1x256xf32, #tpu.memory_space<vmem>>, vector<1x256xf32>
    tpu.vector_store %arg10[%c0_17, %c0_18], %29 {strides = array<i32>} : memref<1x256xf32, #tpu.memory_space<vmem>>, vector<1x256xf32>,
    %c0_i32_19 = arith.constant 0 : i32
    %31 = arith.cmpi eq, %arg1, %c0_i32_19 : i32
    %32 = arith.extui %31 : i1 to i32
    %c0_i32_20 = arith.constant 0 : i32
    %33 = arith.cmpi ne, %32, %c0_i32_20 : i32
    scf.if %33 {
      %c0_21 = arith.constant 0 : index
      %c0_22 = arith.constant 0 : index
      %34 = vector.load %arg10[%c0_21, %c0_22] : memref<1x256xf32, #tpu.memory_space<vmem>>, vector<1x256xf32>
      %c0_23 = arith.constant 0 : index
      %c0_24 = arith.constant 0 : index
      %35 = vector.load %arg6[%c0_23, %c0_24] : memref<256x16xf32, #tpu.memory_space<vmem>>, vector<256x16xf32>
      %cst_25 = arith.constant dense<0.000000e+00> : vector<1x16xf32>
      %36 = tpu.matmul %34, %35, %cst_25 {dimension_numbers = #tpu.dot_dimension_numbers<[1], [0], [0], [1], [0, 0, 1, 1], [], []>} : vector<1x256xf32>, vector<256x16xf32>, vector<1x16xf32> -> vector<1x16xf32>
      %c0_26 = arith.constant 0 : index
      %c0_27 = arith.constant 0 : index
      %37 = vector.load %arg8[%c0_26, %c0_27] : memref<2x16xf32, #tpu.memory_space<vmem>>, vector<1x16xf32>
      %38 = arith.addf %36, %37 : vector<1x16xf32>
      %cst_28 = arith.constant 0.000000e+00 : f32
      %39 = vector.broadcast %cst_28 : f32 to vector<1x16xf32>
      %40 = arith.maximumf %38, %39 : vector<1x16xf32>
      %c0_29 = arith.constant 0 : index
      %c0_30 = arith.constant 0 : index
      %41 = vector.load %arg7[%c0_29, %c0_30] : memref<16x16xf32, #tpu.memory_space<vmem>>, vector<16x16xf32>
      %cst_31 = arith.constant dense<0.000000e+00> : vector<1x16xf32>
      %42 = tpu.matmul %40, %41, %cst_31 {dimension_numbers = #tpu.dot_dimension_numbers<[1], [0], [0], [1], [0, 0, 1, 1], [], []>} : vector<1x16xf32>, vector<16x16xf32>, vector<1x16xf32> -> vector<1x16xf32>
      %c1_32 = arith.constant 1 : index
      %c0_33 = arith.constant 0 : index
      %43 = vector.load %arg8[%c1_32, %c0_33] : memref<2x16xf32, #tpu.memory_space<vmem>>, vector<1x16xf32>
      %44 = arith.addf %42, %43 : vector<1x16xf32>
      %c0_34 = arith.constant 0 : index
      %c0_35 = arith.constant 0 : index
      %c0_36 = arith.constant 0 : index
      %45 = vector.load %arg9[%c0_34, %c0_35, %c0_36] : memref<1x1x16xf32, #tpu.memory_space<vmem>>, vector<1x1x16xf32>
      %46 = vector.shape_cast %45 : vector<1x1x16xf32> to vector<1x16xf32>
      %47 = vector.shape_cast %44 : vector<1x16xf32> to vector<1x1x16xf32>
      tpu.vector_store %arg9[%c0_34, %c0_35, %c0_36], %47 {strides = array<i32>} : memref<1x1x16xf32, #tpu.memory_space<vmem>>, vector<1x1x16xf32>,
    } else {
    }
    return
  }
  func.func @transform_0(%arg0: i32, %arg1: i32) -> (i32, i32, i32) {
    %c0_i32 = arith.constant 0 : i32
    %c0_i32_0 = arith.constant 0 : i32
    return %arg0, %arg1, %c0_i32 : i32, i32, i32
  }
  func.func @transform_1(%arg0: i32, %arg1: i32) -> (i32, i32) {
    %c0_i32 = arith.constant 0 : i32
    %c0_i32_0 = arith.constant 0 : i32
    %c0_i32_1 = arith.constant 0 : i32
    return %c0_i32, %c0_i32_0 : i32, i32
  }
  func.func @transform_2(%arg0: i32, %arg1: i32) -> (i32, i32) {
    %c0_i32 = arith.constant 0 : i32
    %c0_i32_0 = arith.constant 0 : i32
    %c0_i32_1 = arith.constant 0 : i32
    return %c0_i32, %c0_i32_0 : i32, i32
  }
  func.func @transform_3(%arg0: i32, %arg1: i32) -> (i32, i32) {
    %c0_i32 = arith.constant 0 : i32
    %c0_i32_0 = arith.constant 0 : i32
    %c0_i32_1 = arith.constant 0 : i32
    return %c0_i32, %c0_i32_0 : i32, i32
  }
  func.func @transform_4(%arg0: i32, %arg1: i32) -> (i32, i32) {
    %c0_i32 = arith.constant 0 : i32
    %c0_i32_0 = arith.constant 0 : i32
    %c0_i32_1 = arith.constant 0 : i32
    return %c0_i32, %c0_i32_0 : i32, i32
  }
  func.func @transform_5(%arg0: i32, %arg1: i32) -> (i32, i32) {
    %c0_i32 = arith.constant 0 : i32
    %c0_i32_0 = arith.constant 0 : i32
    %c0_i32_1 = arith.constant 0 : i32
    return %c0_i32, %c0_i32_0 : i32, i32
  }
  func.func @transform_6(%arg0: i32, %arg1: i32) -> (i32, i32) {
    %c0_i32 = arith.constant 0 : i32
    %c0_i32_0 = arith.constant 0 : i32
    %c0_i32_1 = arith.constant 0 : i32
    return %c0_i32, %c0_i32_0 : i32, i32
  }
  func.func @transform_7(%arg0: i32, %arg1: i32) -> (i32, i32, i32) {
    %c0_i32 = arith.constant 0 : i32
    %c0_i32_0 = arith.constant 0 : i32
    %c0_i32_1 = arith.constant 0 : i32
    return %arg0, %c0_i32, %c0_i32_0 : i32, i32, i32
  }
}

</mosaic_0001>

<llo_original>
// kernel: reverse
$region0: #{reverse}
  #allocation0 [shape = 's32[1]{0}', space=sflag, size = 0x4, scoped, tag = 'scoped memory for reverse']
  %s0 = inlined_call_operand.vmem [shape: f32[3,3,32,64], index: 0, kind: input, shape index: {}]
  %s1 = inlined_call_operand.vmem [shape: bf16[3,3,32,64], index: 1, kind: output, shape index: {}]
  %s2 = scalar_lea.vmem %s0, 256
  %v3 = vld [vmem:[%s2] sm:$0xff]
  %v4 = vpack.c.bf16 0.0, %v3
  %5 = vst [vmem:[%s1] sm:$0xf] %v4
  %s6 = scalar_lea.vmem %s0, 160
  %v7 = vld [vmem:[%s6] sm:$0xff]
  %s8 = scalar_lea.vmem %s1, 48
  %v9 = vpack.c.bf16 0.0, %v7
  %10 = vst [vmem:[%s8] sm:$0xf] %v9
  %s11 = scalar_lea.vmem %s0, 64
  %v12 = vld [vmem:[%s11] sm:$0xff]
  %s13 = scalar_lea.vmem %s1, 96
  %v14 = vpack.c.bf16 0.0, %v12
  %15 = vst [vmem:[%s13] sm:$0xf] %v14
  %s16 = scalar_lea.vmem %s0, 224
  %v17 = vld [vmem:[%s16] sm:$0xff]
  %s18 = scalar_lea.vmem %s1, 16
  %v19 = vpack.c.bf16 0.0, %v17
  %20 = vst [vmem:[%s18] sm:$0xf] %v19
  %s21 = scalar_lea.vmem %s0, 128
  %v22 = vld [vmem:[%s21] sm:$0xff]
  %s23 = scalar_lea.vmem %s1, 64
  %v24 = vpack.c.bf16 0.0, %v22
  %25 = vst [vmem:[%s23] sm:$0xf] %v24
  %s26 = scalar_lea.vmem %s0, 32
  %v27 = vld [vmem:[%s26] sm:$0xff]
  %s28 = scalar_lea.vmem %s1, 112
  %v29 = vpack.c.bf16 0.0, %v27
  %30 = vst [vmem:[%s28] sm:$0xf] %v29
  %s31 = scalar_lea.vmem %s0, 192
  %v32 = vld [vmem:[%s31] sm:$0xff]
  %s33 = scalar_lea.vmem %s1, 32
  %v34 = vpack.c.bf16 0.0, %v32
  %35 = vst [vmem:[%s33] sm:$0xf] %v34
  %s36 = scalar_lea.vmem %s0, 96
  %v37 = vld [vmem:[%s36] sm:$0xff]
  %s38 = scalar_lea.vmem %s1, 80
  %v39 = vpack.c.bf16 0.0, %v37
  %40 = vst [vmem:[%s38] sm:$0xf] %v39
  %v41 = vld [vmem:[%s0] sm:$0xff]
  %s42 = scalar_lea.vmem %s1, 128
  %v43 = vpack.c.bf16 0.0, %v41
  %44 = vst [vmem:[%s42] sm:$0xf] %v43
  %s45 = scalar_lea.vmem %s0, 264
  %v46 = vld [vmem:[%s45] sm:$0xff]
  %s47 = scalar_lea.vmem %s1, 4
  %v48 = vpack.c.bf16 0.0, %v46
  %49 = vst [vmem:[%s47] sm:$0xf] %v48
  %s50 = scalar_lea.vmem %s0, 168
  %v51 = vld [vmem:[%s50] sm:$0xff]
  %s52 = scalar_lea.vmem %s1, 52
  %v53 = vpack.c.bf16 0.0, %v51
  %54 = vst [vmem:[%s52] sm:$0xf] %v53
  %s55 = scalar_lea.vmem %s0, 72
  %v56 = vld [vmem:[%s55] sm:$0xff]
  %s57 = scalar_lea.vmem %s1, 100
  %v58 = vpack.c.bf16 0.0, %v56
  %59 = vst [vmem:[%s57] sm:$0xf] %v58
  %s60 = scalar_lea.vmem %s0, 232
  %v61 = vld [vmem:[%s60] sm:$0xff]
  %s62 = scalar_lea.vmem %s1, 20
  %v63 = vpack.c.bf16 0.0, %v61
  %64 = vst [vmem:[%s62] sm:$0xf] %v63
  %s65 = scalar_lea.vmem %s0, 136
  %v66 = vld [vmem:[%s65] sm:$0xff]
  %s67 = scalar_lea.vmem %s1, 68
  %v68 = vpack.c.bf16 0.0, %v66
  %69 = vst [vmem:[%s67] sm:$0xf] %v68
  %s70 = scalar_lea.vmem %s0, 40
  %v71 = vld [vmem:[%s70] sm:$0xff]
  %s72 = scalar_lea.vmem %s1, 116
  %v73 = vpack.c.bf16 0.0, %v71
  %74 = vst [vmem:[%s72] sm:$0xf] %v73
  %s75 = scalar_lea.vmem %s0, 200
  %v76 = vld [vmem:[%s75] sm:$0xff]
  %s77 = scalar_lea.vmem %s1, 36
  %v78 = vpack.c.bf16 0.0, %v76
  %79 = vst [vmem:[%s77] sm:$0xf] %v78
  %s80 = scalar_lea.vmem %s0, 104
  %v81 = vld [vmem:[%s80] sm:$0xff]
  %s82 = scalar_lea.vmem %s1, 84
  %v83 = vpack.c.bf16 0.0, %v81
  %84 = vst [vmem:[%s82] sm:$0xf] %v83
  %s85 = scalar_lea.vmem %s0, 8
  %v86 = vld [vmem:[%s85] sm:$0xff]
  %s87 = scalar_lea.vmem %s1, 132
  %v88 = vpack.c.bf16 0.0, %v86
  %89 = vst [vmem:[%s87] sm:$0xf] %v88
  %s90 = scalar_lea.vmem %s0, 272
  %v91 = vld [vmem:[%s90] sm:$0xff]
  %s92 = scalar_lea.vmem %s1, 8
  %v93 = vpack.c.bf16 0.0, %v91
  %94 = vst [vmem:[%s92] sm:$0xf] %v93
  %s95 = scalar_lea.vmem %s0, 176
  %v96 = vld [vmem:[%s95] sm:$0xff]
  %s97 = scalar_lea.vmem %s1, 56
  %v98 = vpack.c.bf16 0.0, %v96
  %99 = vst [vmem:[%s97] sm:$0xf] %v98
  %s100 = scalar_lea.vmem %s0, 80
  %v101 = vld [vmem:[%s100] sm:$0xff]
  %s102 = scalar_lea.vmem %s1, 104
  %v103 = vpack.c.bf16 0.0, %v101
  %104 = vst [vmem:[%s102] sm:$0xf] %v103
  %s105 = scalar_lea.vmem %s0, 240
  %v106 = vld [vmem:[%s105] sm:$0xff]
  %s107 = scalar_lea.vmem %s1, 24
  %v108 = vpack.c.bf16 0.0, %v106
  %109 = vst [vmem:[%s107] sm:$0xf] %v108
  %s110 = scalar_lea.vmem %s0, 144
  %v111 = vld [vmem:[%s110] sm:$0xff]
  %s112 = scalar_lea.vmem %s1, 72
  %v113 = vpack.c.bf16 0.0, %v111
  %114 = vst [vmem:[%s112] sm:$0xf] %v113
  %s115 = scalar_lea.vmem %s0, 48
  %v116 = vld [vmem:[%s115] sm:$0xff]
  %s117 = scalar_lea.vmem %s1, 120
  %v118 = vpack.c.bf16 0.0, %v116
  %119 = vst [vmem:[%s117] sm:$0xf] %v118
  %s120 = scalar_lea.vmem %s0, 208
  %v121 = vld [vmem:[%s120] sm:$0xff]
  %s122 = scalar_lea.vmem %s1, 40
  %v123 = vpack.c.bf16 0.0, %v121
  %124 = vst [vmem:[%s122] sm:$0xf] %v123
  %s125 = scalar_lea.vmem %s0, 112
  %v126 = vld [vmem:[%s125] sm:$0xff]
  %s127 = scalar_lea.vmem %s1, 88
  %v128 = vpack.c.bf16 0.0, %v126
  %129 = vst [vmem:[%s127] sm:$0xf] %v128
  %s130 = scalar_lea.vmem %s0, 16
  %v131 = vld [vmem:[%s130] sm:$0xff]
  %s132 = scalar_lea.vmem %s1, 136
  %v133 = vpack.c.bf16 0.0, %v131
  %134 = vst [vmem:[%s132] sm:$0xf] %v133
  %s135 = scalar_lea.vmem %s0, 280
  %v136 = vld [vmem:[%s135] sm:$0xff]
  %s137 = scalar_lea.vmem %s1, 12
  %v138 = vpack.c.bf16 0.0, %v136
  %139 = vst [vmem:[%s137] sm:$0xf] %v138
  %s140 = scalar_lea.vmem %s0, 184
  %v141 = vld [vmem:[%s140] sm:$0xff]
  %s142 = scalar_lea.vmem %s1, 60
  %v143 = vpack.c.bf16 0.0, %v141
  %144 = vst [vmem:[%s142] sm:$0xf] %v143
  %s145 = scalar_lea.vmem %s0, 88
  %v146 = vld [vmem:[%s145] sm:$0xff]
  %s147 = scalar_lea.vmem %s1, 108
  %v148 = vpack.c.bf16 0.0, %v146
  %149 = vst [vmem:[%s147] sm:$0xf] %v148
  %s150 = scalar_lea.vmem %s0, 248
  %v151 = vld [vmem:[%s150] sm:$0xff]
  %s152 = scalar_lea.vmem %s1, 28
  %v153 = vpack.c.bf16 0.0, %v151
  %154 = vst [vmem:[%s152] sm:$0xf] %v153
  %s155 = scalar_lea.vmem %s0, 152
  %v156 = vld [vmem:[%s155] sm:$0xff]
  %s157 = scalar_lea.vmem %s1, 76
  %v158 = vpack.c.bf16 0.0, %v156
  %159 = vst [vmem:[%s157] sm:$0xf] %v158
  %s160 = scalar_lea.vmem %s0, 56
  %v161 = vld [vmem:[%s160] sm:$0xff]
  %s162 = scalar_lea.vmem %s1, 124
  %v163 = vpack.c.bf16 0.0, %v161
  %164 = vst [vmem:[%s162] sm:$0xf] %v163
  %s165 = scalar_lea.vmem %s0, 216
  %v166 = vld [vmem:[%s165] sm:$0xff]
  %s167 = scalar_lea.vmem %s1, 44
  %v168 = vpack.c.bf16 0.0, %v166
  %169 = vst [vmem:[%s167] sm:$0xf] %v168
  %s170 = scalar_lea.vmem %s0, 120
  %v171 = vld [vmem:[%s170] sm:$0xff]
  %s172 = scalar_lea.vmem %s1, 92
  %v173 = vpack.c.bf16 0.0, %v171
  %174 = vst [vmem:[%s172] sm:$0xf] %v173
  %s175 = scalar_lea.vmem %s0, 24
  %v176 = vld [vmem:[%s175] sm:$0xff]
  %s177 = scalar_lea.vmem %s1, 140
  %v178 = vpack.c.bf16 0.0, %v176
  %179 = vst [vmem:[%s177] sm:$0xf] %v178

// kernel: reverse.1
$region0: #{reverse.1}
  #allocation0 [shape = 's32[1]{0}', space=sflag, size = 0x4, scoped, tag = 'scoped memory for reverse.1']
  %s0 = inlined_call_operand.vmem [shape: f32[3,3,64,128], index: 0, kind: input, shape index: {}]
  %s1 = inlined_call_operand.vmem [shape: bf16[3,3,64,128], index: 1, kind: output, shape index: {}]
  %s2 = scalar_lea.vmem %s0, 512
  %v3 = vld [vmem:[%s2] sm:$0xff]
  %v4 = vpack.c.bf16 0.0, %v3
  %5 = vst [vmem:[%s1] sm:$0xf] %v4
  %s6 = scalar_lea.vmem %s0, 320
  %v7 = vld [vmem:[%s6] sm:$0xff]
  %s8 = scalar_lea.vmem %s1, 96
  %v9 = vpack.c.bf16 0.0, %v7
  %10 = vst [vmem:[%s8] sm:$0xf] %v9
  %s11 = scalar_lea.vmem %s0, 128
  %v12 = vld [vmem:[%s11] sm:$0xff]
  %s13 = scalar_lea.vmem %s1, 192
  %v14 = vpack.c.bf16 0.0, %v12
  %15 = vst [vmem:[%s13] sm:$0xf] %v14
  %s16 = scalar_lea.vmem %s0, 448
  %v17 = vld [vmem:[%s16] sm:$0xff]
  %s18 = scalar_lea.vmem %s1, 32
  %v19 = vpack.c.bf16 0.0, %v17
  %20 = vst [vmem:[%s18] sm:$0xf] %v19
  %s21 = scalar_lea.vmem %s0, 256
  %v22 = vld [vmem:[%s21] sm:$0xff]
  %s23 = scalar_lea.vmem %s1, 128
  %v24 = vpack.c.bf16 0.0, %v22
  %25 = vst [vmem:[%s23] sm:$0xf] %v24
  %s26 = scalar_lea.vmem %s0, 64
  %v27 = vld [vmem:[%s26] sm:$0xff]
  %s28 = scalar_lea.vmem %s1, 224
  %v29 = vpack.c.bf16 0.0, %v27
  %30 = vst [vmem:[%s28] sm:$0xf] %v29
  %s31 = scalar_lea.vmem %s0, 384
  %v32 = vld [vmem:[%s31] sm:$0xff]
  %s33 = scalar_lea.vmem %s1, 64
  %v34 = vpack.c.bf16 0.0, %v32
  %35 = vst [vmem:[%s33] sm:$0xf] %v34
  %s36 = scalar_lea.vmem %s0, 192
  %v37 = vld [vmem:[%s36] sm:$0xff]
  %s38 = scalar_lea.vmem %s1, 160
  %v39 = vpack.c.bf16 0.0, %v37
  %40 = vst [vmem:[%s38] sm:$0xf] %v39
  %v41 = vld [vmem:[%s0] sm:$0xff]
  %s42 = scalar_lea.vmem %s1, 256
  %v43 = vpack.c.bf16 0.0, %v41
  %44 = vst [vmem:[%s42] sm:$0xf] %v43
  %s45 = scalar_lea.vmem %s0, 520
  %v46 = vld [vmem:[%s45] sm:$0xff]
  %s47 = scalar_lea.vmem %s1, 4
  %v48 = vpack.c.bf16 0.0, %v46
  %49 = vst [vmem:[%s47] sm:$0xf] %v48
  %s50 = scalar_lea.vmem %s0, 328
  %v51 = vld [vmem:[%s50] sm:$0xff]
  %s52 = scalar_lea.vmem %s1, 100
  %v53 = vpack.c.bf16 0.0, %v51
  %54 = vst [vmem:[%s52] sm:$0xf] %v53
  %s55 = scalar_lea.vmem %s0, 136
  %v56 = vld [vmem:[%s55] sm:$0xff]
  %s57 = scalar_lea.vmem %s1, 196
  %v58 = vpack.c.bf16 0.0, %v56
  %59 = vst [vmem:[%s57] sm:$0xf] %v58
  %s60 = scalar_lea.vmem %s0, 456
  %v61 = vld [vmem:[%s60] sm:$0xff]
  %s62 = scalar_lea.vmem %s1, 36
  %v63 = vpack.c.bf16 0.0, %v61
  %64 = vst [vmem:[%s62] sm:$0xf] %v63
  %s65 = scalar_lea.vmem %s0, 264
  %v66 = vld [vmem:[%s65] sm:$0xff]
  %s67 = scalar_lea.vmem %s1, 132
  %v68 = vpack.c.bf16 0.0, %v66
  %69 = vst [vmem:[%s67] sm:$0xf] %v68
  %s70 = scalar_lea.vmem %s0, 72
  %v71 = vld [vmem:[%s70] sm:$0xff]
  %s72 = scalar_lea.vmem %s1, 228
  %v73 = vpack.c.bf16 0.0, %v71
  %74 = vst [vmem:[%s72] sm:$0xf] %v73
  %s75 = scalar_lea.vmem %s0, 392
  %v76 = vld [vmem:[%s75] sm:$0xff]
  %s77 = scalar_lea.vmem %s1, 68
  %v78 = vpack.c.bf16 0.0, %v76
  %79 = vst [vmem:[%s77] sm:$0xf] %v78
  %s80 = scalar_lea.vmem %s0, 200
  %v81 = vld [vmem:[%s80] sm:$0xff]
  %s82 = scalar_lea.vmem %s1, 164
  %v83 = vpack.c.bf16 0.0, %v81
  %84 = vst [vmem:[%s82] sm:$0xf] %v83
  %s85 = scalar_lea.vmem %s0, 8
  %v86 = vld [vmem:[%s85] sm:$0xff]
  %s87 = scalar_lea.vmem %s1, 260
  %v88 = vpack.c.bf16 0.0, %v86
  %89 = vst [vmem:[%s87] sm:$0xf] %v88
  %s90 = scalar_lea.vmem %s0, 528
  %v91 = vld [vmem:[%s90] sm:$0xff]
  %s92 = scalar_lea.vmem %s1, 8
  %v93 = vpack.c.bf16 0.0, %v91
  %94 = vst [vmem:[%s92] sm:$0xf] %v93
  %s95 = scalar_lea.vmem %s0, 336
  %v96 = vld [vmem:[%s95] sm:$0xff]
  %s97 = scalar_lea.vmem %s1, 104
  %v98 = vpack.c.bf16 0.0, %v96
  %99 = vst [vmem:[%s97] sm:$0xf] %v98
  %s100 = scalar_lea.vmem %s0, 144
  %v101 = vld [vmem:[%s100] sm:$0xff]
  %s102 = scalar_lea.vmem %s1, 200
  %v103 = vpack.c.bf16 0.0, %v101
  %104 = vst [vmem:[%s102] sm:$0xf] %v103
  %s105 = scalar_lea.vmem %s0, 464
  %v106 = vld [vmem:[%s105] sm:$0xff]
  %s107 = scalar_lea.vmem %s1, 40
  %v108 = vpack.c.bf16 0.0, %v106
  %109 = vst [vmem:[%s107] sm:$0xf] %v108
  %s110 = scalar_lea.vmem %s0, 272
  %v111 = vld [vmem:[%s110] sm:$0xff]
  %s112 = scalar_lea.vmem %s1, 136
  %v113 = vpack.c.bf16 0.0, %v111
  %114 = vst [vmem:[%s112] sm:$0xf] %v113
  %s115 = scalar_lea.vmem %s0, 80
  %v116 = vld [vmem:[%s115] sm:$0xff]
  %s117 = scalar_lea.vmem %s1, 232
  %v118 = vpack.c.bf16 0.0, %v116
  %119 = vst [vmem:[%s117] sm:$0xf] %v118
  %s120 = scalar_lea.vmem %s0, 400
  %v121 = vld [vmem:[%s120] sm:$0xff]
  %s122 = scalar_lea.vmem %s1, 72
  %v123 = vpack.c.bf16 0.0, %v121
  %124 = vst [vmem:[%s122] sm:$0xf] %v123
  %s125 = scalar_lea.vmem %s0, 208
  %v126 = vld [vmem:[%s125] sm:$0xff]
  %s127 = scalar_lea.vmem %s1, 168
  %v128 = vpack.c.bf16 0.0, %v126
  %129 = vst [vmem:[%s127] sm:$0xf] %v128
  %s130 = scalar_lea.vmem %s0, 16
  %v131 = vld [vmem:[%s130] sm:$0xff]
  %s132 = scalar_lea.vmem %s1, 264
  %v133 = vpack.c.bf16 0.0, %v131
  %134 = vst [vmem:[%s132] sm:$0xf] %v133
  %s135 = scalar_lea.vmem %s0, 536
  %v136 = vld [vmem:[%s135] sm:$0xff]
  %s137 = scalar_lea.vmem %s1, 12
  %v138 = vpack.c.bf16 0.0, %v136
  %139 = vst [vmem:[%s137] sm:$0xf] %v138
  %s140 = scalar_lea.vmem %s0, 344
  %v141 = vld [vmem:[%s140] sm:$0xff]
  %s142 = scalar_lea.vmem %s1, 108
  %v143 = vpack.c.bf16 0.0, %v141
  %144 = vst [vmem:[%s142] sm:$0xf] %v143
  %s145 = scalar_lea.vmem %s0, 152
  %v146 = vld [vmem:[%s145] sm:$0xff]
  %s147 = scalar_lea.vmem %s1, 204
  %v148 = vpack.c.bf16 0.0, %v146
  %149 = vst [vmem:[%s147] sm:$0xf] %v148
  %s150 = scalar_lea.vmem %s0, 472
  %v151 = vld [vmem:[%s150] sm:$0xff]
  %s152 = scalar_lea.vmem %s1, 44
  %v153 = vpack.c.bf16 0.0, %v151
  %154 = vst [vmem:[%s152] sm:$0xf] %v153
  %s155 = scalar_lea.vmem %s0, 280
  %v156 = vld [vmem:[%s155] sm:$0xff]
  %s157 = scalar_lea.vmem %s1, 140
  %v158 = vpack.c.bf16 0.0, %v156
  %159 = vst [vmem:[%s157] sm:$0xf] %v158
  %s160 = scalar_lea.vmem %s0, 88
  %v161 = vld [vmem:[%s160] sm:$0xff]
  %s162 = scalar_lea.vmem %s1, 236
  %v163 = vpack.c.bf16 0.0, %v161
  %164 = vst [vmem:[%s162] sm:$0xf] %v163
  %s165 = scalar_lea.vmem %s0, 408
  %v166 = vld [vmem:[%s165] sm:$0xff]
  %s167 = scalar_lea.vmem %s1, 76
  %v168 = vpack.c.bf16 0.0, %v166
  %169 = vst [vmem:[%s167] sm:$0xf] %v168
  %s170 = scalar_lea.vmem %s0, 216
  %v171 = vld [vmem:[%s170] sm:$0xff]
  %s172 = scalar_lea.vmem %s1, 172
  %v173 = vpack.c.bf16 0.0, %v171
  %174 = vst [vmem:[%s172] sm:$0xf] %v173
  %s175 = scalar_lea.vmem %s0, 24
  %v176 = vld [vmem:[%s175] sm:$0xff]
  %s177 = scalar_lea.vmem %s1, 268
  %v178 = vpack.c.bf16 0.0, %v176
  %179 = vst [vmem:[%s177] sm:$0xf] %v178
  %s180 = scalar_lea.vmem %s0, 544
  %v181 = vld [vmem:[%s180] sm:$0xff]
  %s182 = scalar_lea.vmem %s1, 16
  %v183 = vpack.c.bf16 0.0, %v181
  %184 = vst [vmem:[%s182] sm:$0xf] %v183
  %s185 = scalar_lea.vmem %s0, 352
  %v186 = vld [vmem:[%s185] sm:$0xff]
  %s187 = scalar_lea.vmem %s1, 112
  %v188 = vpack.c.bf16 0.0, %v186
  %189 = vst [vmem:[%s187] sm:$0xf] %v188
  %s190 = scalar_lea.vmem %s0, 160
  %v191 = vld [vmem:[%s190] sm:$0xff]
  %s192 = scalar_lea.vmem %s1, 208
  %v193 = vpack.c.bf16 0.0, %v191
  %194 = vst [vmem:[%s192] sm:$0xf] %v193
  %s195 = scalar_lea.vmem %s0, 480
  %v196 = vld [vmem:[%s195] sm:$0xff]
  %s197 = scalar_lea.vmem %s1, 48
  %v198 = vpack.c.bf16 0.0, %v196
  %199 = vst [vmem:[%s197] sm:$0xf] %v198
  %s200 = scalar_lea.vmem %s0, 288
  %v201 = vld [vmem:[%s200] sm:$0xff]
  %s202 = scalar_lea.vmem %s1, 144
  %v203 = vpack.c.bf16 0.0, %v201
  %204 = vst [vmem:[%s202] sm:$0xf] %v203
  %s205 = scalar_lea.vmem %s0, 96
  %v206 = vld [vmem:[%s205] sm:$0xff]
  %s207 = scalar_lea.vmem %s1, 240
  %v208 = vpack.c.bf16 0.0, %v206
  %209 = vst [vmem:[%s207] sm:$0xf] %v208
  %s210 = scalar_lea.vmem %s0, 416
  %v211 = vld [vmem:[%s210] sm:$0xff]
  %s212 = scalar_lea.vmem %s1, 80
  %v213 = vpack.c.bf16 0.0, %v211
  %214 = vst [vmem:[%s212] sm:$0xf] %v213
  %s215 = scalar_lea.vmem %s0, 224
  %v216 = vld [vmem:[%s215] sm:$0xff]
  %s217 = scalar_lea.vmem %s1, 176
  %v218 = vpack.c.bf16 0.0, %v216
  %219 = vst [vmem:[%s217] sm:$0xf] %v218
  %s220 = scalar_lea.vmem %s0, 32
  %v221 = vld [vmem:[%s220] sm:$0xff]
  %s222 = scalar_lea.vmem %s1, 272
  %v223 = vpack.c.bf16 0.0, %v221
  %224 = vst [vmem:[%s222] sm:$0xf] %v223
  %s225 = scalar_lea.vmem %s0, 552
  %v226 = vld [vmem:[%s225] sm:$0xff]
  %s227 = scalar_lea.vmem %s1, 20
  %v228 = vpack.c.bf16 0.0, %v226
  %229 = vst [vmem:[%s227] sm:$0xf] %v228
  %s230 = scalar_lea.vmem %s0, 360
  %v231 = vld [vmem:[%s230] sm:$0xff]
  %s232 = scalar_lea.vmem %s1, 116
  %v233 = vpack.c.bf16 0.0, %v231
  %234 = vst [vmem:[%s232] sm:$0xf] %v233
  %s235 = scalar_lea.vmem %s0, 168
  %v236 = vld [vmem:[%s235] sm:$0xff]
  %s237 = scalar_lea.vmem %s1, 212
  %v238 = vpack.c.bf16 0.0, %v236
  %239 = vst [vmem:[%s237] sm:$0xf] %v238
  %s240 = scalar_lea.vmem %s0, 488
  %v241 = vld [vmem:[%s240] sm:$0xff]
  %s242 = scalar_lea.vmem %s1, 52
  %v243 = vpack.c.bf16 0.0, %v241
  %244 = vst [vmem:[%s242] sm:$0xf] %v243
  %s245 = scalar_lea.vmem %s0, 296
  %v246 = vld [vmem:[%s245] sm:$0xff]
  %s247 = scalar_lea.vmem %s1, 148
  %v248 = vpack.c.bf16 0.0, %v246
  %249 = vst [vmem:[%s247] sm:$0xf] %v248
  %s250 = scalar_lea.vmem %s0, 104
  %v251 = vld [vmem:[%s250] sm:$0xff]
  %s252 = scalar_lea.vmem %s1, 244
  %v253 = vpack.c.bf16 0.0, %v251
  %254 = vst [vmem:[%s252] sm:$0xf] %v253
  %s255 = scalar_lea.vmem %s0, 424
  %v256 = vld [vmem:[%s255] sm:$0xff]
  %s257 = scalar_lea.vmem %s1, 84
  %v258 = vpack.c.bf16 0.0, %v256
  %259 = vst [vmem:[%s257] sm:$0xf] %v258
  %s260 = scalar_lea.vmem %s0, 232
  %v261 = vld [vmem:[%s260] sm:$0xff]
  %s262 = scalar_lea.vmem %s1, 180
  %v263 = vpack.c.bf16 0.0, %v261
  %264 = vst [vmem:[%s262] sm:$0xf] %v263
  %s265 = scalar_lea.vmem %s0, 40
  %v266 = vld [vmem:[%s265] sm:$0xff]
  %s267 = scalar_lea.vmem %s1, 276
  %v268 = vpack.c.bf16 0.0, %v266
  %269 = vst [vmem:[%s267] sm:$0xf] %v268
  %s270 = scalar_lea.vmem %s0, 560
  %v271 = vld [vmem:[%s270] sm:$0xff]
  %s272 = scalar_lea.vmem %s1, 24
  %v273 = vpack.c.bf16 0.0, %v271
  %274 = vst [vmem:[%s272] sm:$0xf] %v273
  %s275 = scalar_lea.vmem %s0, 368
  %v276 = vld [vmem:[%s275] sm:$0xff]
  %s277 = scalar_lea.vmem %s1, 120
  %v278 = vpack.c.bf16 0.0, %v276
  %279 = vst [vmem:[%s277] sm:$0xf] %v278
  %s280 = scalar_lea.vmem %s0, 176
  %v281 = vld [vmem:[%s280] sm:$0xff]
  %s282 = scalar_lea.vmem %s1, 216
  %v283 = vpack.c.bf16 0.0, %v281
  %284 = vst [vmem:[%s282] sm:$0xf] %v283
  %s285 = scalar_lea.vmem %s0, 496
  %v286 = vld [vmem:[%s285] sm:$0xff]
  %s287 = scalar_lea.vmem %s1, 56
  %v288 = vpack.c.bf16 0.0, %v286
  %289 = vst [vmem:[%s287] sm:$0xf] %v288
  %s290 = scalar_lea.vmem %s0, 304
  %v291 = vld [vmem:[%s290] sm:$0xff]
  %s292 = scalar_lea.vmem %s1, 152
  %v293 = vpack.c.bf16 0.0, %v291
  %294 = vst [vmem:[%s292] sm:$0xf] %v293
  %s295 = scalar_lea.vmem %s0, 112
  %v296 = vld [vmem:[%s295] sm:$0xff]
  %s297 = scalar_lea.vmem %s1, 248
  %v298 = vpack.c.bf16 0.0, %v296
  %299 = vst [vmem:[%s297] sm:$0xf] %v298
  %s300 = scalar_lea.vmem %s0, 432
  %v301 = vld [vmem:[%s300] sm:$0xff]
  %s302 = scalar_lea.vmem %s1, 88
  %v303 = vpack.c.bf16 0.0, %v301
  %304 = vst [vmem:[%s302] sm:$0xf] %v303
  %s305 = scalar_lea.vmem %s0, 240
  %v306 = vld [vmem:[%s305] sm:$0xff]
  %s307 = scalar_lea.vmem %s1, 184
  %v308 = vpack.c.bf16 0.0, %v306
  %309 = vst [vmem:[%s307] sm:$0xf] %v308
  %s310 = scalar_lea.vmem %s0, 48
  %v311 = vld [vmem:[%s310] sm:$0xff]
  %s312 = scalar_lea.vmem %s1, 280
  %v313 = vpack.c.bf16 0.0, %v311
  %314 = vst [vmem:[%s312] sm:$0xf] %v313
  %s315 = scalar_lea.vmem %s0, 568
  %v316 = vld [vmem:[%s315] sm:$0xff]
  %s317 = scalar_lea.vmem %s1, 28
  %v318 = vpack.c.bf16 0.0, %v316
  %319 = vst [vmem:[%s317] sm:$0xf] %v318
  %s320 = scalar_lea.vmem %s0, 376
  %v321 = vld [vmem:[%s320] sm:$0xff]
  %s322 = scalar_lea.vmem %s1, 124
  %v323 = vpack.c.bf16 0.0, %v321
  %324 = vst [vmem:[%s322] sm:$0xf] %v323
  %s325 = scalar_lea.vmem %s0, 184
  %v326 = vld [vmem:[%s325] sm:$0xff]
  %s327 = scalar_lea.vmem %s1, 220
  %v328 = vpack.c.bf16 0.0, %v326
  %329 = vst [vmem:[%s327] sm:$0xf] %v328
  %s330 = scalar_lea.vmem %s0, 504
  %v331 = vld [vmem:[%s330] sm:$0xff]
  %s332 = scalar_lea.vmem %s1, 60
  %v333 = vpack.c.bf16 0.0, %v331
  %334 = vst [vmem:[%s332] sm:$0xf] %v333
  %s335 = scalar_lea.vmem %s0, 312
  %v336 = vld [vmem:[%s335] sm:$0xff]
  %s337 = scalar_lea.vmem %s1, 156
  %v338 = vpack.c.bf16 0.0, %v336
  %339 = vst [vmem:[%s337] sm:$0xf] %v338
  %s340 = scalar_lea.vmem %s0, 120
  %v341 = vld [vmem:[%s340] sm:$0xff]
  %s342 = scalar_lea.vmem %s1, 252
  %v343 = vpack.c.bf16 0.0, %v341
  %344 = vst [vmem:[%s342] sm:$0xf] %v343
  %s345 = scalar_lea.vmem %s0, 440
  %v346 = vld [vmem:[%s345] sm:$0xff]
  %s347 = scalar_lea.vmem %s1, 92
  %v348 = vpack.c.bf16 0.0, %v346
  %349 = vst [vmem:[%s347] sm:$0xf] %v348
  %s350 = scalar_lea.vmem %s0, 248
  %v351 = vld [vmem:[%s350] sm:$0xff]
  %s352 = scalar_lea.vmem %s1, 188
  %v353 = vpack.c.bf16 0.0, %v351
  %354 = vst [vmem:[%s352] sm:$0xf] %v353
  %s355 = scalar_lea.vmem %s0, 56
  %v356 = vld [vmem:[%s355] sm:$0xff]
  %s357 = scalar_lea.vmem %s1, 284
  %v358 = vpack.c.bf16 0.0, %v356
  %359 = vst [vmem:[%s357] sm:$0xf] %v358

// kernel: mtan_rec_unet_forward.4
$region0: #{mtan_rec_unet_forward.4}
  #allocation0 [shape = 'u32[]', space=smem, size = 0x4, offset = 0x4, fixed_abs, tag = 'smem constant byte address 0x4 - core index']
  #allocation1 [shape = 'u32[144,128]{1,0:T(1,128)}', space=vmem, size = 0x12000, scoped, tag = 'internal scratch']
  #allocation2 [shape = 'f32[1,256]{1,0:T(1,128)}', space=vmem, size = 0x400, scoped, tag = 'scratch operand']
  %s0 = inlined_call_operand.vmem [shape: bf16[2,4,256], index: 0, kind: input, shape index: {}]
  %s1 = inlined_call_operand.vmem [shape: bf16[256,256], index: 1, kind: input, shape index: {}]
  %s2 = inlined_call_operand.vmem [shape: bf16[256,256], index: 2, kind: input, shape index: {}]
  %s3 = inlined_call_operand.vmem [shape: f32[2,256], index: 3, kind: input, shape index: {}]
  %s4 = inlined_call_operand.vmem [shape: f32[256,16], index: 4, kind: input, shape index: {}]
  %s5 = inlined_call_operand.vmem [shape: f32[16,16], index: 5, kind: input, shape index: {}]
  %s6 = inlined_call_operand.vmem [shape: f32[2,16], index: 6, kind: input, shape index: {}]
  %s7 = inlined_call_operand.vmem [shape: f32[2,1,16], index: 7, kind: output, shape index: {}]
  %s8 = sld [smem:[#allocation0]]
  $region69: #{mtan_rec_unet_forward.4} parent=0
    _
  %s10 = ssub.s32 1, %s8
  %s11 = scalar_select 0, %s10, %s8
  loop: start=0, step=1, limit=4
  $region2: #{mtan_rec_unet_forward.4} parent=0 // loop_pre_header
    _
  $region3: #{mtan_rec_unet_forward.4} parent=0 // loop_header
    %s13 = sphi 0, %s17
    %p14 = scmp.ge.s32.totalorder %s13, 4
    %s20 = sphi 0, %s32
    %s21 = sphi 0, %s28
    %s22 = sphi 0, %s20
    %s23 = sphi 0, %s21
    %s24 = sphi 0, %s22
    %s25 = sphi 0, %s23
    %s37 = sphi 0, %s39
    %s40 = sphi 0, %s37
    %s41 = sphi 0, %s40
    %s57 = sphi 0, %s41
    %s61 = sphi 0, %s61
    %s63 = sphi 0, %s61
    %s64 = sphi 0, %s63
    %s78 = sphi 0, %s64
    %s82 = sphi 0, %s82
    %s84 = sphi 0, %s82
    %s85 = sphi 0, %s84
    %s99 = sphi 0, %s85
    %s103 = sphi 0, %s103
    %s105 = sphi 0, %s103
    %s106 = sphi 0, %s105
    %s120 = sphi 0, %s106
    %s124 = sphi 0, %s124
    %s126 = sphi 0, %s124
    %s127 = sphi 0, %s126
    %s141 = sphi 0, %s127
    %s145 = sphi 0, %s145
    %s147 = sphi 0, %s145
    %s148 = sphi 0, %s147
    %s162 = sphi 0, %s148
    %s166 = sphi 0, %s166
    %s168 = sphi 0, %s166
    %s169 = sphi 0, %s168
    %s183 = sphi 0, %s169
    %s189 = sphi 0, %s191
    %s192 = sphi 0, %s189
    %s193 = sphi 0, %s192
    %s209 = sphi 0, %s193
  $region4: #{mtan_rec_unet_forward.4} parent=0 // loop_header_branch
    %16 = sbr.rel (%p14) target = $region8
  $region5: #{mtan_rec_unet_forward.4} parent=0 // loop_body
    %s18 = ssub.s32 %s13, 1
    %s19 = ssub.s32 %s13, 2
    %s26 = sadd.s32 1, %s21
    %p27 = scmp.ge.s32.totalorder %s26, 1
    %s28 = scalar_select %p27, 0, %s26
    %s29 = sadd.s32 1, %s20
    %s30 = scalar_select %p27, %s29, %s20
    %p31 = scmp.ge.s32.totalorder %s30, 2
    %s32 = scalar_select %p31, 0, %s30
    %s33 = ssub.s32 %s20, %s32
    %s34 = ssub.s32 %s21, %s28
    %s35 = sor.u32 %s33, %s34
    %p36 = scmp.eq.s32.totalorder %s35, 0
    %s38 = sadd.s32 %s37, 1
    %s39 = scalar_select %p36, %s37, %s38
    %p42 = pneg %p36
    %p43 = scmp.eq.s32.totalorder %s13, 1
    %p44 = por %p42, %p43
    %p45 = scmp.ne.s32.totalorder %s37, %s40
    %p46 = scmp.eq.s32.totalorder %s13, 0
    %p47 = por %p45, %p46
    %p48 = scmp.ne.s32.totalorder %s37, %s40
    %p49 = scmp.eq.s32.totalorder %s18, 1
    %p50 = por %p48, %p49
    %p51 = scmp.ne.s32.totalorder %s40, %s41
    %p52 = scmp.eq.s32.totalorder %s18, 0
    %p53 = por %p51, %p52
    %p54 = scmp.ne.s32.totalorder %s40, %s41
    %p55 = scmp.eq.s32.totalorder %s19, 1
    %p56 = por %p54, %p55
    %p58 = scmp.ne.s32.totalorder %s41, %s57
    %p59 = scmp.eq.s32.totalorder %s19, 0
    %p60 = por %p58, %p59
    %s62 = sadd.s32 %s61, 1
    %p65 = scmp.eq.s32.totalorder %s13, 1
    %p66 = scmp.ne.s32.totalorder %s61, %s63
    %p67 = scmp.eq.s32.totalorder %s13, 0
    %p68 = por %p66, %p67
    %p69 = scmp.ne.s32.totalorder %s61, %s63
    %p70 = scmp.eq.s32.totalorder %s18, 1
    %p71 = por %p69, %p70
    %p72 = scmp.ne.s32.totalorder %s63, %s64
    %p73 = scmp.eq.s32.totalorder %s18, 0
    %p74 = por %p72, %p73
    %p75 = scmp.ne.s32.totalorder %s63, %s64
    %p76 = scmp.eq.s32.totalorder %s19, 1
    %p77 = por %p75, %p76
    %p79 = scmp.ne.s32.totalorder %s64, %s78
    %p80 = scmp.eq.s32.totalorder %s19, 0
    %p81 = por %p79, %p80
    %s83 = sadd.s32 %s82, 1
    %p86 = scmp.eq.s32.totalorder %s13, 1
    %p87 = scmp.ne.s32.totalorder %s82, %s84
    %p88 = scmp.eq.s32.totalorder %s13, 0
    %p89 = por %p87, %p88
    %p90 = scmp.ne.s32.totalorder %s82, %s84
    %p91 = scmp.eq.s32.totalorder %s18, 1
    %p92 = por %p90, %p91
    %p93 = scmp.ne.s32.totalorder %s84, %s85
    %p94 = scmp.eq.s32.totalorder %s18, 0
    %p95 = por %p93, %p94
    %p96 = scmp.ne.s32.totalorder %s84, %s85
    %p97 = scmp.eq.s32.totalorder %s19, 1
    %p98 = por %p96, %p97
    %p100 = scmp.ne.s32.totalorder %s85, %s99
    %p101 = scmp.eq.s32.totalorder %s19, 0
    %p102 = por %p100, %p101
    %s104 = sadd.s32 %s103, 1
    %p107 = scmp.eq.s32.totalorder %s13, 1
    %p108 = scmp.ne.s32.totalorder %s103, %s105
    %p109 = scmp.eq.s32.totalorder %s13, 0
    %p110 = por %p108, %p109
    %p111 = scmp.ne.s32.totalorder %s103, %s105
    %p112 = scmp.eq.s32.totalorder %s18, 1
    %p113 = por %p111, %p112
    %p114 = scmp.ne.s32.totalorder %s105, %s106
    %p115 = scmp.eq.s32.totalorder %s18, 0
    %p116 = por %p114, %p115
    %p117 = scmp.ne.s32.totalorder %s105, %s106
    %p118 = scmp.eq.s32.totalorder %s19, 1
    %p119 = por %p117, %p118
    %p121 = scmp.ne.s32.totalorder %s106, %s120
    %p122 = scmp.eq.s32.totalorder %s19, 0
    %p123 = por %p121, %p122
    %s125 = sadd.s32 %s124, 1
    %p128 = scmp.eq.s32.totalorder %s13, 1
    %p129 = scmp.ne.s32.totalorder %s124, %s126
    %p130 = scmp.eq.s32.totalorder %s13, 0
    %p131 = por %p129, %p130
    %p132 = scmp.ne.s32.totalorder %s124, %s126
    %p133 = scmp.eq.s32.totalorder %s18, 1
    %p134 = por %p132, %p133
    %p135 = scmp.ne.s32.totalorder %s126, %s127
    %p136 = scmp.eq.s32.totalorder %s18, 0
    %p137 = por %p135, %p136
    %p138 = scmp.ne.s32.totalorder %s126, %s127
    %p139 = scmp.eq.s32.totalorder %s19, 1
    %p140 = por %p138, %p139
    %p142 = scmp.ne.s32.totalorder %s127, %s141
    %p143 = scmp.eq.s32.totalorder %s19, 0
    %p144 = por %p142, %p143
    %s146 = sadd.s32 %s145, 1
    %p149 = scmp.eq.s32.totalorder %s13, 1
    %p150 = scmp.ne.s32.totalorder %s145, %s147
    %p151 = scmp.eq.s32.totalorder %s13, 0
    %p152 = por %p150, %p151
    %p153 = scmp.ne.s32.totalorder %s145, %s147
    %p154 = scmp.eq.s32.totalorder %s18, 1
    %p155 = por %p153, %p154
    %p156 = scmp.ne.s32.totalorder %s147, %s148
    %p157 = scmp.eq.s32.totalorder %s18, 0
    %p158 = por %p156, %p157
    %p159 = scmp.ne.s32.totalorder %s147, %s148
    %p160 = scmp.eq.s32.totalorder %s19, 1
    %p161 = por %p159, %p160
    %p163 = scmp.ne.s32.totalorder %s148, %s162
    %p164 = scmp.eq.s32.totalorder %s19, 0
    %p165 = por %p163, %p164
    %s167 = sadd.s32 %s166, 1
    %p170 = scmp.eq.s32.totalorder %s13, 1
    %p171 = scmp.ne.s32.totalorder %s166, %s168
    %p172 = scmp.eq.s32.totalorder %s13, 0
    %p173 = por %p171, %p172
    %p174 = scmp.ne.s32.totalorder %s166, %s168
    %p175 = scmp.eq.s32.totalorder %s18, 1
    %p176 = por %p174, %p175
    %p177 = scmp.ne.s32.totalorder %s168, %s169
    %p178 = scmp.eq.s32.totalorder %s18, 0
    %p179 = por %p177, %p178
    %p180 = scmp.ne.s32.totalorder %s168, %s169
    %p181 = scmp.eq.s32.totalorder %s19, 1
    %p182 = por %p180, %p181
    %p184 = scmp.ne.s32.totalorder %s169, %s183
    %p185 = scmp.eq.s32.totalorder %s19, 0
    %p186 = por %p184, %p185
    %s187 = ssub.s32 %s20, %s32
    %p188 = scmp.eq.s32.totalorder %s187, 0
    %s190 = sadd.s32 %s189, 1
    %s191 = scalar_select %p188, %s189, %s190
    %p194 = pneg %p188
    %p195 = scmp.eq.s32.totalorder %s13, 1
    %p196 = por %p194, %p195
    %p197 = scmp.ne.s32.totalorder %s189, %s192
    %p198 = scmp.eq.s32.totalorder %s13, 0
    %p199 = por %p197, %p198
    %p200 = scmp.ne.s32.totalorder %s189, %s192
    %p201 = scmp.eq.s32.totalorder %s18, 1
    %p202 = por %p200, %p201
    %p203 = scmp.ne.s32.totalorder %s192, %s193
    %p204 = scmp.eq.s32.totalorder %s18, 0
    %p205 = por %p203, %p204
    %p206 = scmp.ne.s32.totalorder %s192, %s193
    %p207 = scmp.eq.s32.totalorder %s19, 1
    %p208 = por %p206, %p207
    %p210 = scmp.ne.s32.totalorder %s193, %s209
    %p211 = scmp.eq.s32.totalorder %s19, 0
    %p212 = por %p210, %p211
    %p213 = scmp.le.s32.totalorder 1, %s13
    %p214 = scmp.lt.s32.totalorder %s13, 3
    %p215 = pnand %p213, %p214
    %p216 = pneg %p215
    // Predicated region
    $region9: #{mtan_rec_unet_forward.4} parent=5 // pred_check
      _
    $region10: #{mtan_rec_unet_forward.4} parent=5 // pred_check_branch
      %218 = sbr.rel (%p215) target = $region12
    $region11: #{mtan_rec_unet_forward.4} parent=5 // pred_region
      %s219 = ssub.s32 %s13, 1
      // Predicated region
      $region13: #{mtan_rec_unet_forward.4} parent=11 // pred_check
        %p220 = pneg %p74
      $region14: #{mtan_rec_unet_forward.4} parent=11 // pred_check_branch
        %222 = sbr.rel (%p220) target = $region16
      $region15: #{mtan_rec_unet_forward.4} parent=11 // pred_region
        _
      $region16: #{mtan_rec_unet_forward.4} parent=11 // pred_fallthru
        _
      // Predicated region
      $region17: #{mtan_rec_unet_forward.4} parent=11 // pred_check
        %p223 = pneg %p95
      $region18: #{mtan_rec_unet_forward.4} parent=11 // pred_check_branch
        %225 = sbr.rel (%p223) target = $region20
      $region19: #{mtan_rec_unet_forward.4} parent=11 // pred_region
        _
      $region20: #{mtan_rec_unet_forward.4} parent=11 // pred_fallthru
        _
      // Predicated region
      $region21: #{mtan_rec_unet_forward.4} parent=11 // pred_check
        %p226 = pneg %p116
      $region22: #{mtan_rec_unet_forward.4} parent=11 // pred_check_branch
        %228 = sbr.rel (%p226) target = $region24
      $region23: #{mtan_rec_unet_forward.4} parent=11 // pred_region
        _
      $region24: #{mtan_rec_unet_forward.4} parent=11 // pred_fallthru
        _
      // Predicated region
      $region25: #{mtan_rec_unet_forward.4} parent=11 // pred_check
        %p229 = pneg %p137
      $region26: #{mtan_rec_unet_forward.4} parent=11 // pred_check_branch
        %231 = sbr.rel (%p229) target = $region28
      $region27: #{mtan_rec_unet_forward.4} parent=11 // pred_region
        _
      $region28: #{mtan_rec_unet_forward.4} parent=11 // pred_fallthru
        _
      // Predicated region
      $region29: #{mtan_rec_unet_forward.4} parent=11 // pred_check
        %p232 = pneg %p158
      $region30: #{mtan_rec_unet_forward.4} parent=11 // pred_check_branch
        %234 = sbr.rel (%p232) target = $region32
      $region31: #{mtan_rec_unet_forward.4} parent=11 // pred_region
        _
      $region32: #{mtan_rec_unet_forward.4} parent=11 // pred_fallthru
        _
      // Predicated region
      $region33: #{mtan_rec_unet_forward.4} parent=11 // pred_check
        %p235 = pneg %p179
      $region34: #{mtan_rec_unet_forward.4} parent=11 // pred_check_branch
        %237 = sbr.rel (%p235) target = $region36
      $region35: #{mtan_rec_unet_forward.4} parent=11 // pred_region
        _
      $region36: #{mtan_rec_unet_forward.4} parent=11 // pred_fallthru
        _
    $region12: #{mtan_rec_unet_forward.4} parent=5 // pred_fallthru
      _
    %p238 = scmp.lt.s32.totalorder %s13, 2
    // Predicated region
    $region37: #{mtan_rec_unet_forward.4} parent=5 // pred_check
      %p239 = pneg %p238
    $region38: #{mtan_rec_unet_forward.4} parent=5 // pred_check_branch
      %241 = sbr.rel (%p239) target = $region40
    $region39: #{mtan_rec_unet_forward.4} parent=5 // pred_region
      // Predicated region
      $region41: #{mtan_rec_unet_forward.4} parent=39 // pred_check
        %p242 = pneg %p47
      $region42: #{mtan_rec_unet_forward.4} parent=39 // pred_check_branch
        %244 = sbr.rel (%p242) target = $region44
      $region43: #{mtan_rec_unet_forward.4} parent=39 // pred_region
        %p245 = scmp.lt.s32.totalorder %s20, 1
        %s246 = scalar_select %p245, %s20, 1
        %p247 = scmp.lt.s32.totalorder %s21, 0
        %s248 = scalar_select %p247, %s21, 0
        %s249 = smul.addr %s248, 2
        %s250 = smul.addr %s246, 2
        %s251 = sadd.s32 %s249, %s250
        %s252 = smul.addr %s251, 2
        %s253 = scalar_lea.vmem %s0, %s252
      $region44: #{mtan_rec_unet_forward.4} parent=39 // pred_fallthru
        _
    $region40: #{mtan_rec_unet_forward.4} parent=5 // pred_fallthru
      _
    %p254 = scmp.le.s32.totalorder 1, %s13
    %p255 = scmp.lt.s32.totalorder %s13, 3
    %p256 = pnand %p254, %p255
    %p257 = pneg %p256
    // Predicated region
    $region45: #{mtan_rec_unet_forward.4} parent=5 // pred_check
      _
    $region46: #{mtan_rec_unet_forward.4} parent=5 // pred_check_branch
      %259 = sbr.rel (%p256) target = $region48
    $region47: #{mtan_rec_unet_forward.4} parent=5 // pred_region
      %s260 = ssub.s32 %s13, 1
      %p261 = scmp.lt.s32.totalorder %s22, 1
      %s262 = scalar_select %p261, %s22, 1
      %p263 = scmp.lt.s32.totalorder %s23, 0
      %s264 = scalar_select %p263, %s23, 0
      %s265 = smul.addr %s264, 2
      %s266 = smul.addr %s262, 2
      %s267 = sadd.s32 %s265, %s266
      %s268 = smul.addr %s267, 2
      %s269 = scalar_lea.vmem %s0, %s268
      %p270 = pneg %p53
      %p271 = pneg %p50
      %p272 = pneg %p74
      %p273 = pneg %p71
      %p274 = pneg %p95
      %p275 = pneg %p92
      %p276 = pneg %p116
      %p277 = pneg %p113
      %p278 = pneg %p137
      %p279 = pneg %p134
      %p280 = pneg %p158
      %p281 = pneg %p155
      %p282 = pneg %p179
      %p283 = pneg %p176
      %p284 = pneg %p205
      %p285 = pneg %p202
      %p286 = scmp.lt.s32.totalorder %s22, 1
      %s287 = scalar_select %p286, %s22, 1
      %s288 = scalar_lea.vmem %s7, %s287
      %p289 = scmp.lt.s32.totalorder %s22, 1
      %s290 = scalar_select %p289, %s22, 1
      %p291 = scmp.lt.s32.totalorder %s23, 0
      %s292 = scalar_select %p291, %s23, 0
      %s293 = smul.addr %s292, 2
      %s294 = smul.addr %s290, 2
      %s295 = sadd.s32 %s293, %s294
      %s296 = smul.addr %s295, 2
      %s297 = scalar_lea.vmem %s0, %s296
      %p298 = scmp.lt.s32.totalorder %s22, 1
      %s299 = scalar_select %p298, %s22, 1
      %s300 = scalar_lea.vmem %s7, %s299
      %p301 = scmp.eq.s32.totalorder %s23, 0
      // Predicated region
      $region49: #{mtan_rec_unet_forward.4} parent=47 // pred_check
        %p302 = pneg %p301
      $region50: #{mtan_rec_unet_forward.4} parent=47 // pred_check_branch
        %304 = sbr.rel (%p302) target = $region52
      $region51: #{mtan_rec_unet_forward.4} parent=47 // pred_region
        %v305 = vlaneseq
        %vm306 = vcmp.ge.s32.totalorder %v305, 0
        %vm307 = vcmp.lt.s32.totalorder %v305, 256
        %vm308 = vmand %vm306, %vm307
        %309 = vst.msk [vmem:[#allocation2] sm:$0x3] %vm308, 0.0
      $region52: #{mtan_rec_unet_forward.4} parent=47 // pred_fallthru
        _
      %v310 = vld [vmem:[%s297] sm:$0xf]
      %v311 = vld [vmem:[%s1] sm:$0xff]
      %v312 = vld [vmem:[%s1 + $0x8] sm:$0xff]
      %v313 = vld [vmem:[%s1 + $0x10] sm:$0xff]
      %v314 = vld [vmem:[%s1 + $0x18] sm:$0xff]
      %v315 = vld [vmem:[%s1 + $0x20] sm:$0xff]
      %v316 = vld [vmem:[%s1 + $0x28] sm:$0xff]
      %v317 = vld [vmem:[%s1 + $0x30] sm:$0xff]
      %v318 = vld [vmem:[%s1 + $0x38] sm:$0xff]
      %v319 = vld [vmem:[%s1 + $0x40] sm:$0xff]
      %v320 = vld [vmem:[%s1 + $0x48] sm:$0xff]
      %v321 = vld [vmem:[%s1 + $0x50] sm:$0xff]
      %v322 = vld [vmem:[%s1 + $0x58] sm:$0xff]
      %v323 = vld [vmem:[%s1 + $0x60] sm:$0xff]
      %v324 = vld [vmem:[%s1 + $0x68] sm:$0xff]
      %v325 = vld [vmem:[%s1 + $0x70] sm:$0xff]
      %v326 = vld [vmem:[%s1 + $0x78] sm:$0xff]
      %v327 = vld [vmem:[%s1 + $0x80] sm:$0xff]
      %v328 = vld [vmem:[%s1 + $0x88] sm:$0xff]
      %v329 = vld [vmem:[%s1 + $0x90] sm:$0xff]
      %v330 = vld [vmem:[%s1 + $0x98] sm:$0xff]
      %v331 = vld [vmem:[%s1 + $0xa0] sm:$0xff]
      %v332 = vld [vmem:[%s1 + $0xa8] sm:$0xff]
      %v333 = vld [vmem:[%s1 + $0xb0] sm:$0xff]
      %v334 = vld [vmem:[%s1 + $0xb8] sm:$0xff]
      %v335 = vld [vmem:[%s1 + $0xc0] sm:$0xff]
      %v336 = vld [vmem:[%s1 + $0xc8] sm:$0xff]
      %v337 = vld [vmem:[%s1 + $0xd0] sm:$0xff]
      %v338 = vld [vmem:[%s1 + $0xd8] sm:$0xff]
      %v339 = vld [vmem:[%s1 + $0xe0] sm:$0xff]
      %v340 = vld [vmem:[%s1 + $0xe8] sm:$0xff]
      %v341 = vld [vmem:[%s1 + $0xf0] sm:$0xff]
      %v342 = vld [vmem:[%s1 + $0xf8] sm:$0xff]
      %v343 = vld [vmem:[%s3] ss:$2 sm:$0x3]
      %v345 = vlaneseq
      %v346 = vshrl.u32 %v345, 7
      %v347 = vsub.s32 0, %v346
      %v348 = vrot.slane %v343, %v347
      %v349 = vlaneseq
      %v350 = vshrl.u32 %v349, 7
      %v351 = vsub.s32 1, %v350
      %v352 = vrot.slane %v343, %v351
      %v357 = vunpack.c.l.s4 1983009808
      %v358 = vunpack.c.0.s8 %v357
      %v359 = vlaneseq
      %v360 = vshrl.u32 %v359, 7
      %v361 = vsub.s32 %v358, %v360
      %v362 = vrot.slane %v310, %v361
      %v363 = vcombine.high %v362, %v362
      %v398 = vunpack.c.l.b16 %v311
      %v399 = vunpack.c.h.b16 %v311
      %v400 = vunpack.c.l.b16 %v312
      %v401 = vunpack.c.h.b16 %v312
      %v402 = vunpack.c.l.b16 %v313
      %v403 = vunpack.c.h.b16 %v313
      %v404 = vunpack.c.l.b16 %v314
      %v405 = vunpack.c.h.b16 %v314
      %v406 = vunpack.c.l.b16 %v315
      %v407 = vunpack.c.h.b16 %v315
      %v408 = vunpack.c.l.b16 %v316
      %v409 = vunpack.c.h.b16 %v316
      %v410 = vunpack.c.l.b16 %v317
      %v411 = vunpack.c.h.b16 %v317
      %v412 = vunpack.c.l.b16 %v318
      %v413 = vunpack.c.h.b16 %v318
      %v414 = vunpack.c.l.b16 %v319
      %v415 = vunpack.c.h.b16 %v319
      %v416 = vunpack.c.l.b16 %v320
      %v417 = vunpack.c.h.b16 %v320
      %v418 = vunpack.c.l.b16 %v321
      %v419 = vunpack.c.h.b16 %v321
      %v420 = vunpack.c.l.b16 %v322
      %v421 = vunpack.c.h.b16 %v322
      %v422 = vunpack.c.l.b16 %v323
      %v423 = vunpack.c.h.b16 %v323
      %v424 = vunpack.c.l.b16 %v324
      %v425 = vunpack.c.h.b16 %v324
      %v426 = vunpack.c.l.b16 %v325
      %v427 = vunpack.c.h.b16 %v325
      %v428 = vunpack.c.l.b16 %v326
      %v429 = vunpack.c.h.b16 %v326
      %v430 = vunpack.c.l.b16 %v327
      %v431 = vunpack.c.h.b16 %v327
      %v432 = vunpack.c.l.b16 %v328
      %v433 = vunpack.c.h.b16 %v328
      %v434 = vunpack.c.l.b16 %v329
      %v435 = vunpack.c.h.b16 %v329
      %v436 = vunpack.c.l.b16 %v330
      %v437 = vunpack.c.h.b16 %v330
      %v438 = vunpack.c.l.b16 %v331
      %v439 = vunpack.c.h.b16 %v331
      %v440 = vunpack.c.l.b16 %v332
      %v441 = vunpack.c.h.b16 %v332
      %v442 = vunpack.c.l.b16 %v333
      %v443 = vunpack.c.h.b16 %v333
      %v444 = vunpack.c.l.b16 %v334
      %v445 = vunpack.c.h.b16 %v334
      %v446 = vunpack.c.l.b16 %v335
      %v447 = vunpack.c.h.b16 %v335
      %v448 = vunpack.c.l.b16 %v336
      %v449 = vunpack.c.h.b16 %v336
      %v450 = vunpack.c.l.b16 %v337
      %v451 = vunpack.c.h.b16 %v337
      %v452 = vunpack.c.l.b16 %v338
      %v453 = vunpack.c.h.b16 %v338
      %v454 = vunpack.c.l.b16 %v339
      %v455 = vunpack.c.h.b16 %v339
      %v456 = vunpack.c.l.b16 %v340
      %v457 = vunpack.c.h.b16 %v340
      %v458 = vunpack.c.l.b16 %v341
      %v459 = vunpack.c.h.b16 %v341
      %v460 = vunpack.c.l.b16 %v342
      %v461 = vunpack.c.h.b16 %v342
      %v462 = vpack.c.b16 %v400, %v398
      %v463 = vpack.c.b16 %v401, %v399
      %v464 = vpack.c.b16 %v404, %v402
      %v465 = vpack.c.b16 %v405, %v403
      %v466 = vpack.c.b16 %v408, %v406
      %v467 = vpack.c.b16 %v409, %v407
      %v468 = vpack.c.b16 %v412, %v410
      %v469 = vpack.c.b16 %v413, %v411
      %v470 = vpack.c.b16 %v416, %v414
      %v471 = vpack.c.b16 %v417, %v415
      %v472 = vpack.c.b16 %v420, %v418
      %v473 = vpack.c.b16 %v421, %v419
      %v474 = vpack.c.b16 %v424, %v422
      %v475 = vpack.c.b16 %v425, %v423
      %v476 = vpack.c.b16 %v428, %v426
      %v477 = vpack.c.b16 %v429, %v427
      %v478 = vpack.c.b16 %v432, %v430
      %v479 = vpack.c.b16 %v433, %v431
      %v480 = vpack.c.b16 %v436, %v434
      %v481 = vpack.c.b16 %v437, %v435
      %v482 = vpack.c.b16 %v440, %v438
      %v483 = vpack.c.b16 %v441, %v439
      %v484 = vpack.c.b16 %v444, %v442
      %v485 = vpack.c.b16 %v445, %v443
      %v486 = vpack.c.b16 %v448, %v446
      %v487 = vpack.c.b16 %v449, %v447
      %v488 = vpack.c.b16 %v452, %v450
      %v489 = vpack.c.b16 %v453, %v451
      %v490 = vpack.c.b16 %v456, %v454
      %v491 = vpack.c.b16 %v457, %v455
      %v492 = vpack.c.b16 %v460, %v458
      %v493 = vpack.c.b16 %v461, %v459
      %526 = vmatprep.subr.bf16.mxu0 %v477
      %527 = vmatpush1.bf16.msra.mxu0 %v476
      %528 = vmatprep.subr.bf16.mxu0 %v475
      %529 = vmatpush1.bf16.msra.mxu0 %v474
      %530 = vmatprep.subr.bf16.mxu0 %v473
      %531 = vmatpush1.bf16.msra.mxu0 %v472
      %532 = vmatprep.subr.bf16.mxu0 %v471
      %533 = vmatpush1.bf16.msra.mxu0 %v470
      %534 = vmatprep.subr.bf16.mxu0 %v469
      %535 = vmatpush1.bf16.msra.mxu0 %v468
      %536 = vmatprep.subr.bf16.mxu0 %v467
      %537 = vmatpush1.bf16.msra.mxu0 %v466
      %538 = vmatprep.subr.bf16.mxu0 %v465
      %539 = vmatpush1.bf16.msra.mxu0 %v464
      %540 = vmatprep.subr.bf16.mxu0 %v463
      %541 = vmatpush1.bf16.msra.mxu0 %v462
      %542 = vmatprep.subr.bf16.mxu0 %v493
      %543 = vmatpush2.bf16.msra.mxu0 %v492
      %544 = vmatprep.subr.bf16.mxu0 %v491
      %545 = vmatpush2.bf16.msra.mxu0 %v490
      %546 = vmatprep.subr.bf16.mxu0 %v489
      %547 = vmatpush2.bf16.msra.mxu0 %v488
      %548 = vmatprep.subr.bf16.mxu0 %v487
      %549 = vmatpush2.bf16.msra.mxu0 %v486
      %550 = vmatprep.subr.bf16.mxu0 %v485
      %551 = vmatpush2.bf16.msra.mxu0 %v484
      %552 = vmatprep.subr.bf16.mxu0 %v483
      %553 = vmatpush2.bf16.msra.mxu0 %v482
      %554 = vmatprep.subr.bf16.mxu0 %v481
      %555 = vmatpush2.bf16.msra.mxu0 %v480
      %556 = vmatprep.subr.bf16.mxu0 %v479
      %557 = vmatpush2.bf16.msra.mxu0 %v478
      %558 = vmatprep.mubr.bf16.mxu0 %v363
      %559 = vmatmul.mubr.bf16.gmra.mxu0 %v362
      %v560 = vpop.f32.mrf.mxu0
      %v561 = vadd.f32 %v348, %v560
      %v562 = vpop.f32.mrf.mxu0
      %v563 = vadd.f32 %v352, %v562
      %v564 = vpop.f32.mrf.mxu0
      %v565 = vpop.f32.mrf.mxu0
      %566 = vdwg.mxu0
      %v567 = vmax.f32 %v561, 0.0
      %v568 = vmax.f32 %v563, 0.0
      %v569 = vpack.c.bf16 %v567, %v567
      %v570 = vpack.c.bf16 %v568, %v568
      %v571 = vld [vmem:[%s2] sm:$0xff]
      %v572 = vld [vmem:[%s2 + $0x8] sm:$0xff]
      %v573 = vld [vmem:[%s2 + $0x10] sm:$0xff]
      %v574 = vld [vmem:[%s2 + $0x18] sm:$0xff]
      %v575 = vld [vmem:[%s2 + $0x20] sm:$0xff]
      %v576 = vld [vmem:[%s2 + $0x28] sm:$0xff]
      %v577 = vld [vmem:[%s2 + $0x30] sm:$0xff]
      %v578 = vld [vmem:[%s2 + $0x38] sm:$0xff]
      %v579 = vld [vmem:[%s2 + $0x40] sm:$0xff]
      %v580 = vld [vmem:[%s2 + $0x48] sm:$0xff]
      %v581 = vld [vmem:[%s2 + $0x50] sm:$0xff]
      %v582 = vld [vmem:[%s2 + $0x58] sm:$0xff]
      %v583 = vld [vmem:[%s2 + $0x60] sm:$0xff]
      %v584 = vld [vmem:[%s2 + $0x68] sm:$0xff]
      %v585 = vld [vmem:[%s2 + $0x70] sm:$0xff]
      %v586 = vld [vmem:[%s2 + $0x78] sm:$0xff]
      %v587 = vld [vmem:[%s2 + $0x80] sm:$0xff]
      %v588 = vld [vmem:[%s2 + $0x88] sm:$0xff]
      %v589 = vld [vmem:[%s2 + $0x90] sm:$0xff]
      %v590 = vld [vmem:[%s2 + $0x98] sm:$0xff]
      %v591 = vld [vmem:[%s2 + $0xa0] sm:$0xff]
      %v592 = vld [vmem:[%s2 + $0xa8] sm:$0xff]
      %v593 = vld [vmem:[%s2 + $0xb0] sm:$0xff]
      %v594 = vld [vmem:[%s2 + $0xb8] sm:$0xff]
      %v595 = vld [vmem:[%s2 + $0xc0] sm:$0xff]
      %v596 = vld [vmem:[%s2 + $0xc8] sm:$0xff]
      %v597 = vld [vmem:[%s2 + $0xd0] sm:$0xff]
      %v598 = vld [vmem:[%s2 + $0xd8] sm:$0xff]
      %v599 = vld [vmem:[%s2 + $0xe0] sm:$0xff]
      %v600 = vld [vmem:[%s2 + $0xe8] sm:$0xff]
      %v601 = vld [vmem:[%s2 + $0xf0] sm:$0xff]
      %v602 = vld [vmem:[%s2 + $0xf8] sm:$0xff]
      %s603 = scalar_lea.vmem %s3, 1
      %v604 = vld [vmem:[%s603] ss:$2 sm:$0x3]
      %v606 = vlaneseq
      %v607 = vshrl.u32 %v606, 7
      %v608 = vsub.s32 0, %v607
      %v609 = vrot.slane %v604, %v608
      %v610 = vlaneseq
      %v611 = vshrl.u32 %v610, 7
      %v612 = vsub.s32 1, %v611
      %v613 = vrot.slane %v604, %v612
      %v648 = vunpack.c.l.b16 %v571
      %v649 = vunpack.c.h.b16 %v571
      %v650 = vunpack.c.l.b16 %v572
      %v651 = vunpack.c.h.b16 %v572
      %v652 = vunpack.c.l.b16 %v573
      %v653 = vunpack.c.h.b16 %v573
      %v654 = vunpack.c.l.b16 %v574
      %v655 = vunpack.c.h.b16 %v574
      %v656 = vunpack.c.l.b16 %v575
      %v657 = vunpack.c.h.b16 %v575
      %v658 = vunpack.c.l.b16 %v576
      %v659 = vunpack.c.h.b16 %v576
      %v660 = vunpack.c.l.b16 %v577
      %v661 = vunpack.c.h.b16 %v577
      %v662 = vunpack.c.l.b16 %v578
      %v663 = vunpack.c.h.b16 %v578
      %v664 = vunpack.c.l.b16 %v579
      %v665 = vunpack.c.h.b16 %v579
      %v666 = vunpack.c.l.b16 %v580
      %v667 = vunpack.c.h.b16 %v580
      %v668 = vunpack.c.l.b16 %v581
      %v669 = vunpack.c.h.b16 %v581
      %v670 = vunpack.c.l.b16 %v582
      %v671 = vunpack.c.h.b16 %v582
      %v672 = vunpack.c.l.b16 %v583
      %v673 = vunpack.c.h.b16 %v583
      %v674 = vunpack.c.l.b16 %v584
      %v675 = vunpack.c.h.b16 %v584
      %v676 = vunpack.c.l.b16 %v585
      %v677 = vunpack.c.h.b16 %v585
      %v678 = vunpack.c.l.b16 %v586
      %v679 = vunpack.c.h.b16 %v586
      %v680 = vunpack.c.l.b16 %v587
      %v681 = vunpack.c.h.b16 %v587
      %v682 = vunpack.c.l.b16 %v588
      %v683 = vunpack.c.h.b16 %v588
      %v684 = vunpack.c.l.b16 %v589
      %v685 = vunpack.c.h.b16 %v589
      %v686 = vunpack.c.l.b16 %v590
      %v687 = vunpack.c.h.b16 %v590
      %v688 = vunpack.c.l.b16 %v591
      %v689 = vunpack.c.h.b16 %v591
      %v690 = vunpack.c.l.b16 %v592
      %v691 = vunpack.c.h.b16 %v592
      %v692 = vunpack.c.l.b16 %v593
      %v693 = vunpack.c.h.b16 %v593
      %v694 = vunpack.c.l.b16 %v594
      %v695 = vunpack.c.h.b16 %v594
      %v696 = vunpack.c.l.b16 %v595
      %v697 = vunpack.c.h.b16 %v595
      %v698 = vunpack.c.l.b16 %v596
      %v699 = vunpack.c.h.b16 %v596
      %v700 = vunpack.c.l.b16 %v597
      %v701 = vunpack.c.h.b16 %v597
      %v702 = vunpack.c.l.b16 %v598
      %v703 = vunpack.c.h.b16 %v598
      %v704 = vunpack.c.l.b16 %v599
      %v705 = vunpack.c.h.b16 %v599
      %v706 = vunpack.c.l.b16 %v600
      %v707 = vunpack.c.h.b16 %v600
      %v708 = vunpack.c.l.b16 %v601
      %v709 = vunpack.c.h.b16 %v601
      %v710 = vunpack.c.l.b16 %v602
      %v711 = vunpack.c.h.b16 %v602
      %v712 = vpack.c.b16 %v650, %v648
      %v713 = vpack.c.b16 %v651, %v649
      %v714 = vpack.c.b16 %v654, %v652
      %v715 = vpack.c.b16 %v655, %v653
      %v716 = vpack.c.b16 %v658, %v656
      %v717 = vpack.c.b16 %v659, %v657
      %v718 = vpack.c.b16 %v662, %v660
      %v719 = vpack.c.b16 %v663, %v661
      %v720 = vpack.c.b16 %v666, %v664
      %v721 = vpack.c.b16 %v667, %v665
      %v722 = vpack.c.b16 %v670, %v668
      %v723 = vpack.c.b16 %v671, %v669
      %v724 = vpack.c.b16 %v674, %v672
      %v725 = vpack.c.b16 %v675, %v673
      %v726 = vpack.c.b16 %v678, %v676
      %v727 = vpack.c.b16 %v679, %v677
      %v728 = vpack.c.b16 %v682, %v680
      %v729 = vpack.c.b16 %v683, %v681
      %v730 = vpack.c.b16 %v686, %v684
      %v731 = vpack.c.b16 %v687, %v685
      %v732 = vpack.c.b16 %v690, %v688
      %v733 = vpack.c.b16 %v691, %v689
      %v734 = vpack.c.b16 %v694, %v692
      %v735 = vpack.c.b16 %v695, %v693
      %v736 = vpack.c.b16 %v698, %v696
      %v737 = vpack.c.b16 %v699, %v697
      %v738 = vpack.c.b16 %v702, %v700
      %v739 = vpack.c.b16 %v703, %v701
      %v740 = vpack.c.b16 %v706, %v704
      %v741 = vpack.c.b16 %v707, %v705
      %v742 = vpack.c.b16 %v710, %v708
      %v743 = vpack.c.b16 %v711, %v709
      %776 = vmatprep.subr.bf16.mxu0 %v727
      %777 = vmatpush1.bf16.msra.mxu0 %v726
      %778 = vmatprep.subr.bf16.mxu0 %v725
      %779 = vmatpush1.bf16.msra.mxu0 %v724
      %780 = vmatprep.subr.bf16.mxu0 %v723
      %781 = vmatpush1.bf16.msra.mxu0 %v722
      %782 = vmatprep.subr.bf16.mxu0 %v721
      %783 = vmatpush1.bf16.msra.mxu0 %v720
      %784 = vmatprep.subr.bf16.mxu0 %v719
      %785 = vmatpush1.bf16.msra.mxu0 %v718
      %786 = vmatprep.subr.bf16.mxu0 %v717
      %787 = vmatpush1.bf16.msra.mxu0 %v716
      %788 = vmatprep.subr.bf16.mxu0 %v715
      %789 = vmatpush1.bf16.msra.mxu0 %v714
      %790 = vmatprep.subr.bf16.mxu0 %v713
      %791 = vmatpush1.bf16.msra.mxu0 %v712
      %792 = vmatprep.subr.bf16.mxu0 %v743
      %793 = vmatpush2.bf16.msra.mxu0 %v742
      %794 = vmatprep.subr.bf16.mxu0 %v741
      %795 = vmatpush2.bf16.msra.mxu0 %v740
      %796 = vmatprep.subr.bf16.mxu0 %v739
      %797 = vmatpush2.bf16.msra.mxu0 %v738
      %798 = vmatprep.subr.bf16.mxu0 %v737
      %799 = vmatpush2.bf16.msra.mxu0 %v736
      %800 = vmatprep.subr.bf16.mxu0 %v735
      %801 = vmatpush2.bf16.msra.mxu0 %v734
      %802 = vmatprep.subr.bf16.mxu0 %v733
      %803 = vmatpush2.bf16.msra.mxu0 %v732
      %804 = vmatprep.subr.bf16.mxu0 %v731
      %805 = vmatpush2.bf16.msra.mxu0 %v730
      %806 = vmatprep.subr.bf16.mxu0 %v729
      %807 = vmatpush2.bf16.msra.mxu0 %v728
      %808 = vmatprep.mubr.bf16.mxu0 %v570
      %809 = vmatmul.mubr.bf16.gmra.mxu0 %v569
      %v810 = vpop.f32.mrf.mxu0
      %v811 = vadd.f32 %v609, %v810
      %v812 = vpop.f32.mrf.mxu0
      %v813 = vadd.f32 %v613, %v812
      %v814 = vpop.f32.mrf.mxu0
      %v815 = vpop.f32.mrf.mxu0
      %816 = vdwg.mxu0
      %v817 = vsub.f32 0.0, %v811
      %v818 = vsub.f32 0.0, %v813
      %v819 = vmul.f32 %v817, 1.442695
      %v820 = vpow.pop %v819
      %v821 = vmul.f32 %v818, 1.442695
      %v822 = vpow.pop %v821
      %v823 = vadd.f32 %v820, 1.0
      %v824 = vadd.f32 %v822, 1.0
      %v825 = vrcp.pop %v823
      %v826 = vrcp.pop %v824
      %v827 = vunpack.c.l.bf16 %v310
      %v829 = vcombine.high %v827, %v827
      %v831 = vmul.f32 %v825, %v827
      %v832 = vmul.f32 %v826, %v829
      %v833 = vld [vmem:[#allocation2] sm:$0x3]
      %vm834 = vcmask 1043456
      %v835 = vsel %vm834, %v831, 0.0
      %v836 = vrot.slane %v835, 4
      %v837 = vadd.f32 %v835, %v836
      %v838 = vrot.slane %v837, 2
      %v839 = vadd.f32 %v837, %v838
      %v840 = vrot.slane %v839, 1
      %v841 = vadd.f32 %v839, %v840
      %v842 = vsel %vm834, %v832, 0.0
      %v843 = vrot.slane %v842, 4
      %v844 = vadd.f32 %v842, %v843
      %v845 = vrot.slane %v844, 2
      %v846 = vadd.f32 %v844, %v845
      %v847 = vrot.slane %v846, 1
      %v848 = vadd.f32 %v846, %v847
      %v851 = vcombine.low %v841, %v848
      %v853 = vunpack.c.l.s4 1966171168
      %v854 = vunpack.c.0.s8 %v853
      %v855 = vlaneseq
      %v856 = vshrl.u32 %v855, 7
      %v857 = vsub.s32 %v854, %v856
      %v858 = vrot.slane %v851, %v857
      %v860 = vunpack.c.l.s4 1966171168
      %v861 = vunpack.c.0.s8 %v860
      %v862 = vlaneseq
      %v863 = vshrl.u32 %v862, 7
      %v864 = vsub.s32 %v861, %v863
      %v865 = vrot.slane %v858, %v864
      %v867 = vadd.f32 %v833, %v865
      %v868 = vlaneseq
      %vm869 = vcmp.ge.s32.totalorder %v868, 0
      %vm870 = vcmp.lt.s32.totalorder %v868, 256
      %vm871 = vmand %vm869, %vm870
      %872 = vst.msk [vmem:[#allocation2] sm:$0x3] %vm871, %v867
      // Predicated region
      $region53: #{mtan_rec_unet_forward.4} parent=47 // pred_check
        %p873 = pneg %p301
      $region54: #{mtan_rec_unet_forward.4} parent=47 // pred_check_branch
        %875 = sbr.rel (%p873) target = $region56
      $region55: #{mtan_rec_unet_forward.4} parent=47 // pred_region
        %v876 = vld [vmem:[#allocation2] sm:$0x3]
        %v877 = vld [vmem:[%s4] sm:$0xff]
        %v878 = vld [vmem:[%s4 + $0x8] sm:$0xff]
        %v879 = vld [vmem:[%s4 + $0x10] sm:$0xff]
        %v880 = vld [vmem:[%s4 + $0x18] sm:$0xff]
        %v881 = vld [vmem:[%s4 + $0x20] sm:$0xff]
        %v882 = vld [vmem:[%s4 + $0x28] sm:$0xff]
        %v883 = vld [vmem:[%s4 + $0x30] sm:$0xff]
        %v884 = vld [vmem:[%s4 + $0x38] sm:$0xff]
        %v885 = vld [vmem:[%s4 + $0x40] sm:$0xff]
        %v886 = vld [vmem:[%s4 + $0x48] sm:$0xff]
        %v887 = vld [vmem:[%s4 + $0x50] sm:$0xff]
        %v888 = vld [vmem:[%s4 + $0x58] sm:$0xff]
        %v889 = vld [vmem:[%s4 + $0x60] sm:$0xff]
        %v890 = vld [vmem:[%s4 + $0x68] sm:$0xff]
        %v891 = vld [vmem:[%s4 + $0x70] sm:$0xff]
        %v892 = vld [vmem:[%s4 + $0x78] sm:$0xff]
        %v893 = vld [vmem:[%s4 + $0x80] sm:$0xff]
        %v894 = vld [vmem:[%s4 + $0x88] sm:$0xff]
        %v895 = vld [vmem:[%s4 + $0x90] sm:$0xff]
        %v896 = vld [vmem:[%s4 + $0x98] sm:$0xff]
        %v897 = vld [vmem:[%s4 + $0xa0] sm:$0xff]
        %v898 = vld [vmem:[%s4 + $0xa8] sm:$0xff]
        %v899 = vld [vmem:[%s4 + $0xb0] sm:$0xff]
        %v900 = vld [vmem:[%s4 + $0xb8] sm:$0xff]
        %v901 = vld [vmem:[%s4 + $0xc0] sm:$0xff]
        %v902 = vld [vmem:[%s4 + $0xc8] sm:$0xff]
        %v903 = vld [vmem:[%s4 + $0xd0] sm:$0xff]
        %v904 = vld [vmem:[%s4 + $0xd8] sm:$0xff]
        %v905 = vld [vmem:[%s4 + $0xe0] sm:$0xff]
        %v906 = vld [vmem:[%s4 + $0xe8] sm:$0xff]
        %v907 = vld [vmem:[%s4 + $0xf0] sm:$0xff]
        %v908 = vld [vmem:[%s4 + $0xf8] sm:$0xff]
        %v909 = vld [vmem:[%s6] sm:$0x1]
        %v911 = vlaneseq
        %v912 = vshrl.u32 %v911, 7
        %v913 = vsub.s32 0, %v912
        %v914 = vrot.slane %v876, %v913
        %v915 = vlaneseq
        %v916 = vshrl.u32 %v915, 7
        %v917 = vsub.s32 1, %v916
        %v918 = vrot.slane %v876, %v917
        %921 = vmatprep.subr.mxu0 0.0
        %922 = vmatpush1.msra.mxu0 %v892
        %923 = vmatprep.subr.mxu0 0.0
        %924 = vmatpush1.msra.mxu0 %v891
        %925 = vmatprep.subr.mxu0 0.0
        %926 = vmatpush1.msra.mxu0 %v890
        %927 = vmatprep.subr.mxu0 0.0
        %928 = vmatpush1.msra.mxu0 %v889
        %929 = vmatprep.subr.mxu0 0.0
        %930 = vmatpush1.msra.mxu0 %v888
        %931 = vmatprep.subr.mxu0 0.0
        %932 = vmatpush1.msra.mxu0 %v887
        %933 = vmatprep.subr.mxu0 0.0
        %934 = vmatpush1.msra.mxu0 %v886
        %935 = vmatprep.subr.mxu0 0.0
        %936 = vmatpush1.msra.mxu0 %v885
        %937 = vmatprep.subr.mxu0 0.0
        %938 = vmatpush1.msra.mxu0 %v884
        %939 = vmatprep.subr.mxu0 0.0
        %940 = vmatpush1.msra.mxu0 %v883
        %941 = vmatprep.subr.mxu0 0.0
        %942 = vmatpush1.msra.mxu0 %v882
        %943 = vmatprep.subr.mxu0 0.0
        %944 = vmatpush1.msra.mxu0 %v881
        %945 = vmatprep.subr.mxu0 0.0
        %946 = vmatpush1.msra.mxu0 %v880
        %947 = vmatprep.subr.mxu0 0.0
        %948 = vmatpush1.msra.mxu0 %v879
        %949 = vmatprep.subr.mxu0 0.0
        %950 = vmatpush1.msra.mxu0 %v878
        %951 = vmatprep.subr.mxu0 0.0
        %952 = vmatpush1.msra.mxu0 %v877
        %953 = vmatprep.subr.mxu0 0.0
        %954 = vmatpush2.msra.mxu0 %v908
        %955 = vmatprep.subr.mxu0 0.0
        %956 = vmatpush2.msra.mxu0 %v907
        %957 = vmatprep.subr.mxu0 0.0
        %958 = vmatpush2.msra.mxu0 %v906
        %959 = vmatprep.subr.mxu0 0.0
        %960 = vmatpush2.msra.mxu0 %v905
        %961 = vmatprep.subr.mxu0 0.0
        %962 = vmatpush2.msra.mxu0 %v904
        %963 = vmatprep.subr.mxu0 0.0
        %964 = vmatpush2.msra.mxu0 %v903
        %965 = vmatprep.subr.mxu0 0.0
        %966 = vmatpush2.msra.mxu0 %v902
        %967 = vmatprep.subr.mxu0 0.0
        %968 = vmatpush2.msra.mxu0 %v901
        %969 = vmatprep.subr.mxu0 0.0
        %970 = vmatpush2.msra.mxu0 %v900
        %971 = vmatprep.subr.mxu0 0.0
        %972 = vmatpush2.msra.mxu0 %v899
        %973 = vmatprep.subr.mxu0 0.0
        %974 = vmatpush2.msra.mxu0 %v898
        %975 = vmatprep.subr.mxu0 0.0
        %976 = vmatpush2.msra.mxu0 %v897
        %977 = vmatprep.subr.mxu0 0.0
        %978 = vmatpush2.msra.mxu0 %v896
        %979 = vmatprep.subr.mxu0 0.0
        %980 = vmatpush2.msra.mxu0 %v895
        %981 = vmatprep.subr.mxu0 0.0
        %982 = vmatpush2.msra.mxu0 %v894
        %983 = vmatprep.subr.mxu0 0.0
        %984 = vmatpush2.msra.mxu0 %v893
        %985 = vmatprep.mubr.f32.mxu0 %v918
        %986 = vmatmul.mubr.f32.gmra.mxu0 %v914
        %v987 = vpop.f32.mrf.mxu0
        %v988 = vadd.f32 %v909, %v987
        %v989 = vpop.f32.mrf.mxu0
        %990 = vdwg.mxu0
        %v991 = vmax.f32 %v988, 0.0
        %v992 = vld [vmem:[%s5] sm:$0xff]
        %v993 = vld [vmem:[%s5 + $0x8] sm:$0xff]
        %v994 = vld [vmem:[%s6 + $0x1] sm:$0x1]
        %vm995 = vcmask 130048
        %v997 = vsel %vm995, %v991, 0
        %999 = vmatprep.subr.mxu0 0.0
        %1000 = vmatpush1.msra.mxu0 0.0
        %1001 = vmatprep.subr.mxu0 0.0
        %1002 = vmatpush1.msra.mxu0 0.0
        %1003 = vmatprep.subr.mxu0 0.0
        %1004 = vmatpush1.msra.mxu0 0.0
        %1005 = vmatprep.subr.mxu0 0.0
        %1006 = vmatpush1.msra.mxu0 0.0
        %1007 = vmatprep.subr.mxu0 0.0
        %1008 = vmatpush1.msra.mxu0 0.0
        %1009 = vmatprep.subr.mxu0 0.0
        %1010 = vmatpush1.msra.mxu0 0.0
        %1011 = vmatprep.subr.mxu0 0.0
        %1012 = vmatpush1.msra.mxu0 0.0
        %1013 = vmatprep.subr.mxu0 0.0
        %1014 = vmatpush1.msra.mxu0 0.0
        %1015 = vmatprep.subr.mxu0 0.0
        %1016 = vmatpush1.msra.mxu0 0.0
        %1017 = vmatprep.subr.mxu0 0.0
        %1018 = vmatpush1.msra.mxu0 0.0
        %1019 = vmatprep.subr.mxu0 0.0
        %1020 = vmatpush1.msra.mxu0 0.0
        %1021 = vmatprep.subr.mxu0 0.0
        %1022 = vmatpush1.msra.mxu0 0.0
        %1023 = vmatprep.subr.mxu0 0.0
        %1024 = vmatpush1.msra.mxu0 0.0
        %1025 = vmatprep.subr.mxu0 0.0
        %1026 = vmatpush1.msra.mxu0 0.0
        %1027 = vmatprep.subr.mxu0 0.0
        %1028 = vmatpush1.msra.mxu0 %v993
        %1029 = vmatprep.subr.mxu0 0.0
        %1030 = vmatpush1.msra.mxu0 %v992
        %1031 = vmatprep.subr.mxu0 0.0
        %1032 = vmatpush2.msra.mxu0 0.0
        %1033 = vmatprep.subr.mxu0 0.0
        %1034 = vmatpush2.msra.mxu0 0.0
        %1035 = vmatprep.subr.mxu0 0.0
        %1036 = vmatpush2.msra.mxu0 0.0
        %1037 = vmatprep.subr.mxu0 0.0
        %1038 = vmatpush2.msra.mxu0 0.0
        %1039 = vmatprep.subr.mxu0 0.0
        %1040 = vmatpush2.msra.mxu0 0.0
        %1041 = vmatprep.subr.mxu0 0.0
        %1042 = vmatpush2.msra.mxu0 0.0
        %1043 = vmatprep.subr.mxu0 0.0
        %1044 = vmatpush2.msra.mxu0 0.0
        %1045 = vmatprep.subr.mxu0 0.0
        %1046 = vmatpush2.msra.mxu0 0.0
        %1047 = vmatprep.subr.mxu0 0.0
        %1048 = vmatpush2.msra.mxu0 0.0
        %1049 = vmatprep.subr.mxu0 0.0
        %1050 = vmatpush2.msra.mxu0 0.0
        %1051 = vmatprep.subr.mxu0 0.0
        %1052 = vmatpush2.msra.mxu0 0.0
        %1053 = vmatprep.subr.mxu0 0.0
        %1054 = vmatpush2.msra.mxu0 0.0
        %1055 = vmatprep.subr.mxu0 0.0
        %1056 = vmatpush2.msra.mxu0 0.0
        %1057 = vmatprep.subr.mxu0 0.0
        %1058 = vmatpush2.msra.mxu0 0.0
        %1059 = vmatprep.subr.mxu0 0.0
        %1060 = vmatpush2.msra.mxu0 0.0
        %1061 = vmatprep.subr.mxu0 0.0
        %1062 = vmatpush2.msra.mxu0 0.0
        %1063 = vmatprep.mubr.f32.mxu0 0.0
        %1064 = vmatmul.mubr.f32.gmra.mxu0 %v997
        %v1065 = vpop.f32.mrf.mxu0
        %v1066 = vadd.f32 %v994, %v1065
        %v1067 = vpop.f32.mrf.mxu0
        %1068 = vdwg.mxu0
        %vm1069 = vcmask 122880
        %1070 = vst.msk [vmem:[%s300] sm:$0x1] %vm1069, %v1066
      $region56: #{mtan_rec_unet_forward.4} parent=47 // pred_fallthru
        _
      %p1071 = scmp.lt.s32.totalorder %s22, 1
      %s1072 = scalar_select %p1071, %s22, 1
      %s1073 = scalar_lea.vmem %s7, %s1072
      // Predicated region
      $region57: #{mtan_rec_unet_forward.4} parent=47 // pred_check
        %p1074 = pneg %p202
      $region58: #{mtan_rec_unet_forward.4} parent=47 // pred_check_branch
        %1076 = sbr.rel (%p1074) target = $region60
      $region59: #{mtan_rec_unet_forward.4} parent=47 // pred_region
        _
      $region60: #{mtan_rec_unet_forward.4} parent=47 // pred_fallthru
        _
    $region48: #{mtan_rec_unet_forward.4} parent=5 // pred_fallthru
      _
    %p1077 = scmp.le.s32.totalorder 2, %s13
    // Predicated region
    $region61: #{mtan_rec_unet_forward.4} parent=5 // pred_check
      %p1078 = pneg %p1077
    $region62: #{mtan_rec_unet_forward.4} parent=5 // pred_check_branch
      %1080 = sbr.rel (%p1078) target = $region64
    $region63: #{mtan_rec_unet_forward.4} parent=5 // pred_region
      %s1081 = ssub.s32 %s13, 2
      // Predicated region
      $region65: #{mtan_rec_unet_forward.4} parent=63 // pred_check
        %p1082 = pneg %p208
      $region66: #{mtan_rec_unet_forward.4} parent=63 // pred_check_branch
        %1084 = sbr.rel (%p1082) target = $region68
      $region67: #{mtan_rec_unet_forward.4} parent=63 // pred_region
        %p1085 = scmp.lt.s32.totalorder %s24, 1
        %s1086 = scalar_select %p1085, %s24, 1
        %s1087 = scalar_lea.vmem %s7, %s1086
      $region68: #{mtan_rec_unet_forward.4} parent=63 // pred_fallthru
        _
    $region64: #{mtan_rec_unet_forward.4} parent=5 // pred_fallthru
      _
  $region6: #{mtan_rec_unet_forward.4} parent=0 // loop_footer
    %s17 = sadd.s32 1, %s13
  $region7: #{mtan_rec_unet_forward.4} parent=0 // loop_footer_branch
    %12 = sbr.rel target = $region3
  $region8: #{mtan_rec_unet_forward.4} parent=0 // loop_exit
    _

// kernel: mtan_rec_unet_forward.5
$region0: #{mtan_rec_unet_forward.5}
  #allocation0 [shape = 'u32[]', space=smem, size = 0x4, offset = 0x4, fixed_abs, tag = 'smem constant byte address 0x4 - core index']
  #allocation1 [shape = 'u32[144,128]{1,0:T(1,128)}', space=vmem, size = 0x12000, scoped, tag = 'internal scratch']
  #allocation2 [shape = 'f32[1,256]{1,0:T(1,128)}', space=vmem, size = 0x400, scoped, tag = 'scratch operand']
  %s0 = inlined_call_operand.vmem [shape: bf16[2,2,256], index: 0, kind: input, shape index: {}]
  %s1 = inlined_call_operand.vmem [shape: bf16[256,256], index: 1, kind: input, shape index: {}]
  %s2 = inlined_call_operand.vmem [shape: bf16[256,256], index: 2, kind: input, shape index: {}]
  %s3 = inlined_call_operand.vmem [shape: f32[2,256], index: 3, kind: input, shape index: {}]
  %s4 = inlined_call_operand.vmem [shape: f32[256,32], index: 4, kind: input, shape index: {}]
  %s5 = inlined_call_operand.vmem [shape: f32[32,32], index: 5, kind: input, shape index: {}]
  %s6 = inlined_call_operand.vmem [shape: f32[2,32], index: 6, kind: input, shape index: {}]
  %s7 = inlined_call_operand.vmem [shape: f32[2,1,32], index: 7, kind: output, shape index: {}]
  %s8 = sld [smem:[#allocation0]]
  $region69: #{mtan_rec_unet_forward.5} parent=0
    _
  %s10 = ssub.s32 1, %s8
  %s11 = scalar_select 0, %s10, %s8
  loop: start=0, step=1, limit=4
  $region2: #{mtan_rec_unet_forward.5} parent=0 // loop_pre_header
    _
  $region3: #{mtan_rec_unet_forward.5} parent=0 // loop_header
    %s13 = sphi 0, %s17
    %p14 = scmp.ge.s32.totalorder %s13, 4
    %s20 = sphi 0, %s32
    %s21 = sphi 0, %s28
    %s22 = sphi 0, %s20
    %s23 = sphi 0, %s21
    %s24 = sphi 0, %s22
    %s25 = sphi 0, %s23
    %s37 = sphi 0, %s39
    %s40 = sphi 0, %s37
    %s41 = sphi 0, %s40
    %s57 = sphi 0, %s41
    %s61 = sphi 0, %s61
    %s63 = sphi 0, %s61
    %s64 = sphi 0, %s63
    %s78 = sphi 0, %s64
    %s82 = sphi 0, %s82
    %s84 = sphi 0, %s82
    %s85 = sphi 0, %s84
    %s99 = sphi 0, %s85
    %s103 = sphi 0, %s103
    %s105 = sphi 0, %s103
    %s106 = sphi 0, %s105
    %s120 = sphi 0, %s106
    %s124 = sphi 0, %s124
    %s126 = sphi 0, %s124
    %s127 = sphi 0, %s126
    %s141 = sphi 0, %s127
    %s145 = sphi 0, %s145
    %s147 = sphi 0, %s145
    %s148 = sphi 0, %s147
    %s162 = sphi 0, %s148
    %s166 = sphi 0, %s166
    %s168 = sphi 0, %s166
    %s169 = sphi 0, %s168
    %s183 = sphi 0, %s169
    %s189 = sphi 0, %s191
    %s192 = sphi 0, %s189
    %s193 = sphi 0, %s192
    %s209 = sphi 0, %s193
  $region4: #{mtan_rec_unet_forward.5} parent=0 // loop_header_branch
    %16 = sbr.rel (%p14) target = $region8
  $region5: #{mtan_rec_unet_forward.5} parent=0 // loop_body
    %s18 = ssub.s32 %s13, 1
    %s19 = ssub.s32 %s13, 2
    %s26 = sadd.s32 1, %s21
    %p27 = scmp.ge.s32.totalorder %s26, 1
    %s28 = scalar_select %p27, 0, %s26
    %s29 = sadd.s32 1, %s20
    %s30 = scalar_select %p27, %s29, %s20
    %p31 = scmp.ge.s32.totalorder %s30, 2
    %s32 = scalar_select %p31, 0, %s30
    %s33 = ssub.s32 %s20, %s32
    %s34 = ssub.s32 %s21, %s28
    %s35 = sor.u32 %s33, %s34
    %p36 = scmp.eq.s32.totalorder %s35, 0
    %s38 = sadd.s32 %s37, 1
    %s39 = scalar_select %p36, %s37, %s38
    %p42 = pneg %p36
    %p43 = scmp.eq.s32.totalorder %s13, 1
    %p44 = por %p42, %p43
    %p45 = scmp.ne.s32.totalorder %s37, %s40
    %p46 = scmp.eq.s32.totalorder %s13, 0
    %p47 = por %p45, %p46
    %p48 = scmp.ne.s32.totalorder %s37, %s40
    %p49 = scmp.eq.s32.totalorder %s18, 1
    %p50 = por %p48, %p49
    %p51 = scmp.ne.s32.totalorder %s40, %s41
    %p52 = scmp.eq.s32.totalorder %s18, 0
    %p53 = por %p51, %p52
    %p54 = scmp.ne.s32.totalorder %s40, %s41
    %p55 = scmp.eq.s32.totalorder %s19, 1
    %p56 = por %p54, %p55
    %p58 = scmp.ne.s32.totalorder %s41, %s57
    %p59 = scmp.eq.s32.totalorder %s19, 0
    %p60 = por %p58, %p59
    %s62 = sadd.s32 %s61, 1
    %p65 = scmp.eq.s32.totalorder %s13, 1
    %p66 = scmp.ne.s32.totalorder %s61, %s63
    %p67 = scmp.eq.s32.totalorder %s13, 0
    %p68 = por %p66, %p67
    %p69 = scmp.ne.s32.totalorder %s61, %s63
    %p70 = scmp.eq.s32.totalorder %s18, 1
    %p71 = por %p69, %p70
    %p72 = scmp.ne.s32.totalorder %s63, %s64
    %p73 = scmp.eq.s32.totalorder %s18, 0
    %p74 = por %p72, %p73
    %p75 = scmp.ne.s32.totalorder %s63, %s64
    %p76 = scmp.eq.s32.totalorder %s19, 1
    %p77 = por %p75, %p76
    %p79 = scmp.ne.s32.totalorder %s64, %s78
    %p80 = scmp.eq.s32.totalorder %s19, 0
    %p81 = por %p79, %p80
    %s83 = sadd.s32 %s82, 1
    %p86 = scmp.eq.s32.totalorder %s13, 1
    %p87 = scmp.ne.s32.totalorder %s82, %s84
    %p88 = scmp.eq.s32.totalorder %s13, 0
    %p89 = por %p87, %p88
    %p90 = scmp.ne.s32.totalorder %s82, %s84
    %p91 = scmp.eq.s32.totalorder %s18, 1
    %p92 = por %p90, %p91
    %p93 = scmp.ne.s32.totalorder %s84, %s85
    %p94 = scmp.eq.s32.totalorder %s18, 0
    %p95 = por %p93, %p94
    %p96 = scmp.ne.s32.totalorder %s84, %s85
    %p97 = scmp.eq.s32.totalorder %s19, 1
    %p98 = por %p96, %p97
    %p100 = scmp.ne.s32.totalorder %s85, %s99
    %p101 = scmp.eq.s32.totalorder %s19, 0
    %p102 = por %p100, %p101
    %s104 = sadd.s32 %s103, 1
    %p107 = scmp.eq.s32.totalorder %s13, 1
    %p108 = scmp.ne.s32.totalorder %s103, %s105
    %p109 = scmp.eq.s32.totalorder %s13, 0
    %p110 = por %p108, %p109
    %p111 = scmp.ne.s32.totalorder %s103, %s105
    %p112 = scmp.eq.s32.totalorder %s18, 1
    %p113 = por %p111, %p112
    %p114 = scmp.ne.s32.totalorder %s105, %s106
    %p115 = scmp.eq.s32.totalorder %s18, 0
    %p116 = por %p114, %p115
    %p117 = scmp.ne.s32.totalorder %s105, %s106
    %p118 = scmp.eq.s32.totalorder %s19, 1
    %p119 = por %p117, %p118
    %p121 = scmp.ne.s32.totalorder %s106, %s120
    %p122 = scmp.eq.s32.totalorder %s19, 0
    %p123 = por %p121, %p122
    %s125 = sadd.s32 %s124, 1
    %p128 = scmp.eq.s32.totalorder %s13, 1
    %p129 = scmp.ne.s32.totalorder %s124, %s126
    %p130 = scmp.eq.s32.totalorder %s13, 0
    %p131 = por %p129, %p130
    %p132 = scmp.ne.s32.totalorder %s124, %s126
    %p133 = scmp.eq.s32.totalorder %s18, 1
    %p134 = por %p132, %p133
    %p135 = scmp.ne.s32.totalorder %s126, %s127
    %p136 = scmp.eq.s32.totalorder %s18, 0
    %p137 = por %p135, %p136
    %p138 = scmp.ne.s32.totalorder %s126, %s127
    %p139 = scmp.eq.s32.totalorder %s19, 1
    %p140 = por %p138, %p139
    %p142 = scmp.ne.s32.totalorder %s127, %s141
    %p143 = scmp.eq.s32.totalorder %s19, 0
    %p144 = por %p142, %p143
    %s146 = sadd.s32 %s145, 1
    %p149 = scmp.eq.s32.totalorder %s13, 1
    %p150 = scmp.ne.s32.totalorder %s145, %s147
    %p151 = scmp.eq.s32.totalorder %s13, 0
    %p152 = por %p150, %p151
    %p153 = scmp.ne.s32.totalorder %s145, %s147
    %p154 = scmp.eq.s32.totalorder %s18, 1
    %p155 = por %p153, %p154
    %p156 = scmp.ne.s32.totalorder %s147, %s148
    %p157 = scmp.eq.s32.totalorder %s18, 0
    %p158 = por %p156, %p157
    %p159 = scmp.ne.s32.totalorder %s147, %s148
    %p160 = scmp.eq.s32.totalorder %s19, 1
    %p161 = por %p159, %p160
    %p163 = scmp.ne.s32.totalorder %s148, %s162
    %p164 = scmp.eq.s32.totalorder %s19, 0
    %p165 = por %p163, %p164
    %s167 = sadd.s32 %s166, 1
    %p170 = scmp.eq.s32.totalorder %s13, 1
    %p171 = scmp.ne.s32.totalorder %s166, %s168
    %p172 = scmp.eq.s32.totalorder %s13, 0
    %p173 = por %p171, %p172
    %p174 = scmp.ne.s32.totalorder %s166, %s168
    %p175 = scmp.eq.s32.totalorder %s18, 1
    %p176 = por %p174, %p175
    %p177 = scmp.ne.s32.totalorder %s168, %s169
    %p178 = scmp.eq.s32.totalorder %s18, 0
    %p179 = por %p177, %p178
    %p180 = scmp.ne.s32.totalorder %s168, %s169
    %p181 = scmp.eq.s32.totalorder %s19, 1
    %p182 = por %p180, %p181
    %p184 = scmp.ne.s32.totalorder %s169, %s183
    %p185 = scmp.eq.s32.totalorder %s19, 0
    %p186 = por %p184, %p185
    %s187 = ssub.s32 %s20, %s32
    %p188 = scmp.eq.s32.totalorder %s187, 0
    %s190 = sadd.s32 %s189, 1
    %s191 = scalar_select %p188, %s189, %s190
    %p194 = pneg %p188
    %p195 = scmp.eq.s32.totalorder %s13, 1
    %p196 = por %p194, %p195
    %p197 = scmp.ne.s32.totalorder %s189, %s192
    %p198 = scmp.eq.s32.totalorder %s13, 0
    %p199 = por %p197, %p198
    %p200 = scmp.ne.s32.totalorder %s189, %s192
    %p201 = scmp.eq.s32.totalorder %s18, 1
    %p202 = por %p200, %p201
    %p203 = scmp.ne.s32.totalorder %s192, %s193
    %p204 = scmp.eq.s32.totalorder %s18, 0
    %p205 = por %p203, %p204
    %p206 = scmp.ne.s32.totalorder %s192, %s193
    %p207 = scmp.eq.s32.totalorder %s19, 1
    %p208 = por %p206, %p207
    %p210 = scmp.ne.s32.totalorder %s193, %s209
    %p211 = scmp.eq.s32.totalorder %s19, 0
    %p212 = por %p210, %p211
    %p213 = scmp.le.s32.totalorder 1, %s13
    %p214 = scmp.lt.s32.totalorder %s13, 3
    %p215 = pnand %p213, %p214
    %p216 = pneg %p215
    // Predicated region
    $region9: #{mtan_rec_unet_forward.5} parent=5 // pred_check
      _
    $region10: #{mtan_rec_unet_forward.5} parent=5 // pred_check_branch
      %218 = sbr.rel (%p215) target = $region12
    $region11: #{mtan_rec_unet_forward.5} parent=5 // pred_region
      %s219 = ssub.s32 %s13, 1
      // Predicated region
      $region13: #{mtan_rec_unet_forward.5} parent=11 // pred_check
        %p220 = pneg %p74
      $region14: #{mtan_rec_unet_forward.5} parent=11 // pred_check_branch
        %222 = sbr.rel (%p220) target = $region16
      $region15: #{mtan_rec_unet_forward.5} parent=11 // pred_region
        _
      $region16: #{mtan_rec_unet_forward.5} parent=11 // pred_fallthru
        _
      // Predicated region
      $region17: #{mtan_rec_unet_forward.5} parent=11 // pred_check
        %p223 = pneg %p95
      $region18: #{mtan_rec_unet_forward.5} parent=11 // pred_check_branch
        %225 = sbr.rel (%p223) target = $region20
      $region19: #{mtan_rec_unet_forward.5} parent=11 // pred_region
        _
      $region20: #{mtan_rec_unet_forward.5} parent=11 // pred_fallthru
        _
      // Predicated region
      $region21: #{mtan_rec_unet_forward.5} parent=11 // pred_check
        %p226 = pneg %p116
      $region22: #{mtan_rec_unet_forward.5} parent=11 // pred_check_branch
        %228 = sbr.rel (%p226) target = $region24
      $region23: #{mtan_rec_unet_forward.5} parent=11 // pred_region
        _
      $region24: #{mtan_rec_unet_forward.5} parent=11 // pred_fallthru
        _
      // Predicated region
      $region25: #{mtan_rec_unet_forward.5} parent=11 // pred_check
        %p229 = pneg %p137
      $region26: #{mtan_rec_unet_forward.5} parent=11 // pred_check_branch
        %231 = sbr.rel (%p229) target = $region28
      $region27: #{mtan_rec_unet_forward.5} parent=11 // pred_region
        _
      $region28: #{mtan_rec_unet_forward.5} parent=11 // pred_fallthru
        _
      // Predicated region
      $region29: #{mtan_rec_unet_forward.5} parent=11 // pred_check
        %p232 = pneg %p158
      $region30: #{mtan_rec_unet_forward.5} parent=11 // pred_check_branch
        %234 = sbr.rel (%p232) target = $region32
      $region31: #{mtan_rec_unet_forward.5} parent=11 // pred_region
        _
      $region32: #{mtan_rec_unet_forward.5} parent=11 // pred_fallthru
        _
      // Predicated region
      $region33: #{mtan_rec_unet_forward.5} parent=11 // pred_check
        %p235 = pneg %p179
      $region34: #{mtan_rec_unet_forward.5} parent=11 // pred_check_branch
        %237 = sbr.rel (%p235) target = $region36
      $region35: #{mtan_rec_unet_forward.5} parent=11 // pred_region
        _
      $region36: #{mtan_rec_unet_forward.5} parent=11 // pred_fallthru
        _
    $region12: #{mtan_rec_unet_forward.5} parent=5 // pred_fallthru
      _
    %p238 = scmp.lt.s32.totalorder %s13, 2
    // Predicated region
    $region37: #{mtan_rec_unet_forward.5} parent=5 // pred_check
      %p239 = pneg %p238
    $region38: #{mtan_rec_unet_forward.5} parent=5 // pred_check_branch
      %241 = sbr.rel (%p239) target = $region40
    $region39: #{mtan_rec_unet_forward.5} parent=5 // pred_region
      // Predicated region
      $region41: #{mtan_rec_unet_forward.5} parent=39 // pred_check
        %p242 = pneg %p47
      $region42: #{mtan_rec_unet_forward.5} parent=39 // pred_check_branch
        %244 = sbr.rel (%p242) target = $region44
      $region43: #{mtan_rec_unet_forward.5} parent=39 // pred_region
        %p245 = scmp.lt.s32.totalorder %s20, 1
        %s246 = scalar_select %p245, %s20, 1
        %p247 = scmp.lt.s32.totalorder %s21, 0
        %s248 = scalar_select %p247, %s21, 0
        %s249 = smul.addr %s248, 2
        %s250 = smul.addr %s246, 2
        %s251 = sadd.s32 %s249, %s250
        %s252 = scalar_lea.vmem %s0, %s251
      $region44: #{mtan_rec_unet_forward.5} parent=39 // pred_fallthru
        _
    $region40: #{mtan_rec_unet_forward.5} parent=5 // pred_fallthru
      _
    %p253 = scmp.le.s32.totalorder 1, %s13
    %p254 = scmp.lt.s32.totalorder %s13, 3
    %p255 = pnand %p253, %p254
    %p256 = pneg %p255
    // Predicated region
    $region45: #{mtan_rec_unet_forward.5} parent=5 // pred_check
      _
    $region46: #{mtan_rec_unet_forward.5} parent=5 // pred_check_branch
      %258 = sbr.rel (%p255) target = $region48
    $region47: #{mtan_rec_unet_forward.5} parent=5 // pred_region
      %s259 = ssub.s32 %s13, 1
      %p260 = scmp.lt.s32.totalorder %s22, 1
      %s261 = scalar_select %p260, %s22, 1
      %p262 = scmp.lt.s32.totalorder %s23, 0
      %s263 = scalar_select %p262, %s23, 0
      %s264 = smul.addr %s263, 2
      %s265 = smul.addr %s261, 2
      %s266 = sadd.s32 %s264, %s265
      %s267 = scalar_lea.vmem %s0, %s266
      %p268 = pneg %p53
      %p269 = pneg %p50
      %p270 = pneg %p74
      %p271 = pneg %p71
      %p272 = pneg %p95
      %p273 = pneg %p92
      %p274 = pneg %p116
      %p275 = pneg %p113
      %p276 = pneg %p137
      %p277 = pneg %p134
      %p278 = pneg %p158
      %p279 = pneg %p155
      %p280 = pneg %p179
      %p281 = pneg %p176
      %p282 = pneg %p205
      %p283 = pneg %p202
      %p284 = scmp.lt.s32.totalorder %s22, 1
      %s285 = scalar_select %p284, %s22, 1
      %s286 = scalar_lea.vmem %s7, %s285
      %p287 = scmp.lt.s32.totalorder %s22, 1
      %s288 = scalar_select %p287, %s22, 1
      %p289 = scmp.lt.s32.totalorder %s23, 0
      %s290 = scalar_select %p289, %s23, 0
      %s291 = smul.addr %s290, 2
      %s292 = smul.addr %s288, 2
      %s293 = sadd.s32 %s291, %s292
      %s294 = scalar_lea.vmem %s0, %s293
      %p295 = scmp.lt.s32.totalorder %s22, 1
      %s296 = scalar_select %p295, %s22, 1
      %s297 = scalar_lea.vmem %s7, %s296
      %p298 = scmp.eq.s32.totalorder %s23, 0
      // Predicated region
      $region49: #{mtan_rec_unet_forward.5} parent=47 // pred_check
        %p299 = pneg %p298
      $region50: #{mtan_rec_unet_forward.5} parent=47 // pred_check_branch
        %301 = sbr.rel (%p299) target = $region52
      $region51: #{mtan_rec_unet_forward.5} parent=47 // pred_region
        %v302 = vlaneseq
        %vm303 = vcmp.ge.s32.totalorder %v302, 0
        %vm304 = vcmp.lt.s32.totalorder %v302, 256
        %vm305 = vmand %vm303, %vm304
        %306 = vst.msk [vmem:[#allocation2] sm:$0x3] %vm305, 0.0
      $region52: #{mtan_rec_unet_forward.5} parent=47 // pred_fallthru
        _
      %v307 = vld [vmem:[%s294] sm:$0x3]
      %v308 = vld [vmem:[%s1] sm:$0xff]
      %v309 = vld [vmem:[%s1 + $0x8] sm:$0xff]
      %v310 = vld [vmem:[%s1 + $0x10] sm:$0xff]
      %v311 = vld [vmem:[%s1 + $0x18] sm:$0xff]
      %v312 = vld [vmem:[%s1 + $0x20] sm:$0xff]
      %v313 = vld [vmem:[%s1 + $0x28] sm:$0xff]
      %v314 = vld [vmem:[%s1 + $0x30] sm:$0xff]
      %v315 = vld [vmem:[%s1 + $0x38] sm:$0xff]
      %v316 = vld [vmem:[%s1 + $0x40] sm:$0xff]
      %v317 = vld [vmem:[%s1 + $0x48] sm:$0xff]
      %v318 = vld [vmem:[%s1 + $0x50] sm:$0xff]
      %v319 = vld [vmem:[%s1 + $0x58] sm:$0xff]
      %v320 = vld [vmem:[%s1 + $0x60] sm:$0xff]
      %v321 = vld [vmem:[%s1 + $0x68] sm:$0xff]
      %v322 = vld [vmem:[%s1 + $0x70] sm:$0xff]
      %v323 = vld [vmem:[%s1 + $0x78] sm:$0xff]
      %v324 = vld [vmem:[%s1 + $0x80] sm:$0xff]
      %v325 = vld [vmem:[%s1 + $0x88] sm:$0xff]
      %v326 = vld [vmem:[%s1 + $0x90] sm:$0xff]
      %v327 = vld [vmem:[%s1 + $0x98] sm:$0xff]
      %v328 = vld [vmem:[%s1 + $0xa0] sm:$0xff]
      %v329 = vld [vmem:[%s1 + $0xa8] sm:$0xff]
      %v330 = vld [vmem:[%s1 + $0xb0] sm:$0xff]
      %v331 = vld [vmem:[%s1 + $0xb8] sm:$0xff]
      %v332 = vld [vmem:[%s1 + $0xc0] sm:$0xff]
      %v333 = vld [vmem:[%s1 + $0xc8] sm:$0xff]
      %v334 = vld [vmem:[%s1 + $0xd0] sm:$0xff]
      %v335 = vld [vmem:[%s1 + $0xd8] sm:$0xff]
      %v336 = vld [vmem:[%s1 + $0xe0] sm:$0xff]
      %v337 = vld [vmem:[%s1 + $0xe8] sm:$0xff]
      %v338 = vld [vmem:[%s1 + $0xf0] sm:$0xff]
      %v339 = vld [vmem:[%s1 + $0xf8] sm:$0xff]
      %v340 = vld [vmem:[%s3] ss:$2 sm:$0x3]
      %v342 = vlaneseq
      %v343 = vshrl.u32 %v342, 7
      %v344 = vsub.s32 0, %v343
      %v345 = vrot.slane %v340, %v344
      %v346 = vlaneseq
      %v347 = vshrl.u32 %v346, 7
      %v348 = vsub.s32 1, %v347
      %v349 = vrot.slane %v340, %v348
      %v354 = vunpack.c.l.s4 1966171168
      %v355 = vunpack.c.0.s8 %v354
      %v356 = vlaneseq
      %v357 = vshrl.u32 %v356, 7
      %v358 = vsub.s32 %v355, %v357
      %v359 = vrot.slane %v307, %v358
      %v360 = vcombine.high %v359, %v359
      %v362 = vunpack.c.l.s4 1966171168
      %v363 = vunpack.c.0.s8 %v362
      %v364 = vlaneseq
      %v365 = vshrl.u32 %v364, 7
      %v366 = vsub.s32 %v363, %v365
      %v367 = vrot.slane %v359, %v366
      %v369 = vunpack.c.l.s4 1966171168
      %v370 = vunpack.c.0.s8 %v369
      %v371 = vlaneseq
      %v372 = vshrl.u32 %v371, 7
      %v373 = vsub.s32 %v370, %v372
      %v374 = vrot.slane %v360, %v373
      %v409 = vunpack.c.l.b16 %v308
      %v410 = vunpack.c.h.b16 %v308
      %v411 = vunpack.c.l.b16 %v309
      %v412 = vunpack.c.h.b16 %v309
      %v413 = vunpack.c.l.b16 %v310
      %v414 = vunpack.c.h.b16 %v310
      %v415 = vunpack.c.l.b16 %v311
      %v416 = vunpack.c.h.b16 %v311
      %v417 = vunpack.c.l.b16 %v312
      %v418 = vunpack.c.h.b16 %v312
      %v419 = vunpack.c.l.b16 %v313
      %v420 = vunpack.c.h.b16 %v313
      %v421 = vunpack.c.l.b16 %v314
      %v422 = vunpack.c.h.b16 %v314
      %v423 = vunpack.c.l.b16 %v315
      %v424 = vunpack.c.h.b16 %v315
      %v425 = vunpack.c.l.b16 %v316
      %v426 = vunpack.c.h.b16 %v316
      %v427 = vunpack.c.l.b16 %v317
      %v428 = vunpack.c.h.b16 %v317
      %v429 = vunpack.c.l.b16 %v318
      %v430 = vunpack.c.h.b16 %v318
      %v431 = vunpack.c.l.b16 %v319
      %v432 = vunpack.c.h.b16 %v319
      %v433 = vunpack.c.l.b16 %v320
      %v434 = vunpack.c.h.b16 %v320
      %v435 = vunpack.c.l.b16 %v321
      %v436 = vunpack.c.h.b16 %v321
      %v437 = vunpack.c.l.b16 %v322
      %v438 = vunpack.c.h.b16 %v322
      %v439 = vunpack.c.l.b16 %v323
      %v440 = vunpack.c.h.b16 %v323
      %v441 = vunpack.c.l.b16 %v324
      %v442 = vunpack.c.h.b16 %v324
      %v443 = vunpack.c.l.b16 %v325
      %v444 = vunpack.c.h.b16 %v325
      %v445 = vunpack.c.l.b16 %v326
      %v446 = vunpack.c.h.b16 %v326
      %v447 = vunpack.c.l.b16 %v327
      %v448 = vunpack.c.h.b16 %v327
      %v449 = vunpack.c.l.b16 %v328
      %v450 = vunpack.c.h.b16 %v328
      %v451 = vunpack.c.l.b16 %v329
      %v452 = vunpack.c.h.b16 %v329
      %v453 = vunpack.c.l.b16 %v330
      %v454 = vunpack.c.h.b16 %v330
      %v455 = vunpack.c.l.b16 %v331
      %v456 = vunpack.c.h.b16 %v331
      %v457 = vunpack.c.l.b16 %v332
      %v458 = vunpack.c.h.b16 %v332
      %v459 = vunpack.c.l.b16 %v333
      %v460 = vunpack.c.h.b16 %v333
      %v461 = vunpack.c.l.b16 %v334
      %v462 = vunpack.c.h.b16 %v334
      %v463 = vunpack.c.l.b16 %v335
      %v464 = vunpack.c.h.b16 %v335
      %v465 = vunpack.c.l.b16 %v336
      %v466 = vunpack.c.h.b16 %v336
      %v467 = vunpack.c.l.b16 %v337
      %v468 = vunpack.c.h.b16 %v337
      %v469 = vunpack.c.l.b16 %v338
      %v470 = vunpack.c.h.b16 %v338
      %v471 = vunpack.c.l.b16 %v339
      %v472 = vunpack.c.h.b16 %v339
      %v473 = vpack.c.b16 %v411, %v409
      %v474 = vpack.c.b16 %v412, %v410
      %v475 = vpack.c.b16 %v415, %v413
      %v476 = vpack.c.b16 %v416, %v414
      %v477 = vpack.c.b16 %v419, %v417
      %v478 = vpack.c.b16 %v420, %v418
      %v479 = vpack.c.b16 %v423, %v421
      %v480 = vpack.c.b16 %v424, %v422
      %v481 = vpack.c.b16 %v427, %v425
      %v482 = vpack.c.b16 %v428, %v426
      %v483 = vpack.c.b16 %v431, %v429
      %v484 = vpack.c.b16 %v432, %v430
      %v485 = vpack.c.b16 %v435, %v433
      %v486 = vpack.c.b16 %v436, %v434
      %v487 = vpack.c.b16 %v439, %v437
      %v488 = vpack.c.b16 %v440, %v438
      %v489 = vpack.c.b16 %v443, %v441
      %v490 = vpack.c.b16 %v444, %v442
      %v491 = vpack.c.b16 %v447, %v445
      %v492 = vpack.c.b16 %v448, %v446
      %v493 = vpack.c.b16 %v451, %v449
      %v494 = vpack.c.b16 %v452, %v450
      %v495 = vpack.c.b16 %v455, %v453
      %v496 = vpack.c.b16 %v456, %v454
      %v497 = vpack.c.b16 %v459, %v457
      %v498 = vpack.c.b16 %v460, %v458
      %v499 = vpack.c.b16 %v463, %v461
      %v500 = vpack.c.b16 %v464, %v462
      %v501 = vpack.c.b16 %v467, %v465
      %v502 = vpack.c.b16 %v468, %v466
      %v503 = vpack.c.b16 %v471, %v469
      %v504 = vpack.c.b16 %v472, %v470
      %537 = vmatprep.subr.bf16.mxu0 %v488
      %538 = vmatpush1.bf16.msra.mxu0 %v487
      %539 = vmatprep.subr.bf16.mxu0 %v486
      %540 = vmatpush1.bf16.msra.mxu0 %v485
      %541 = vmatprep.subr.bf16.mxu0 %v484
      %542 = vmatpush1.bf16.msra.mxu0 %v483
      %543 = vmatprep.subr.bf16.mxu0 %v482
      %544 = vmatpush1.bf16.msra.mxu0 %v481
      %545 = vmatprep.subr.bf16.mxu0 %v480
      %546 = vmatpush1.bf16.msra.mxu0 %v479
      %547 = vmatprep.subr.bf16.mxu0 %v478
      %548 = vmatpush1.bf16.msra.mxu0 %v477
      %549 = vmatprep.subr.bf16.mxu0 %v476
      %550 = vmatpush1.bf16.msra.mxu0 %v475
      %551 = vmatprep.subr.bf16.mxu0 %v474
      %552 = vmatpush1.bf16.msra.mxu0 %v473
      %553 = vmatprep.subr.bf16.mxu0 %v504
      %554 = vmatpush2.bf16.msra.mxu0 %v503
      %555 = vmatprep.subr.bf16.mxu0 %v502
      %556 = vmatpush2.bf16.msra.mxu0 %v501
      %557 = vmatprep.subr.bf16.mxu0 %v500
      %558 = vmatpush2.bf16.msra.mxu0 %v499
      %559 = vmatprep.subr.bf16.mxu0 %v498
      %560 = vmatpush2.bf16.msra.mxu0 %v497
      %561 = vmatprep.subr.bf16.mxu0 %v496
      %562 = vmatpush2.bf16.msra.mxu0 %v495
      %563 = vmatprep.subr.bf16.mxu0 %v494
      %564 = vmatpush2.bf16.msra.mxu0 %v493
      %565 = vmatprep.subr.bf16.mxu0 %v492
      %566 = vmatpush2.bf16.msra.mxu0 %v491
      %567 = vmatprep.subr.bf16.mxu0 %v490
      %568 = vmatpush2.bf16.msra.mxu0 %v489
      %569 = vmatprep.mubr.bf16.mxu0 %v374
      %570 = vmatmul.mubr.bf16.gmra.mxu0 %v367
      %v571 = vpop.f32.mrf.mxu0
      %v572 = vadd.f32 %v345, %v571
      %v573 = vpop.f32.mrf.mxu0
      %v574 = vadd.f32 %v349, %v573
      %v575 = vpop.f32.mrf.mxu0
      %v576 = vpop.f32.mrf.mxu0
      %577 = vdwg.mxu0
      %v578 = vmax.f32 %v572, 0.0
      %v579 = vmax.f32 %v574, 0.0
      %v580 = vpack.c.bf16 %v578, %v578
      %v581 = vpack.c.bf16 %v579, %v579
      %v582 = vld [vmem:[%s2] sm:$0xff]
      %v583 = vld [vmem:[%s2 + $0x8] sm:$0xff]
      %v584 = vld [vmem:[%s2 + $0x10] sm:$0xff]
      %v585 = vld [vmem:[%s2 + $0x18] sm:$0xff]
      %v586 = vld [vmem:[%s2 + $0x20] sm:$0xff]
      %v587 = vld [vmem:[%s2 + $0x28] sm:$0xff]
      %v588 = vld [vmem:[%s2 + $0x30] sm:$0xff]
      %v589 = vld [vmem:[%s2 + $0x38] sm:$0xff]
      %v590 = vld [vmem:[%s2 + $0x40] sm:$0xff]
      %v591 = vld [vmem:[%s2 + $0x48] sm:$0xff]
      %v592 = vld [vmem:[%s2 + $0x50] sm:$0xff]
      %v593 = vld [vmem:[%s2 + $0x58] sm:$0xff]
      %v594 = vld [vmem:[%s2 + $0x60] sm:$0xff]
      %v595 = vld [vmem:[%s2 + $0x68] sm:$0xff]
      %v596 = vld [vmem:[%s2 + $0x70] sm:$0xff]
      %v597 = vld [vmem:[%s2 + $0x78] sm:$0xff]
      %v598 = vld [vmem:[%s2 + $0x80] sm:$0xff]
      %v599 = vld [vmem:[%s2 + $0x88] sm:$0xff]
      %v600 = vld [vmem:[%s2 + $0x90] sm:$0xff]
      %v601 = vld [vmem:[%s2 + $0x98] sm:$0xff]
      %v602 = vld [vmem:[%s2 + $0xa0] sm:$0xff]
      %v603 = vld [vmem:[%s2 + $0xa8] sm:$0xff]
      %v604 = vld [vmem:[%s2 + $0xb0] sm:$0xff]
      %v605 = vld [vmem:[%s2 + $0xb8] sm:$0xff]
      %v606 = vld [vmem:[%s2 + $0xc0] sm:$0xff]
      %v607 = vld [vmem:[%s2 + $0xc8] sm:$0xff]
      %v608 = vld [vmem:[%s2 + $0xd0] sm:$0xff]
      %v609 = vld [vmem:[%s2 + $0xd8] sm:$0xff]
      %v610 = vld [vmem:[%s2 + $0xe0] sm:$0xff]
      %v611 = vld [vmem:[%s2 + $0xe8] sm:$0xff]
      %v612 = vld [vmem:[%s2 + $0xf0] sm:$0xff]
      %v613 = vld [vmem:[%s2 + $0xf8] sm:$0xff]
      %s614 = scalar_lea.vmem %s3, 1
      %v615 = vld [vmem:[%s614] ss:$2 sm:$0x3]
      %v617 = vlaneseq
      %v618 = vshrl.u32 %v617, 7
      %v619 = vsub.s32 0, %v618
      %v620 = vrot.slane %v615, %v619
      %v621 = vlaneseq
      %v622 = vshrl.u32 %v621, 7
      %v623 = vsub.s32 1, %v622
      %v624 = vrot.slane %v615, %v623
      %v659 = vunpack.c.l.b16 %v582
      %v660 = vunpack.c.h.b16 %v582
      %v661 = vunpack.c.l.b16 %v583
      %v662 = vunpack.c.h.b16 %v583
      %v663 = vunpack.c.l.b16 %v584
      %v664 = vunpack.c.h.b16 %v584
      %v665 = vunpack.c.l.b16 %v585
      %v666 = vunpack.c.h.b16 %v585
      %v667 = vunpack.c.l.b16 %v586
      %v668 = vunpack.c.h.b16 %v586
      %v669 = vunpack.c.l.b16 %v587
      %v670 = vunpack.c.h.b16 %v587
      %v671 = vunpack.c.l.b16 %v588
      %v672 = vunpack.c.h.b16 %v588
      %v673 = vunpack.c.l.b16 %v589
      %v674 = vunpack.c.h.b16 %v589
      %v675 = vunpack.c.l.b16 %v590
      %v676 = vunpack.c.h.b16 %v590
      %v677 = vunpack.c.l.b16 %v591
      %v678 = vunpack.c.h.b16 %v591
      %v679 = vunpack.c.l.b16 %v592
      %v680 = vunpack.c.h.b16 %v592
      %v681 = vunpack.c.l.b16 %v593
      %v682 = vunpack.c.h.b16 %v593
      %v683 = vunpack.c.l.b16 %v594
      %v684 = vunpack.c.h.b16 %v594
      %v685 = vunpack.c.l.b16 %v595
      %v686 = vunpack.c.h.b16 %v595
      %v687 = vunpack.c.l.b16 %v596
      %v688 = vunpack.c.h.b16 %v596
      %v689 = vunpack.c.l.b16 %v597
      %v690 = vunpack.c.h.b16 %v597
      %v691 = vunpack.c.l.b16 %v598
      %v692 = vunpack.c.h.b16 %v598
      %v693 = vunpack.c.l.b16 %v599
      %v694 = vunpack.c.h.b16 %v599
      %v695 = vunpack.c.l.b16 %v600
      %v696 = vunpack.c.h.b16 %v600
      %v697 = vunpack.c.l.b16 %v601
      %v698 = vunpack.c.h.b16 %v601
      %v699 = vunpack.c.l.b16 %v602
      %v700 = vunpack.c.h.b16 %v602
      %v701 = vunpack.c.l.b16 %v603
      %v702 = vunpack.c.h.b16 %v603
      %v703 = vunpack.c.l.b16 %v604
      %v704 = vunpack.c.h.b16 %v604
      %v705 = vunpack.c.l.b16 %v605
      %v706 = vunpack.c.h.b16 %v605
      %v707 = vunpack.c.l.b16 %v606
      %v708 = vunpack.c.h.b16 %v606
      %v709 = vunpack.c.l.b16 %v607
      %v710 = vunpack.c.h.b16 %v607
      %v711 = vunpack.c.l.b16 %v608
      %v712 = vunpack.c.h.b16 %v608
      %v713 = vunpack.c.l.b16 %v609
      %v714 = vunpack.c.h.b16 %v609
      %v715 = vunpack.c.l.b16 %v610
      %v716 = vunpack.c.h.b16 %v610
      %v717 = vunpack.c.l.b16 %v611
      %v718 = vunpack.c.h.b16 %v611
      %v719 = vunpack.c.l.b16 %v612
      %v720 = vunpack.c.h.b16 %v612
      %v721 = vunpack.c.l.b16 %v613
      %v722 = vunpack.c.h.b16 %v613
      %v723 = vpack.c.b16 %v661, %v659
      %v724 = vpack.c.b16 %v662, %v660
      %v725 = vpack.c.b16 %v665, %v663
      %v726 = vpack.c.b16 %v666, %v664
      %v727 = vpack.c.b16 %v669, %v667
      %v728 = vpack.c.b16 %v670, %v668
      %v729 = vpack.c.b16 %v673, %v671
      %v730 = vpack.c.b16 %v674, %v672
      %v731 = vpack.c.b16 %v677, %v675
      %v732 = vpack.c.b16 %v678, %v676
      %v733 = vpack.c.b16 %v681, %v679
      %v734 = vpack.c.b16 %v682, %v680
      %v735 = vpack.c.b16 %v685, %v683
      %v736 = vpack.c.b16 %v686, %v684
      %v737 = vpack.c.b16 %v689, %v687
      %v738 = vpack.c.b16 %v690, %v688
      %v739 = vpack.c.b16 %v693, %v691
      %v740 = vpack.c.b16 %v694, %v692
      %v741 = vpack.c.b16 %v697, %v695
      %v742 = vpack.c.b16 %v698, %v696
      %v743 = vpack.c.b16 %v701, %v699
      %v744 = vpack.c.b16 %v702, %v700
      %v745 = vpack.c.b16 %v705, %v703
      %v746 = vpack.c.b16 %v706, %v704
      %v747 = vpack.c.b16 %v709, %v707
      %v748 = vpack.c.b16 %v710, %v708
      %v749 = vpack.c.b16 %v713, %v711
      %v750 = vpack.c.b16 %v714, %v712
      %v751 = vpack.c.b16 %v717, %v715
      %v752 = vpack.c.b16 %v718, %v716
      %v753 = vpack.c.b16 %v721, %v719
      %v754 = vpack.c.b16 %v722, %v720
      %787 = vmatprep.subr.bf16.mxu0 %v738
      %788 = vmatpush1.bf16.msra.mxu0 %v737
      %789 = vmatprep.subr.bf16.mxu0 %v736
      %790 = vmatpush1.bf16.msra.mxu0 %v735
      %791 = vmatprep.subr.bf16.mxu0 %v734
      %792 = vmatpush1.bf16.msra.mxu0 %v733
      %793 = vmatprep.subr.bf16.mxu0 %v732
      %794 = vmatpush1.bf16.msra.mxu0 %v731
      %795 = vmatprep.subr.bf16.mxu0 %v730
      %796 = vmatpush1.bf16.msra.mxu0 %v729
      %797 = vmatprep.subr.bf16.mxu0 %v728
      %798 = vmatpush1.bf16.msra.mxu0 %v727
      %799 = vmatprep.subr.bf16.mxu0 %v726
      %800 = vmatpush1.bf16.msra.mxu0 %v725
      %801 = vmatprep.subr.bf16.mxu0 %v724
      %802 = vmatpush1.bf16.msra.mxu0 %v723
      %803 = vmatprep.subr.bf16.mxu0 %v754
      %804 = vmatpush2.bf16.msra.mxu0 %v753
      %805 = vmatprep.subr.bf16.mxu0 %v752
      %806 = vmatpush2.bf16.msra.mxu0 %v751
      %807 = vmatprep.subr.bf16.mxu0 %v750
      %808 = vmatpush2.bf16.msra.mxu0 %v749
      %809 = vmatprep.subr.bf16.mxu0 %v748
      %810 = vmatpush2.bf16.msra.mxu0 %v747
      %811 = vmatprep.subr.bf16.mxu0 %v746
      %812 = vmatpush2.bf16.msra.mxu0 %v745
      %813 = vmatprep.subr.bf16.mxu0 %v744
      %814 = vmatpush2.bf16.msra.mxu0 %v743
      %815 = vmatprep.subr.bf16.mxu0 %v742
      %816 = vmatpush2.bf16.msra.mxu0 %v741
      %817 = vmatprep.subr.bf16.mxu0 %v740
      %818 = vmatpush2.bf16.msra.mxu0 %v739
      %819 = vmatprep.mubr.bf16.mxu0 %v581
      %820 = vmatmul.mubr.bf16.gmra.mxu0 %v580
      %v821 = vpop.f32.mrf.mxu0
      %v822 = vadd.f32 %v620, %v821
      %v823 = vpop.f32.mrf.mxu0
      %v824 = vadd.f32 %v624, %v823
      %v825 = vpop.f32.mrf.mxu0
      %v826 = vpop.f32.mrf.mxu0
      %827 = vdwg.mxu0
      %v828 = vsub.f32 0.0, %v822
      %v829 = vsub.f32 0.0, %v824
      %v830 = vmul.f32 %v828, 1.442695
      %v831 = vpow.pop %v830
      %v832 = vmul.f32 %v829, 1.442695
      %v833 = vpow.pop %v832
      %v834 = vadd.f32 %v831, 1.0
      %v835 = vadd.f32 %v833, 1.0
      %v836 = vrcp.pop %v834
      %v837 = vrcp.pop %v835
      %v838 = vunpack.c.l.bf16 %v307
      %v841 = vunpack.c.l.s4 1983009808
      %v842 = vunpack.c.0.s8 %v841
      %v843 = vlaneseq
      %v844 = vshrl.u32 %v843, 7
      %v845 = vsub.s32 %v842, %v844
      %v846 = vrot.slane %v838, %v845
      %v847 = vcombine.high %v846, %v846
      %v850 = vmul.f32 %v836, %v846
      %v851 = vmul.f32 %v837, %v847
      %v852 = vld [vmem:[#allocation2] sm:$0x3]
      %vm853 = vcmask 1041408
      %v854 = vsel %vm853, %v850, 0.0
      %v855 = vrot.slane %v854, 4
      %v856 = vadd.f32 %v854, %v855
      %v857 = vrot.slane %v856, 2
      %v858 = vadd.f32 %v856, %v857
      %v859 = vrot.slane %v858, 1
      %v860 = vadd.f32 %v858, %v859
      %v861 = vsel %vm853, %v851, 0.0
      %v862 = vrot.slane %v861, 4
      %v863 = vadd.f32 %v861, %v862
      %v864 = vrot.slane %v863, 2
      %v865 = vadd.f32 %v863, %v864
      %v866 = vrot.slane %v865, 1
      %v867 = vadd.f32 %v865, %v866
      %v870 = vcombine.low %v860, %v867
      %v872 = vunpack.c.l.s4 1966171168
      %v873 = vunpack.c.0.s8 %v872
      %v874 = vlaneseq
      %v875 = vshrl.u32 %v874, 7
      %v876 = vsub.s32 %v873, %v875
      %v877 = vrot.slane %v870, %v876
      %v879 = vunpack.c.l.s4 1966171168
      %v880 = vunpack.c.0.s8 %v879
      %v881 = vlaneseq
      %v882 = vshrl.u32 %v881, 7
      %v883 = vsub.s32 %v880, %v882
      %v884 = vrot.slane %v877, %v883
      %v886 = vadd.f32 %v852, %v884
      %v887 = vlaneseq
      %vm888 = vcmp.ge.s32.totalorder %v887, 0
      %vm889 = vcmp.lt.s32.totalorder %v887, 256
      %vm890 = vmand %vm888, %vm889
      %891 = vst.msk [vmem:[#allocation2] sm:$0x3] %vm890, %v886
      // Predicated region
      $region53: #{mtan_rec_unet_forward.5} parent=47 // pred_check
        %p892 = pneg %p298
      $region54: #{mtan_rec_unet_forward.5} parent=47 // pred_check_branch
        %894 = sbr.rel (%p892) target = $region56
      $region55: #{mtan_rec_unet_forward.5} parent=47 // pred_region
        %v895 = vld [vmem:[#allocation2] sm:$0x3]
        %v896 = vld [vmem:[%s4] sm:$0xff]
        %v897 = vld [vmem:[%s4 + $0x8] sm:$0xff]
        %v898 = vld [vmem:[%s4 + $0x10] sm:$0xff]
        %v899 = vld [vmem:[%s4 + $0x18] sm:$0xff]
        %v900 = vld [vmem:[%s4 + $0x20] sm:$0xff]
        %v901 = vld [vmem:[%s4 + $0x28] sm:$0xff]
        %v902 = vld [vmem:[%s4 + $0x30] sm:$0xff]
        %v903 = vld [vmem:[%s4 + $0x38] sm:$0xff]
        %v904 = vld [vmem:[%s4 + $0x40] sm:$0xff]
        %v905 = vld [vmem:[%s4 + $0x48] sm:$0xff]
        %v906 = vld [vmem:[%s4 + $0x50] sm:$0xff]
        %v907 = vld [vmem:[%s4 + $0x58] sm:$0xff]
        %v908 = vld [vmem:[%s4 + $0x60] sm:$0xff]
        %v909 = vld [vmem:[%s4 + $0x68] sm:$0xff]
        %v910 = vld [vmem:[%s4 + $0x70] sm:$0xff]
        %v911 = vld [vmem:[%s4 + $0x78] sm:$0xff]
        %v912 = vld [vmem:[%s4 + $0x80] sm:$0xff]
        %v913 = vld [vmem:[%s4 + $0x88] sm:$0xff]
        %v914 = vld [vmem:[%s4 + $0x90] sm:$0xff]
        %v915 = vld [vmem:[%s4 + $0x98] sm:$0xff]
        %v916 = vld [vmem:[%s4 + $0xa0] sm:$0xff]
        %v917 = vld [vmem:[%s4 + $0xa8] sm:$0xff]
        %v918 = vld [vmem:[%s4 + $0xb0] sm:$0xff]
        %v919 = vld [vmem:[%s4 + $0xb8] sm:$0xff]
        %v920 = vld [vmem:[%s4 + $0xc0] sm:$0xff]
        %v921 = vld [vmem:[%s4 + $0xc8] sm:$0xff]
        %v922 = vld [vmem:[%s4 + $0xd0] sm:$0xff]
        %v923 = vld [vmem:[%s4 + $0xd8] sm:$0xff]
        %v924 = vld [vmem:[%s4 + $0xe0] sm:$0xff]
        %v925 = vld [vmem:[%s4 + $0xe8] sm:$0xff]
        %v926 = vld [vmem:[%s4 + $0xf0] sm:$0xff]
        %v927 = vld [vmem:[%s4 + $0xf8] sm:$0xff]
        %v928 = vld [vmem:[%s6] sm:$0x1]
        %v930 = vlaneseq
        %v931 = vshrl.u32 %v930, 7
        %v932 = vsub.s32 0, %v931
        %v933 = vrot.slane %v895, %v932
        %v934 = vlaneseq
        %v935 = vshrl.u32 %v934, 7
        %v936 = vsub.s32 1, %v935
        %v937 = vrot.slane %v895, %v936
        %940 = vmatprep.subr.mxu0 0.0
        %941 = vmatpush1.msra.mxu0 %v911
        %942 = vmatprep.subr.mxu0 0.0
        %943 = vmatpush1.msra.mxu0 %v910
        %944 = vmatprep.subr.mxu0 0.0
        %945 = vmatpush1.msra.mxu0 %v909
        %946 = vmatprep.subr.mxu0 0.0
        %947 = vmatpush1.msra.mxu0 %v908
        %948 = vmatprep.subr.mxu0 0.0
        %949 = vmatpush1.msra.mxu0 %v907
        %950 = vmatprep.subr.mxu0 0.0
        %951 = vmatpush1.msra.mxu0 %v906
        %952 = vmatprep.subr.mxu0 0.0
        %953 = vmatpush1.msra.mxu0 %v905
        %954 = vmatprep.subr.mxu0 0.0
        %955 = vmatpush1.msra.mxu0 %v904
        %956 = vmatprep.subr.mxu0 0.0
        %957 = vmatpush1.msra.mxu0 %v903
        %958 = vmatprep.subr.mxu0 0.0
        %959 = vmatpush1.msra.mxu0 %v902
        %960 = vmatprep.subr.mxu0 0.0
        %961 = vmatpush1.msra.mxu0 %v901
        %962 = vmatprep.subr.mxu0 0.0
        %963 = vmatpush1.msra.mxu0 %v900
        %964 = vmatprep.subr.mxu0 0.0
        %965 = vmatpush1.msra.mxu0 %v899
        %966 = vmatprep.subr.mxu0 0.0
        %967 = vmatpush1.msra.mxu0 %v898
        %968 = vmatprep.subr.mxu0 0.0
        %969 = vmatpush1.msra.mxu0 %v897
        %970 = vmatprep.subr.mxu0 0.0
        %971 = vmatpush1.msra.mxu0 %v896
        %972 = vmatprep.subr.mxu0 0.0
        %973 = vmatpush2.msra.mxu0 %v927
        %974 = vmatprep.subr.mxu0 0.0
        %975 = vmatpush2.msra.mxu0 %v926
        %976 = vmatprep.subr.mxu0 0.0
        %977 = vmatpush2.msra.mxu0 %v925
        %978 = vmatprep.subr.mxu0 0.0
        %979 = vmatpush2.msra.mxu0 %v924
        %980 = vmatprep.subr.mxu0 0.0
        %981 = vmatpush2.msra.mxu0 %v923
        %982 = vmatprep.subr.mxu0 0.0
        %983 = vmatpush2.msra.mxu0 %v922
        %984 = vmatprep.subr.mxu0 0.0
        %985 = vmatpush2.msra.mxu0 %v921
        %986 = vmatprep.subr.mxu0 0.0
        %987 = vmatpush2.msra.mxu0 %v920
        %988 = vmatprep.subr.mxu0 0.0
        %989 = vmatpush2.msra.mxu0 %v919
        %990 = vmatprep.subr.mxu0 0.0
        %991 = vmatpush2.msra.mxu0 %v918
        %992 = vmatprep.subr.mxu0 0.0
        %993 = vmatpush2.msra.mxu0 %v917
        %994 = vmatprep.subr.mxu0 0.0
        %995 = vmatpush2.msra.mxu0 %v916
        %996 = vmatprep.subr.mxu0 0.0
        %997 = vmatpush2.msra.mxu0 %v915
        %998 = vmatprep.subr.mxu0 0.0
        %999 = vmatpush2.msra.mxu0 %v914
        %1000 = vmatprep.subr.mxu0 0.0
        %1001 = vmatpush2.msra.mxu0 %v913
        %1002 = vmatprep.subr.mxu0 0.0
        %1003 = vmatpush2.msra.mxu0 %v912
        %1004 = vmatprep.mubr.f32.mxu0 %v937
        %1005 = vmatmul.mubr.f32.gmra.mxu0 %v933
        %v1006 = vpop.f32.mrf.mxu0
        %v1007 = vadd.f32 %v928, %v1006
        %v1008 = vpop.f32.mrf.mxu0
        %1009 = vdwg.mxu0
        %v1010 = vmax.f32 %v1007, 0.0
        %v1011 = vld [vmem:[%s5] sm:$0xff]
        %v1012 = vld [vmem:[%s5 + $0x8] sm:$0xff]
        %v1013 = vld [vmem:[%s5 + $0x10] sm:$0xff]
        %v1014 = vld [vmem:[%s5 + $0x18] sm:$0xff]
        %v1015 = vld [vmem:[%s6 + $0x1] sm:$0x1]
        %vm1016 = vcmask 261120
        %v1018 = vsel %vm1016, %v1010, 0
        %1020 = vmatprep.subr.mxu0 0.0
        %1021 = vmatpush1.msra.mxu0 0.0
        %1022 = vmatprep.subr.mxu0 0.0
        %1023 = vmatpush1.msra.mxu0 0.0
        %1024 = vmatprep.subr.mxu0 0.0
        %1025 = vmatpush1.msra.mxu0 0.0
        %1026 = vmatprep.subr.mxu0 0.0
        %1027 = vmatpush1.msra.mxu0 0.0
        %1028 = vmatprep.subr.mxu0 0.0
        %1029 = vmatpush1.msra.mxu0 0.0
        %1030 = vmatprep.subr.mxu0 0.0
        %1031 = vmatpush1.msra.mxu0 0.0
        %1032 = vmatprep.subr.mxu0 0.0
        %1033 = vmatpush1.msra.mxu0 0.0
        %1034 = vmatprep.subr.mxu0 0.0
        %1035 = vmatpush1.msra.mxu0 0.0
        %1036 = vmatprep.subr.mxu0 0.0
        %1037 = vmatpush1.msra.mxu0 0.0
        %1038 = vmatprep.subr.mxu0 0.0
        %1039 = vmatpush1.msra.mxu0 0.0
        %1040 = vmatprep.subr.mxu0 0.0
        %1041 = vmatpush1.msra.mxu0 0.0
        %1042 = vmatprep.subr.mxu0 0.0
        %1043 = vmatpush1.msra.mxu0 0.0
        %1044 = vmatprep.subr.mxu0 0.0
        %1045 = vmatpush1.msra.mxu0 %v1014
        %1046 = vmatprep.subr.mxu0 0.0
        %1047 = vmatpush1.msra.mxu0 %v1013
        %1048 = vmatprep.subr.mxu0 0.0
        %1049 = vmatpush1.msra.mxu0 %v1012
        %1050 = vmatprep.subr.mxu0 0.0
        %1051 = vmatpush1.msra.mxu0 %v1011
        %1052 = vmatprep.subr.mxu0 0.0
        %1053 = vmatpush2.msra.mxu0 0.0
        %1054 = vmatprep.subr.mxu0 0.0
        %1055 = vmatpush2.msra.mxu0 0.0
        %1056 = vmatprep.subr.mxu0 0.0
        %1057 = vmatpush2.msra.mxu0 0.0
        %1058 = vmatprep.subr.mxu0 0.0
        %1059 = vmatpush2.msra.mxu0 0.0
        %1060 = vmatprep.subr.mxu0 0.0
        %1061 = vmatpush2.msra.mxu0 0.0
        %1062 = vmatprep.subr.mxu0 0.0
        %1063 = vmatpush2.msra.mxu0 0.0
        %1064 = vmatprep.subr.mxu0 0.0
        %1065 = vmatpush2.msra.mxu0 0.0
        %1066 = vmatprep.subr.mxu0 0.0
        %1067 = vmatpush2.msra.mxu0 0.0
        %1068 = vmatprep.subr.mxu0 0.0
        %1069 = vmatpush2.msra.mxu0 0.0
        %1070 = vmatprep.subr.mxu0 0.0
        %1071 = vmatpush2.msra.mxu0 0.0
        %1072 = vmatprep.subr.mxu0 0.0
        %1073 = vmatpush2.msra.mxu0 0.0
        %1074 = vmatprep.subr.mxu0 0.0
        %1075 = vmatpush2.msra.mxu0 0.0
        %1076 = vmatprep.subr.mxu0 0.0
        %1077 = vmatpush2.msra.mxu0 0.0
        %1078 = vmatprep.subr.mxu0 0.0
        %1079 = vmatpush2.msra.mxu0 0.0
        %1080 = vmatprep.subr.mxu0 0.0
        %1081 = vmatpush2.msra.mxu0 0.0
        %1082 = vmatprep.subr.mxu0 0.0
        %1083 = vmatpush2.msra.mxu0 0.0
        %1084 = vmatprep.mubr.f32.mxu0 0.0
        %1085 = vmatmul.mubr.f32.gmra.mxu0 %v1018
        %v1086 = vpop.f32.mrf.mxu0
        %v1087 = vadd.f32 %v1015, %v1086
        %v1088 = vpop.f32.mrf.mxu0
        %1089 = vdwg.mxu0
        %vm1090 = vcmask 253952
        %1091 = vst.msk [vmem:[%s297] sm:$0x1] %vm1090, %v1087
      $region56: #{mtan_rec_unet_forward.5} parent=47 // pred_fallthru
        _
      %p1092 = scmp.lt.s32.totalorder %s22, 1
      %s1093 = scalar_select %p1092, %s22, 1
      %s1094 = scalar_lea.vmem %s7, %s1093
      // Predicated region
      $region57: #{mtan_rec_unet_forward.5} parent=47 // pred_check
        %p1095 = pneg %p202
      $region58: #{mtan_rec_unet_forward.5} parent=47 // pred_check_branch
        %1097 = sbr.rel (%p1095) target = $region60
      $region59: #{mtan_rec_unet_forward.5} parent=47 // pred_region
        _
      $region60: #{mtan_rec_unet_forward.5} parent=47 // pred_fallthru
        _
    $region48: #{mtan_rec_unet_forward.5} parent=5 // pred_fallthru
      _
    %p1098 = scmp.le.s32.totalorder 2, %s13
    // Predicated region
    $region61: #{mtan_rec_unet_forward.5} parent=5 // pred_check
      %p1099 = pneg %p1098
    $region62: #{mtan_rec_unet_forward.5} parent=5 // pred_check_branch
      %1101 = sbr.rel (%p1099) target = $region64
    $region63: #{mtan_rec_unet_forward.5} parent=5 // pred_region
      %s1102 = ssub.s32 %s13, 2
      // Predicated region
      $region65: #{mtan_rec_unet_forward.5} parent=63 // pred_check
        %p1103 = pneg %p208
      $region66: #{mtan_rec_unet_forward.5} parent=63 // pred_check_branch
        %1105 = sbr.rel (%p1103) target = $region68
      $region67: #{mtan_rec_unet_forward.5} parent=63 // pred_region
        %p1106 = scmp.lt.s32.totalorder %s24, 1
        %s1107 = scalar_select %p1106, %s24, 1
        %s1108 = scalar_lea.vmem %s7, %s1107
      $region68: #{mtan_rec_unet_forward.5} parent=63 // pred_fallthru
        _
    $region64: #{mtan_rec_unet_forward.5} parent=5 // pred_fallthru
      _
  $region6: #{mtan_rec_unet_forward.5} parent=0 // loop_footer
    %s17 = sadd.s32 1, %s13
  $region7: #{mtan_rec_unet_forward.5} parent=0 // loop_footer_branch
    %12 = sbr.rel target = $region3
  $region8: #{mtan_rec_unet_forward.5} parent=0 // loop_exit
    _

// kernel: mtan_rec_unet_forward.7
$region0: #{mtan_rec_unet_forward.7}
  #allocation0 [shape = 'u32[]', space=smem, size = 0x4, offset = 0x4, fixed_abs, tag = 'smem constant byte address 0x4 - core index']
  #allocation1 [shape = 'u32[144,128]{1,0:T(1,128)}', space=vmem, size = 0x12000, scoped, tag = 'internal scratch']
  #allocation2 [shape = 'f32[1,256]{1,0:T(1,128)}', space=vmem, size = 0x400, scoped, tag = 'scratch operand']
  %s0 = inlined_call_operand.vmem [shape: bf16[2,1,256], index: 0, kind: input, shape index: {}]
  %s1 = inlined_call_operand.vmem [shape: bf16[256,256], index: 1, kind: input, shape index: {}]
  %s2 = inlined_call_operand.vmem [shape: bf16[256,256], index: 2, kind: input, shape index: {}]
  %s3 = inlined_call_operand.vmem [shape: f32[2,256], index: 3, kind: input, shape index: {}]
  %s4 = inlined_call_operand.vmem [shape: f32[256,128], index: 4, kind: input, shape index: {}]
  %s5 = inlined_call_operand.vmem [shape: f32[128,128], index: 5, kind: input, shape index: {}]
  %s6 = inlined_call_operand.vmem [shape: f32[2,128], index: 6, kind: input, shape index: {}]
  %s7 = inlined_call_operand.vmem [shape: f32[2,1,128], index: 7, kind: output, shape index: {}]
  %s8 = sld [smem:[#allocation0]]
  $region69: #{mtan_rec_unet_forward.7} parent=0
    _
  %s10 = ssub.s32 1, %s8
  %s11 = scalar_select 0, %s10, %s8
  loop: start=0, step=1, limit=4
  $region2: #{mtan_rec_unet_forward.7} parent=0 // loop_pre_header
    _
  $region3: #{mtan_rec_unet_forward.7} parent=0 // loop_header
    %s13 = sphi 0, %s17
    %p14 = scmp.ge.s32.totalorder %s13, 4
    %s20 = sphi 0, %s32
    %s21 = sphi 0, %s28
    %s22 = sphi 0, %s20
    %s23 = sphi 0, %s21
    %s24 = sphi 0, %s22
    %s25 = sphi 0, %s23
    %s37 = sphi 0, %s39
    %s40 = sphi 0, %s37
    %s41 = sphi 0, %s40
    %s57 = sphi 0, %s41
    %s61 = sphi 0, %s61
    %s63 = sphi 0, %s61
    %s64 = sphi 0, %s63
    %s78 = sphi 0, %s64
    %s82 = sphi 0, %s82
    %s84 = sphi 0, %s82
    %s85 = sphi 0, %s84
    %s99 = sphi 0, %s85
    %s103 = sphi 0, %s103
    %s105 = sphi 0, %s103
    %s106 = sphi 0, %s105
    %s120 = sphi 0, %s106
    %s124 = sphi 0, %s124
    %s126 = sphi 0, %s124
    %s127 = sphi 0, %s126
    %s141 = sphi 0, %s127
    %s145 = sphi 0, %s145
    %s147 = sphi 0, %s145
    %s148 = sphi 0, %s147
    %s162 = sphi 0, %s148
    %s166 = sphi 0, %s166
    %s168 = sphi 0, %s166
    %s169 = sphi 0, %s168
    %s183 = sphi 0, %s169
    %s189 = sphi 0, %s191
    %s192 = sphi 0, %s189
    %s193 = sphi 0, %s192
    %s209 = sphi 0, %s193
  $region4: #{mtan_rec_unet_forward.7} parent=0 // loop_header_branch
    %16 = sbr.rel (%p14) target = $region8
  $region5: #{mtan_rec_unet_forward.7} parent=0 // loop_body
    %s18 = ssub.s32 %s13, 1
    %s19 = ssub.s32 %s13, 2
    %s26 = sadd.s32 1, %s21
    %p27 = scmp.ge.s32.totalorder %s26, 1
    %s28 = scalar_select %p27, 0, %s26
    %s29 = sadd.s32 1, %s20
    %s30 = scalar_select %p27, %s29, %s20
    %p31 = scmp.ge.s32.totalorder %s30, 2
    %s32 = scalar_select %p31, 0, %s30
    %s33 = ssub.s32 %s20, %s32
    %s34 = ssub.s32 %s21, %s28
    %s35 = sor.u32 %s33, %s34
    %p36 = scmp.eq.s32.totalorder %s35, 0
    %s38 = sadd.s32 %s37, 1
    %s39 = scalar_select %p36, %s37, %s38
    %p42 = pneg %p36
    %p43 = scmp.eq.s32.totalorder %s13, 1
    %p44 = por %p42, %p43
    %p45 = scmp.ne.s32.totalorder %s37, %s40
    %p46 = scmp.eq.s32.totalorder %s13, 0
    %p47 = por %p45, %p46
    %p48 = scmp.ne.s32.totalorder %s37, %s40
    %p49 = scmp.eq.s32.totalorder %s18, 1
    %p50 = por %p48, %p49
    %p51 = scmp.ne.s32.totalorder %s40, %s41
    %p52 = scmp.eq.s32.totalorder %s18, 0
    %p53 = por %p51, %p52
    %p54 = scmp.ne.s32.totalorder %s40, %s41
    %p55 = scmp.eq.s32.totalorder %s19, 1
    %p56 = por %p54, %p55
    %p58 = scmp.ne.s32.totalorder %s41, %s57
    %p59 = scmp.eq.s32.totalorder %s19, 0
    %p60 = por %p58, %p59
    %s62 = sadd.s32 %s61, 1
    %p65 = scmp.eq.s32.totalorder %s13, 1
    %p66 = scmp.ne.s32.totalorder %s61, %s63
    %p67 = scmp.eq.s32.totalorder %s13, 0
    %p68 = por %p66, %p67
    %p69 = scmp.ne.s32.totalorder %s61, %s63
    %p70 = scmp.eq.s32.totalorder %s18, 1
    %p71 = por %p69, %p70
    %p72 = scmp.ne.s32.totalorder %s63, %s64
    %p73 = scmp.eq.s32.totalorder %s18, 0
    %p74 = por %p72, %p73
    %p75 = scmp.ne.s32.totalorder %s63, %s64
    %p76 = scmp.eq.s32.totalorder %s19, 1
    %p77 = por %p75, %p76
    %p79 = scmp.ne.s32.totalorder %s64, %s78
    %p80 = scmp.eq.s32.totalorder %s19, 0
    %p81 = por %p79, %p80
    %s83 = sadd.s32 %s82, 1
    %p86 = scmp.eq.s32.totalorder %s13, 1
    %p87 = scmp.ne.s32.totalorder %s82, %s84
    %p88 = scmp.eq.s32.totalorder %s13, 0
    %p89 = por %p87, %p88
    %p90 = scmp.ne.s32.totalorder %s82, %s84
    %p91 = scmp.eq.s32.totalorder %s18, 1
    %p92 = por %p90, %p91
    %p93 = scmp.ne.s32.totalorder %s84, %s85
    %p94 = scmp.eq.s32.totalorder %s18, 0
    %p95 = por %p93, %p94
    %p96 = scmp.ne.s32.totalorder %s84, %s85
    %p97 = scmp.eq.s32.totalorder %s19, 1
    %p98 = por %p96, %p97
    %p100 = scmp.ne.s32.totalorder %s85, %s99
    %p101 = scmp.eq.s32.totalorder %s19, 0
    %p102 = por %p100, %p101
    %s104 = sadd.s32 %s103, 1
    %p107 = scmp.eq.s32.totalorder %s13, 1
    %p108 = scmp.ne.s32.totalorder %s103, %s105
    %p109 = scmp.eq.s32.totalorder %s13, 0
    %p110 = por %p108, %p109
    %p111 = scmp.ne.s32.totalorder %s103, %s105
    %p112 = scmp.eq.s32.totalorder %s18, 1
    %p113 = por %p111, %p112
    %p114 = scmp.ne.s32.totalorder %s105, %s106
    %p115 = scmp.eq.s32.totalorder %s18, 0
    %p116 = por %p114, %p115
    %p117 = scmp.ne.s32.totalorder %s105, %s106
    %p118 = scmp.eq.s32.totalorder %s19, 1
    %p119 = por %p117, %p118
    %p121 = scmp.ne.s32.totalorder %s106, %s120
    %p122 = scmp.eq.s32.totalorder %s19, 0
    %p123 = por %p121, %p122
    %s125 = sadd.s32 %s124, 1
    %p128 = scmp.eq.s32.totalorder %s13, 1
    %p129 = scmp.ne.s32.totalorder %s124, %s126
    %p130 = scmp.eq.s32.totalorder %s13, 0
    %p131 = por %p129, %p130
    %p132 = scmp.ne.s32.totalorder %s124, %s126
    %p133 = scmp.eq.s32.totalorder %s18, 1
    %p134 = por %p132, %p133
    %p135 = scmp.ne.s32.totalorder %s126, %s127
    %p136 = scmp.eq.s32.totalorder %s18, 0
    %p137 = por %p135, %p136
    %p138 = scmp.ne.s32.totalorder %s126, %s127
    %p139 = scmp.eq.s32.totalorder %s19, 1
    %p140 = por %p138, %p139
    %p142 = scmp.ne.s32.totalorder %s127, %s141
    %p143 = scmp.eq.s32.totalorder %s19, 0
    %p144 = por %p142, %p143
    %s146 = sadd.s32 %s145, 1
    %p149 = scmp.eq.s32.totalorder %s13, 1
    %p150 = scmp.ne.s32.totalorder %s145, %s147
    %p151 = scmp.eq.s32.totalorder %s13, 0
    %p152 = por %p150, %p151
    %p153 = scmp.ne.s32.totalorder %s145, %s147
    %p154 = scmp.eq.s32.totalorder %s18, 1
    %p155 = por %p153, %p154
    %p156 = scmp.ne.s32.totalorder %s147, %s148
    %p157 = scmp.eq.s32.totalorder %s18, 0
    %p158 = por %p156, %p157
    %p159 = scmp.ne.s32.totalorder %s147, %s148
    %p160 = scmp.eq.s32.totalorder %s19, 1
    %p161 = por %p159, %p160
    %p163 = scmp.ne.s32.totalorder %s148, %s162
    %p164 = scmp.eq.s32.totalorder %s19, 0
    %p165 = por %p163, %p164
    %s167 = sadd.s32 %s166, 1
    %p170 = scmp.eq.s32.totalorder %s13, 1
    %p171 = scmp.ne.s32.totalorder %s166, %s168
    %p172 = scmp.eq.s32.totalorder %s13, 0
    %p173 = por %p171, %p172
    %p174 = scmp.ne.s32.totalorder %s166, %s168
    %p175 = scmp.eq.s32.totalorder %s18, 1
    %p176 = por %p174, %p175
    %p177 = scmp.ne.s32.totalorder %s168, %s169
    %p178 = scmp.eq.s32.totalorder %s18, 0
    %p179 = por %p177, %p178
    %p180 = scmp.ne.s32.totalorder %s168, %s169
    %p181 = scmp.eq.s32.totalorder %s19, 1
    %p182 = por %p180, %p181
    %p184 = scmp.ne.s32.totalorder %s169, %s183
    %p185 = scmp.eq.s32.totalorder %s19, 0
    %p186 = por %p184, %p185
    %s187 = ssub.s32 %s20, %s32
    %p188 = scmp.eq.s32.totalorder %s187, 0
    %s190 = sadd.s32 %s189, 1
    %s191 = scalar_select %p188, %s189, %s190
    %p194 = pneg %p188
    %p195 = scmp.eq.s32.totalorder %s13, 1
    %p196 = por %p194, %p195
    %p197 = scmp.ne.s32.totalorder %s189, %s192
    %p198 = scmp.eq.s32.totalorder %s13, 0
    %p199 = por %p197, %p198
    %p200 = scmp.ne.s32.totalorder %s189, %s192
    %p201 = scmp.eq.s32.totalorder %s18, 1
    %p202 = por %p200, %p201
    %p203 = scmp.ne.s32.totalorder %s192, %s193
    %p204 = scmp.eq.s32.totalorder %s18, 0
    %p205 = por %p203, %p204
    %p206 = scmp.ne.s32.totalorder %s192, %s193
    %p207 = scmp.eq.s32.totalorder %s19, 1
    %p208 = por %p206, %p207
    %p210 = scmp.ne.s32.totalorder %s193, %s209
    %p211 = scmp.eq.s32.totalorder %s19, 0
    %p212 = por %p210, %p211
    %p213 = scmp.le.s32.totalorder 1, %s13
    %p214 = scmp.lt.s32.totalorder %s13, 3
    %p215 = pnand %p213, %p214
    %p216 = pneg %p215
    // Predicated region
    $region9: #{mtan_rec_unet_forward.7} parent=5 // pred_check
      _
    $region10: #{mtan_rec_unet_forward.7} parent=5 // pred_check_branch
      %218 = sbr.rel (%p215) target = $region12
    $region11: #{mtan_rec_unet_forward.7} parent=5 // pred_region
      %s219 = ssub.s32 %s13, 1
      // Predicated region
      $region13: #{mtan_rec_unet_forward.7} parent=11 // pred_check
        %p220 = pneg %p74
      $region14: #{mtan_rec_unet_forward.7} parent=11 // pred_check_branch
        %222 = sbr.rel (%p220) target = $region16
      $region15: #{mtan_rec_unet_forward.7} parent=11 // pred_region
        _
      $region16: #{mtan_rec_unet_forward.7} parent=11 // pred_fallthru
        _
      // Predicated region
      $region17: #{mtan_rec_unet_forward.7} parent=11 // pred_check
        %p223 = pneg %p95
      $region18: #{mtan_rec_unet_forward.7} parent=11 // pred_check_branch
        %225 = sbr.rel (%p223) target = $region20
      $region19: #{mtan_rec_unet_forward.7} parent=11 // pred_region
        _
      $region20: #{mtan_rec_unet_forward.7} parent=11 // pred_fallthru
        _
      // Predicated region
      $region21: #{mtan_rec_unet_forward.7} parent=11 // pred_check
        %p226 = pneg %p116
      $region22: #{mtan_rec_unet_forward.7} parent=11 // pred_check_branch
        %228 = sbr.rel (%p226) target = $region24
      $region23: #{mtan_rec_unet_forward.7} parent=11 // pred_region
        _
      $region24: #{mtan_rec_unet_forward.7} parent=11 // pred_fallthru
        _
      // Predicated region
      $region25: #{mtan_rec_unet_forward.7} parent=11 // pred_check
        %p229 = pneg %p137
      $region26: #{mtan_rec_unet_forward.7} parent=11 // pred_check_branch
        %231 = sbr.rel (%p229) target = $region28
      $region27: #{mtan_rec_unet_forward.7} parent=11 // pred_region
        _
      $region28: #{mtan_rec_unet_forward.7} parent=11 // pred_fallthru
        _
      // Predicated region
      $region29: #{mtan_rec_unet_forward.7} parent=11 // pred_check
        %p232 = pneg %p158
      $region30: #{mtan_rec_unet_forward.7} parent=11 // pred_check_branch
        %234 = sbr.rel (%p232) target = $region32
      $region31: #{mtan_rec_unet_forward.7} parent=11 // pred_region
        _
      $region32: #{mtan_rec_unet_forward.7} parent=11 // pred_fallthru
        _
      // Predicated region
      $region33: #{mtan_rec_unet_forward.7} parent=11 // pred_check
        %p235 = pneg %p179
      $region34: #{mtan_rec_unet_forward.7} parent=11 // pred_check_branch
        %237 = sbr.rel (%p235) target = $region36
      $region35: #{mtan_rec_unet_forward.7} parent=11 // pred_region
        _
      $region36: #{mtan_rec_unet_forward.7} parent=11 // pred_fallthru
        _
    $region12: #{mtan_rec_unet_forward.7} parent=5 // pred_fallthru
      _
    %p238 = scmp.lt.s32.totalorder %s13, 2
    // Predicated region
    $region37: #{mtan_rec_unet_forward.7} parent=5 // pred_check
      %p239 = pneg %p238
    $region38: #{mtan_rec_unet_forward.7} parent=5 // pred_check_branch
      %241 = sbr.rel (%p239) target = $region40
    $region39: #{mtan_rec_unet_forward.7} parent=5 // pred_region
      // Predicated region
      $region41: #{mtan_rec_unet_forward.7} parent=39 // pred_check
        %p242 = pneg %p47
      $region42: #{mtan_rec_unet_forward.7} parent=39 // pred_check_branch
        %244 = sbr.rel (%p242) target = $region44
      $region43: #{mtan_rec_unet_forward.7} parent=39 // pred_region
        %p245 = scmp.lt.s32.totalorder %s20, 1
        %s246 = scalar_select %p245, %s20, 1
        %p247 = scmp.lt.s32.totalorder %s21, 0
        %s248 = scalar_select %p247, %s21, 0
        %s249 = smul.addr %s248, 2
        %s250 = smul.addr %s246, 2
        %s251 = sadd.s32 %s249, %s250
        %s252 = scalar_lea.vmem %s0, %s251
      $region44: #{mtan_rec_unet_forward.7} parent=39 // pred_fallthru
        _
    $region40: #{mtan_rec_unet_forward.7} parent=5 // pred_fallthru
      _
    %p253 = scmp.le.s32.totalorder 1, %s13
    %p254 = scmp.lt.s32.totalorder %s13, 3
    %p255 = pnand %p253, %p254
    %p256 = pneg %p255
    // Predicated region
    $region45: #{mtan_rec_unet_forward.7} parent=5 // pred_check
      _
    $region46: #{mtan_rec_unet_forward.7} parent=5 // pred_check_branch
      %258 = sbr.rel (%p255) target = $region48
    $region47: #{mtan_rec_unet_forward.7} parent=5 // pred_region
      %s259 = ssub.s32 %s13, 1
      %p260 = scmp.lt.s32.totalorder %s22, 1
      %s261 = scalar_select %p260, %s22, 1
      %p262 = scmp.lt.s32.totalorder %s23, 0
      %s263 = scalar_select %p262, %s23, 0
      %s264 = smul.addr %s263, 2
      %s265 = smul.addr %s261, 2
      %s266 = sadd.s32 %s264, %s265
      %s267 = scalar_lea.vmem %s0, %s266
      %p268 = pneg %p53
      %p269 = pneg %p50
      %p270 = pneg %p74
      %p271 = pneg %p71
      %p272 = pneg %p95
      %p273 = pneg %p92
      %p274 = pneg %p116
      %p275 = pneg %p113
      %p276 = pneg %p137
      %p277 = pneg %p134
      %p278 = pneg %p158
      %p279 = pneg %p155
      %p280 = pneg %p179
      %p281 = pneg %p176
      %p282 = pneg %p205
      %p283 = pneg %p202
      %p284 = scmp.lt.s32.totalorder %s22, 1
      %s285 = scalar_select %p284, %s22, 1
      %s286 = scalar_lea.vmem %s7, %s285
      %p287 = scmp.lt.s32.totalorder %s22, 1
      %s288 = scalar_select %p287, %s22, 1
      %p289 = scmp.lt.s32.totalorder %s23, 0
      %s290 = scalar_select %p289, %s23, 0
      %s291 = smul.addr %s290, 2
      %s292 = smul.addr %s288, 2
      %s293 = sadd.s32 %s291, %s292
      %s294 = scalar_lea.vmem %s0, %s293
      %p295 = scmp.lt.s32.totalorder %s22, 1
      %s296 = scalar_select %p295, %s22, 1
      %s297 = scalar_lea.vmem %s7, %s296
      %p298 = scmp.eq.s32.totalorder %s23, 0
      // Predicated region
      $region49: #{mtan_rec_unet_forward.7} parent=47 // pred_check
        %p299 = pneg %p298
      $region50: #{mtan_rec_unet_forward.7} parent=47 // pred_check_branch
        %301 = sbr.rel (%p299) target = $region52
      $region51: #{mtan_rec_unet_forward.7} parent=47 // pred_region
        %v302 = vlaneseq
        %vm303 = vcmp.ge.s32.totalorder %v302, 0
        %vm304 = vcmp.lt.s32.totalorder %v302, 256
        %vm305 = vmand %vm303, %vm304
        %306 = vst.msk [vmem:[#allocation2] sm:$0x3] %vm305, 0.0
      $region52: #{mtan_rec_unet_forward.7} parent=47 // pred_fallthru
        _
      %v307 = vld [vmem:[%s294] sm:$0x3]
      %v308 = vld [vmem:[%s1] sm:$0xff]
      %v309 = vld [vmem:[%s1 + $0x8] sm:$0xff]
      %v310 = vld [vmem:[%s1 + $0x10] sm:$0xff]
      %v311 = vld [vmem:[%s1 + $0x18] sm:$0xff]
      %v312 = vld [vmem:[%s1 + $0x20] sm:$0xff]
      %v313 = vld [vmem:[%s1 + $0x28] sm:$0xff]
      %v314 = vld [vmem:[%s1 + $0x30] sm:$0xff]
      %v315 = vld [vmem:[%s1 + $0x38] sm:$0xff]
      %v316 = vld [vmem:[%s1 + $0x40] sm:$0xff]
      %v317 = vld [vmem:[%s1 + $0x48] sm:$0xff]
      %v318 = vld [vmem:[%s1 + $0x50] sm:$0xff]
      %v319 = vld [vmem:[%s1 + $0x58] sm:$0xff]
      %v320 = vld [vmem:[%s1 + $0x60] sm:$0xff]
      %v321 = vld [vmem:[%s1 + $0x68] sm:$0xff]
      %v322 = vld [vmem:[%s1 + $0x70] sm:$0xff]
      %v323 = vld [vmem:[%s1 + $0x78] sm:$0xff]
      %v324 = vld [vmem:[%s1 + $0x80] sm:$0xff]
      %v325 = vld [vmem:[%s1 + $0x88] sm:$0xff]
      %v326 = vld [vmem:[%s1 + $0x90] sm:$0xff]
      %v327 = vld [vmem:[%s1 + $0x98] sm:$0xff]
      %v328 = vld [vmem:[%s1 + $0xa0] sm:$0xff]
      %v329 = vld [vmem:[%s1 + $0xa8] sm:$0xff]
      %v330 = vld [vmem:[%s1 + $0xb0] sm:$0xff]
      %v331 = vld [vmem:[%s1 + $0xb8] sm:$0xff]
      %v332 = vld [vmem:[%s1 + $0xc0] sm:$0xff]
      %v333 = vld [vmem:[%s1 + $0xc8] sm:$0xff]
      %v334 = vld [vmem:[%s1 + $0xd0] sm:$0xff]
      %v335 = vld [vmem:[%s1 + $0xd8] sm:$0xff]
      %v336 = vld [vmem:[%s1 + $0xe0] sm:$0xff]
      %v337 = vld [vmem:[%s1 + $0xe8] sm:$0xff]
      %v338 = vld [vmem:[%s1 + $0xf0] sm:$0xff]
      %v339 = vld [vmem:[%s1 + $0xf8] sm:$0xff]
      %v340 = vld [vmem:[%s3] ss:$2 sm:$0x3]
      %v343 = vunpack.c.l.s4 1966171168
      %v344 = vunpack.c.0.s8 %v343
      %v345 = vlaneseq
      %v346 = vshrl.u32 %v345, 7
      %v347 = vsub.s32 %v344, %v346
      %v348 = vrot.slane %v307, %v347
      %v349 = vcombine.high %v348, %v348
      %v351 = vunpack.c.l.s4 1966171168
      %v352 = vunpack.c.0.s8 %v351
      %v353 = vlaneseq
      %v354 = vshrl.u32 %v353, 7
      %v355 = vsub.s32 %v352, %v354
      %v356 = vrot.slane %v348, %v355
      %v358 = vunpack.c.l.s4 1966171168
      %v359 = vunpack.c.0.s8 %v358
      %v360 = vlaneseq
      %v361 = vshrl.u32 %v360, 7
      %v362 = vsub.s32 %v359, %v361
      %v363 = vrot.slane %v349, %v362
      %v398 = vunpack.c.l.b16 %v308
      %v399 = vunpack.c.h.b16 %v308
      %v400 = vunpack.c.l.b16 %v309
      %v401 = vunpack.c.h.b16 %v309
      %v402 = vunpack.c.l.b16 %v310
      %v403 = vunpack.c.h.b16 %v310
      %v404 = vunpack.c.l.b16 %v311
      %v405 = vunpack.c.h.b16 %v311
      %v406 = vunpack.c.l.b16 %v312
      %v407 = vunpack.c.h.b16 %v312
      %v408 = vunpack.c.l.b16 %v313
      %v409 = vunpack.c.h.b16 %v313
      %v410 = vunpack.c.l.b16 %v314
      %v411 = vunpack.c.h.b16 %v314
      %v412 = vunpack.c.l.b16 %v315
      %v413 = vunpack.c.h.b16 %v315
      %v414 = vunpack.c.l.b16 %v316
      %v415 = vunpack.c.h.b16 %v316
      %v416 = vunpack.c.l.b16 %v317
      %v417 = vunpack.c.h.b16 %v317
      %v418 = vunpack.c.l.b16 %v318
      %v419 = vunpack.c.h.b16 %v318
      %v420 = vunpack.c.l.b16 %v319
      %v421 = vunpack.c.h.b16 %v319
      %v422 = vunpack.c.l.b16 %v320
      %v423 = vunpack.c.h.b16 %v320
      %v424 = vunpack.c.l.b16 %v321
      %v425 = vunpack.c.h.b16 %v321
      %v426 = vunpack.c.l.b16 %v322
      %v427 = vunpack.c.h.b16 %v322
      %v428 = vunpack.c.l.b16 %v323
      %v429 = vunpack.c.h.b16 %v323
      %v430 = vunpack.c.l.b16 %v324
      %v431 = vunpack.c.h.b16 %v324
      %v432 = vunpack.c.l.b16 %v325
      %v433 = vunpack.c.h.b16 %v325
      %v434 = vunpack.c.l.b16 %v326
      %v435 = vunpack.c.h.b16 %v326
      %v436 = vunpack.c.l.b16 %v327
      %v437 = vunpack.c.h.b16 %v327
      %v438 = vunpack.c.l.b16 %v328
      %v439 = vunpack.c.h.b16 %v328
      %v440 = vunpack.c.l.b16 %v329
      %v441 = vunpack.c.h.b16 %v329
      %v442 = vunpack.c.l.b16 %v330
      %v443 = vunpack.c.h.b16 %v330
      %v444 = vunpack.c.l.b16 %v331
      %v445 = vunpack.c.h.b16 %v331
      %v446 = vunpack.c.l.b16 %v332
      %v447 = vunpack.c.h.b16 %v332
      %v448 = vunpack.c.l.b16 %v333
      %v449 = vunpack.c.h.b16 %v333
      %v450 = vunpack.c.l.b16 %v334
      %v451 = vunpack.c.h.b16 %v334
      %v452 = vunpack.c.l.b16 %v335
      %v453 = vunpack.c.h.b16 %v335
      %v454 = vunpack.c.l.b16 %v336
      %v455 = vunpack.c.h.b16 %v336
      %v456 = vunpack.c.l.b16 %v337
      %v457 = vunpack.c.h.b16 %v337
      %v458 = vunpack.c.l.b16 %v338
      %v459 = vunpack.c.h.b16 %v338
      %v460 = vunpack.c.l.b16 %v339
      %v461 = vunpack.c.h.b16 %v339
      %v462 = vpack.c.b16 %v400, %v398
      %v463 = vpack.c.b16 %v401, %v399
      %v464 = vpack.c.b16 %v404, %v402
      %v465 = vpack.c.b16 %v405, %v403
      %v466 = vpack.c.b16 %v408, %v406
      %v467 = vpack.c.b16 %v409, %v407
      %v468 = vpack.c.b16 %v412, %v410
      %v469 = vpack.c.b16 %v413, %v411
      %v470 = vpack.c.b16 %v416, %v414
      %v471 = vpack.c.b16 %v417, %v415
      %v472 = vpack.c.b16 %v420, %v418
      %v473 = vpack.c.b16 %v421, %v419
      %v474 = vpack.c.b16 %v424, %v422
      %v475 = vpack.c.b16 %v425, %v423
      %v476 = vpack.c.b16 %v428, %v426
      %v477 = vpack.c.b16 %v429, %v427
      %v478 = vpack.c.b16 %v432, %v430
      %v479 = vpack.c.b16 %v433, %v431
      %v480 = vpack.c.b16 %v436, %v434
      %v481 = vpack.c.b16 %v437, %v435
      %v482 = vpack.c.b16 %v440, %v438
      %v483 = vpack.c.b16 %v441, %v439
      %v484 = vpack.c.b16 %v444, %v442
      %v485 = vpack.c.b16 %v445, %v443
      %v486 = vpack.c.b16 %v448, %v446
      %v487 = vpack.c.b16 %v449, %v447
      %v488 = vpack.c.b16 %v452, %v450
      %v489 = vpack.c.b16 %v453, %v451
      %v490 = vpack.c.b16 %v456, %v454
      %v491 = vpack.c.b16 %v457, %v455
      %v492 = vpack.c.b16 %v460, %v458
      %v493 = vpack.c.b16 %v461, %v459
      %v527 = vlaneseq
      %v528 = vshrl.u32 %v527, 7
      %v529 = vsub.s32 0, %v528
      %v530 = vrot.slane %v340, %v529
      %v531 = vlaneseq
      %v532 = vshrl.u32 %v531, 7
      %v533 = vsub.s32 1, %v532
      %v534 = vrot.slane %v340, %v533
      %537 = vmatprep.subr.bf16.mxu0 %v477
      %538 = vmatpush1.bf16.msra.mxu0 %v476
      %539 = vmatprep.subr.bf16.mxu0 %v475
      %540 = vmatpush1.bf16.msra.mxu0 %v474
      %541 = vmatprep.subr.bf16.mxu0 %v473
      %542 = vmatpush1.bf16.msra.mxu0 %v472
      %543 = vmatprep.subr.bf16.mxu0 %v471
      %544 = vmatpush1.bf16.msra.mxu0 %v470
      %545 = vmatprep.subr.bf16.mxu0 %v469
      %546 = vmatpush1.bf16.msra.mxu0 %v468
      %547 = vmatprep.subr.bf16.mxu0 %v467
      %548 = vmatpush1.bf16.msra.mxu0 %v466
      %549 = vmatprep.subr.bf16.mxu0 %v465
      %550 = vmatpush1.bf16.msra.mxu0 %v464
      %551 = vmatprep.subr.bf16.mxu0 %v463
      %552 = vmatpush1.bf16.msra.mxu0 %v462
      %553 = vmatprep.subr.bf16.mxu0 %v493
      %554 = vmatpush2.bf16.msra.mxu0 %v492
      %555 = vmatprep.subr.bf16.mxu0 %v491
      %556 = vmatpush2.bf16.msra.mxu0 %v490
      %557 = vmatprep.subr.bf16.mxu0 %v489
      %558 = vmatpush2.bf16.msra.mxu0 %v488
      %559 = vmatprep.subr.bf16.mxu0 %v487
      %560 = vmatpush2.bf16.msra.mxu0 %v486
      %561 = vmatprep.subr.bf16.mxu0 %v485
      %562 = vmatpush2.bf16.msra.mxu0 %v484
      %563 = vmatprep.subr.bf16.mxu0 %v483
      %564 = vmatpush2.bf16.msra.mxu0 %v482
      %565 = vmatprep.subr.bf16.mxu0 %v481
      %566 = vmatpush2.bf16.msra.mxu0 %v480
      %567 = vmatprep.subr.bf16.mxu0 %v479
      %568 = vmatpush2.bf16.msra.mxu0 %v478
      %569 = vmatprep.mubr.bf16.mxu0 %v363
      %570 = vmatmul.mubr.bf16.gmra.mxu0 %v356
      %v571 = vpop.f32.mrf.mxu0
      %v572 = vadd.f32 %v530, %v571
      %v573 = vpop.f32.mrf.mxu0
      %v574 = vadd.f32 %v534, %v573
      %v575 = vpop.f32.mrf.mxu0
      %v576 = vpop.f32.mrf.mxu0
      %577 = vdwg.mxu0
      %v578 = vmax.f32 %v572, 0.0
      %v579 = vmax.f32 %v574, 0.0
      %v580 = vpack.c.bf16 %v578, %v578
      %v581 = vpack.c.bf16 %v579, %v579
      %v582 = vld [vmem:[%s2] sm:$0xff]
      %v583 = vld [vmem:[%s2 + $0x8] sm:$0xff]
      %v584 = vld [vmem:[%s2 + $0x10] sm:$0xff]
      %v585 = vld [vmem:[%s2 + $0x18] sm:$0xff]
      %v586 = vld [vmem:[%s2 + $0x20] sm:$0xff]
      %v587 = vld [vmem:[%s2 + $0x28] sm:$0xff]
      %v588 = vld [vmem:[%s2 + $0x30] sm:$0xff]
      %v589 = vld [vmem:[%s2 + $0x38] sm:$0xff]
      %v590 = vld [vmem:[%s2 + $0x40] sm:$0xff]
      %v591 = vld [vmem:[%s2 + $0x48] sm:$0xff]
      %v592 = vld [vmem:[%s2 + $0x50] sm:$0xff]
      %v593 = vld [vmem:[%s2 + $0x58] sm:$0xff]
      %v594 = vld [vmem:[%s2 + $0x60] sm:$0xff]
      %v595 = vld [vmem:[%s2 + $0x68] sm:$0xff]
      %v596 = vld [vmem:[%s2 + $0x70] sm:$0xff]
      %v597 = vld [vmem:[%s2 + $0x78] sm:$0xff]
      %v598 = vld [vmem:[%s2 + $0x80] sm:$0xff]
      %v599 = vld [vmem:[%s2 + $0x88] sm:$0xff]
      %v600 = vld [vmem:[%s2 + $0x90] sm:$0xff]
      %v601 = vld [vmem:[%s2 + $0x98] sm:$0xff]
      %v602 = vld [vmem:[%s2 + $0xa0] sm:$0xff]
      %v603 = vld [vmem:[%s2 + $0xa8] sm:$0xff]
      %v604 = vld [vmem:[%s2 + $0xb0] sm:$0xff]
      %v605 = vld [vmem:[%s2 + $0xb8] sm:$0xff]
      %v606 = vld [vmem:[%s2 + $0xc0] sm:$0xff]
      %v607 = vld [vmem:[%s2 + $0xc8] sm:$0xff]
      %v608 = vld [vmem:[%s2 + $0xd0] sm:$0xff]
      %v609 = vld [vmem:[%s2 + $0xd8] sm:$0xff]
      %v610 = vld [vmem:[%s2 + $0xe0] sm:$0xff]
      %v611 = vld [vmem:[%s2 + $0xe8] sm:$0xff]
      %v612 = vld [vmem:[%s2 + $0xf0] sm:$0xff]
      %v613 = vld [vmem:[%s2 + $0xf8] sm:$0xff]
      %s614 = scalar_lea.vmem %s3, 1
      %v615 = vld [vmem:[%s614] ss:$2 sm:$0x3]
      %v648 = vunpack.c.l.b16 %v582
      %v649 = vunpack.c.h.b16 %v582
      %v650 = vunpack.c.l.b16 %v583
      %v651 = vunpack.c.h.b16 %v583
      %v652 = vunpack.c.l.b16 %v584
      %v653 = vunpack.c.h.b16 %v584
      %v654 = vunpack.c.l.b16 %v585
      %v655 = vunpack.c.h.b16 %v585
      %v656 = vunpack.c.l.b16 %v586
      %v657 = vunpack.c.h.b16 %v586
      %v658 = vunpack.c.l.b16 %v587
      %v659 = vunpack.c.h.b16 %v587
      %v660 = vunpack.c.l.b16 %v588
      %v661 = vunpack.c.h.b16 %v588
      %v662 = vunpack.c.l.b16 %v589
      %v663 = vunpack.c.h.b16 %v589
      %v664 = vunpack.c.l.b16 %v590
      %v665 = vunpack.c.h.b16 %v590
      %v666 = vunpack.c.l.b16 %v591
      %v667 = vunpack.c.h.b16 %v591
      %v668 = vunpack.c.l.b16 %v592
      %v669 = vunpack.c.h.b16 %v592
      %v670 = vunpack.c.l.b16 %v593
      %v671 = vunpack.c.h.b16 %v593
      %v672 = vunpack.c.l.b16 %v594
      %v673 = vunpack.c.h.b16 %v594
      %v674 = vunpack.c.l.b16 %v595
      %v675 = vunpack.c.h.b16 %v595
      %v676 = vunpack.c.l.b16 %v596
      %v677 = vunpack.c.h.b16 %v596
      %v678 = vunpack.c.l.b16 %v597
      %v679 = vunpack.c.h.b16 %v597
      %v680 = vunpack.c.l.b16 %v598
      %v681 = vunpack.c.h.b16 %v598
      %v682 = vunpack.c.l.b16 %v599
      %v683 = vunpack.c.h.b16 %v599
      %v684 = vunpack.c.l.b16 %v600
      %v685 = vunpack.c.h.b16 %v600
      %v686 = vunpack.c.l.b16 %v601
      %v687 = vunpack.c.h.b16 %v601
      %v688 = vunpack.c.l.b16 %v602
      %v689 = vunpack.c.h.b16 %v602
      %v690 = vunpack.c.l.b16 %v603
      %v691 = vunpack.c.h.b16 %v603
      %v692 = vunpack.c.l.b16 %v604
      %v693 = vunpack.c.h.b16 %v604
      %v694 = vunpack.c.l.b16 %v605
      %v695 = vunpack.c.h.b16 %v605
      %v696 = vunpack.c.l.b16 %v606
      %v697 = vunpack.c.h.b16 %v606
      %v698 = vunpack.c.l.b16 %v607
      %v699 = vunpack.c.h.b16 %v607
      %v700 = vunpack.c.l.b16 %v608
      %v701 = vunpack.c.h.b16 %v608
      %v702 = vunpack.c.l.b16 %v609
      %v703 = vunpack.c.h.b16 %v609
      %v704 = vunpack.c.l.b16 %v610
      %v705 = vunpack.c.h.b16 %v610
      %v706 = vunpack.c.l.b16 %v611
      %v707 = vunpack.c.h.b16 %v611
      %v708 = vunpack.c.l.b16 %v612
      %v709 = vunpack.c.h.b16 %v612
      %v710 = vunpack.c.l.b16 %v613
      %v711 = vunpack.c.h.b16 %v613
      %v712 = vpack.c.b16 %v650, %v648
      %v713 = vpack.c.b16 %v651, %v649
      %v714 = vpack.c.b16 %v654, %v652
      %v715 = vpack.c.b16 %v655, %v653
      %v716 = vpack.c.b16 %v658, %v656
      %v717 = vpack.c.b16 %v659, %v657
      %v718 = vpack.c.b16 %v662, %v660
      %v719 = vpack.c.b16 %v663, %v661
      %v720 = vpack.c.b16 %v666, %v664
      %v721 = vpack.c.b16 %v667, %v665
      %v722 = vpack.c.b16 %v670, %v668
      %v723 = vpack.c.b16 %v671, %v669
      %v724 = vpack.c.b16 %v674, %v672
      %v725 = vpack.c.b16 %v675, %v673
      %v726 = vpack.c.b16 %v678, %v676
      %v727 = vpack.c.b16 %v679, %v677
      %v728 = vpack.c.b16 %v682, %v680
      %v729 = vpack.c.b16 %v683, %v681
      %v730 = vpack.c.b16 %v686, %v684
      %v731 = vpack.c.b16 %v687, %v685
      %v732 = vpack.c.b16 %v690, %v688
      %v733 = vpack.c.b16 %v691, %v689
      %v734 = vpack.c.b16 %v694, %v692
      %v735 = vpack.c.b16 %v695, %v693
      %v736 = vpack.c.b16 %v698, %v696
      %v737 = vpack.c.b16 %v699, %v697
      %v738 = vpack.c.b16 %v702, %v700
      %v739 = vpack.c.b16 %v703, %v701
      %v740 = vpack.c.b16 %v706, %v704
      %v741 = vpack.c.b16 %v707, %v705
      %v742 = vpack.c.b16 %v710, %v708
      %v743 = vpack.c.b16 %v711, %v709
      %v777 = vlaneseq
      %v778 = vshrl.u32 %v777, 7
      %v779 = vsub.s32 0, %v778
      %v780 = vrot.slane %v615, %v779
      %v781 = vlaneseq
      %v782 = vshrl.u32 %v781, 7
      %v783 = vsub.s32 1, %v782
      %v784 = vrot.slane %v615, %v783
      %787 = vmatprep.subr.bf16.mxu0 %v727
      %788 = vmatpush1.bf16.msra.mxu0 %v726
      %789 = vmatprep.subr.bf16.mxu0 %v725
      %790 = vmatpush1.bf16.msra.mxu0 %v724
      %791 = vmatprep.subr.bf16.mxu0 %v723
      %792 = vmatpush1.bf16.msra.mxu0 %v722
      %793 = vmatprep.subr.bf16.mxu0 %v721
      %794 = vmatpush1.bf16.msra.mxu0 %v720
      %795 = vmatprep.subr.bf16.mxu0 %v719
      %796 = vmatpush1.bf16.msra.mxu0 %v718
      %797 = vmatprep.subr.bf16.mxu0 %v717
      %798 = vmatpush1.bf16.msra.mxu0 %v716
      %799 = vmatprep.subr.bf16.mxu0 %v715
      %800 = vmatpush1.bf16.msra.mxu0 %v714
      %801 = vmatprep.subr.bf16.mxu0 %v713
      %802 = vmatpush1.bf16.msra.mxu0 %v712
      %803 = vmatprep.subr.bf16.mxu0 %v743
      %804 = vmatpush2.bf16.msra.mxu0 %v742
      %805 = vmatprep.subr.bf16.mxu0 %v741
      %806 = vmatpush2.bf16.msra.mxu0 %v740
      %807 = vmatprep.subr.bf16.mxu0 %v739
      %808 = vmatpush2.bf16.msra.mxu0 %v738
      %809 = vmatprep.subr.bf16.mxu0 %v737
      %810 = vmatpush2.bf16.msra.mxu0 %v736
      %811 = vmatprep.subr.bf16.mxu0 %v735
      %812 = vmatpush2.bf16.msra.mxu0 %v734
      %813 = vmatprep.subr.bf16.mxu0 %v733
      %814 = vmatpush2.bf16.msra.mxu0 %v732
      %815 = vmatprep.subr.bf16.mxu0 %v731
      %816 = vmatpush2.bf16.msra.mxu0 %v730
      %817 = vmatprep.subr.bf16.mxu0 %v729
      %818 = vmatpush2.bf16.msra.mxu0 %v728
      %819 = vmatprep.mubr.bf16.mxu0 %v581
      %820 = vmatmul.mubr.bf16.gmra.mxu0 %v580
      %v821 = vpop.f32.mrf.mxu0
      %v822 = vadd.f32 %v780, %v821
      %v823 = vpop.f32.mrf.mxu0
      %v824 = vadd.f32 %v784, %v823
      %v825 = vpop.f32.mrf.mxu0
      %v826 = vpop.f32.mrf.mxu0
      %827 = vdwg.mxu0
      %v828 = vsub.f32 0.0, %v822
      %v829 = vsub.f32 0.0, %v824
      %v830 = vmul.f32 %v828, 1.442695
      %v831 = vpow.pop %v830
      %v832 = vmul.f32 %v829, 1.442695
      %v833 = vpow.pop %v832
      %v834 = vadd.f32 %v831, 1.0
      %v835 = vadd.f32 %v833, 1.0
      %v836 = vrcp.pop %v834
      %v837 = vrcp.pop %v835
      %v838 = vunpack.c.l.bf16 %v307
      %v840 = vlaneseq
      %v841 = vshrl.u32 %v840, 7
      %v842 = vsub.s32 0, %v841
      %v843 = vrot.slane %v838, %v842
      %v844 = vlaneseq
      %v845 = vshrl.u32 %v844, 7
      %v846 = vsub.s32 2, %v845
      %v847 = vrot.slane %v838, %v846
      %v850 = vmul.f32 %v836, %v843
      %v851 = vmul.f32 %v837, %v847
      %v852 = vld [vmem:[#allocation2] sm:$0x3]
      %v853 = vadd.f32 %v850, 0.0
      %v854 = vadd.f32 %v851, 0.0
      %v857 = vcombine.low %v853, %v854
      %v859 = vunpack.c.l.s4 1966171168
      %v860 = vunpack.c.0.s8 %v859
      %v861 = vlaneseq
      %v862 = vshrl.u32 %v861, 7
      %v863 = vsub.s32 %v860, %v862
      %v864 = vrot.slane %v857, %v863
      %v866 = vunpack.c.l.s4 1966171168
      %v867 = vunpack.c.0.s8 %v866
      %v868 = vlaneseq
      %v869 = vshrl.u32 %v868, 7
      %v870 = vsub.s32 %v867, %v869
      %v871 = vrot.slane %v864, %v870
      %v873 = vadd.f32 %v852, %v871
      %v874 = vlaneseq
      %vm875 = vcmp.ge.s32.totalorder %v874, 0
      %vm876 = vcmp.lt.s32.totalorder %v874, 256
      %vm877 = vmand %vm875, %vm876
      %878 = vst.msk [vmem:[#allocation2] sm:$0x3] %vm877, %v873
      // Predicated region
      $region53: #{mtan_rec_unet_forward.7} parent=47 // pred_check
        %p879 = pneg %p298
      $region54: #{mtan_rec_unet_forward.7} parent=47 // pred_check_branch
        %881 = sbr.rel (%p879) target = $region56
      $region55: #{mtan_rec_unet_forward.7} parent=47 // pred_region
        %v882 = vld [vmem:[#allocation2] sm:$0x3]
        %v883 = vld [vmem:[%s4] sm:$0xff]
        %v884 = vld [vmem:[%s4 + $0x8] sm:$0xff]
        %v885 = vld [vmem:[%s4 + $0x10] sm:$0xff]
        %v886 = vld [vmem:[%s4 + $0x18] sm:$0xff]
        %v887 = vld [vmem:[%s4 + $0x20] sm:$0xff]
        %v888 = vld [vmem:[%s4 + $0x28] sm:$0xff]
        %v889 = vld [vmem:[%s4 + $0x30] sm:$0xff]
        %v890 = vld [vmem:[%s4 + $0x38] sm:$0xff]
        %v891 = vld [vmem:[%s4 + $0x40] sm:$0xff]
        %v892 = vld [vmem:[%s4 + $0x48] sm:$0xff]
        %v893 = vld [vmem:[%s4 + $0x50] sm:$0xff]
        %v894 = vld [vmem:[%s4 + $0x58] sm:$0xff]
        %v895 = vld [vmem:[%s4 + $0x60] sm:$0xff]
        %v896 = vld [vmem:[%s4 + $0x68] sm:$0xff]
        %v897 = vld [vmem:[%s4 + $0x70] sm:$0xff]
        %v898 = vld [vmem:[%s4 + $0x78] sm:$0xff]
        %v899 = vld [vmem:[%s4 + $0x80] sm:$0xff]
        %v900 = vld [vmem:[%s4 + $0x88] sm:$0xff]
        %v901 = vld [vmem:[%s4 + $0x90] sm:$0xff]
        %v902 = vld [vmem:[%s4 + $0x98] sm:$0xff]
        %v903 = vld [vmem:[%s4 + $0xa0] sm:$0xff]
        %v904 = vld [vmem:[%s4 + $0xa8] sm:$0xff]
        %v905 = vld [vmem:[%s4 + $0xb0] sm:$0xff]
        %v906 = vld [vmem:[%s4 + $0xb8] sm:$0xff]
        %v907 = vld [vmem:[%s4 + $0xc0] sm:$0xff]
        %v908 = vld [vmem:[%s4 + $0xc8] sm:$0xff]
        %v909 = vld [vmem:[%s4 + $0xd0] sm:$0xff]
        %v910 = vld [vmem:[%s4 + $0xd8] sm:$0xff]
        %v911 = vld [vmem:[%s4 + $0xe0] sm:$0xff]
        %v912 = vld [vmem:[%s4 + $0xe8] sm:$0xff]
        %v913 = vld [vmem:[%s4 + $0xf0] sm:$0xff]
        %v914 = vld [vmem:[%s4 + $0xf8] sm:$0xff]
        %v915 = vld [vmem:[%s6] sm:$0x1]
        %v917 = vlaneseq
        %v918 = vshrl.u32 %v917, 7
        %v919 = vsub.s32 0, %v918
        %v920 = vrot.slane %v882, %v919
        %v921 = vlaneseq
        %v922 = vshrl.u32 %v921, 7
        %v923 = vsub.s32 1, %v922
        %v924 = vrot.slane %v882, %v923
        %927 = vmatprep.subr.mxu0 0.0
        %928 = vmatpush1.msra.mxu0 %v898
        %929 = vmatprep.subr.mxu0 0.0
        %930 = vmatpush1.msra.mxu0 %v897
        %931 = vmatprep.subr.mxu0 0.0
        %932 = vmatpush1.msra.mxu0 %v896
        %933 = vmatprep.subr.mxu0 0.0
        %934 = vmatpush1.msra.mxu0 %v895
        %935 = vmatprep.subr.mxu0 0.0
        %936 = vmatpush1.msra.mxu0 %v894
        %937 = vmatprep.subr.mxu0 0.0
        %938 = vmatpush1.msra.mxu0 %v893
        %939 = vmatprep.subr.mxu0 0.0
        %940 = vmatpush1.msra.mxu0 %v892
        %941 = vmatprep.subr.mxu0 0.0
        %942 = vmatpush1.msra.mxu0 %v891
        %943 = vmatprep.subr.mxu0 0.0
        %944 = vmatpush1.msra.mxu0 %v890
        %945 = vmatprep.subr.mxu0 0.0
        %946 = vmatpush1.msra.mxu0 %v889
        %947 = vmatprep.subr.mxu0 0.0
        %948 = vmatpush1.msra.mxu0 %v888
        %949 = vmatprep.subr.mxu0 0.0
        %950 = vmatpush1.msra.mxu0 %v887
        %951 = vmatprep.subr.mxu0 0.0
        %952 = vmatpush1.msra.mxu0 %v886
        %953 = vmatprep.subr.mxu0 0.0
        %954 = vmatpush1.msra.mxu0 %v885
        %955 = vmatprep.subr.mxu0 0.0
        %956 = vmatpush1.msra.mxu0 %v884
        %957 = vmatprep.subr.mxu0 0.0
        %958 = vmatpush1.msra.mxu0 %v883
        %959 = vmatprep.subr.mxu0 0.0
        %960 = vmatpush2.msra.mxu0 %v914
        %961 = vmatprep.subr.mxu0 0.0
        %962 = vmatpush2.msra.mxu0 %v913
        %963 = vmatprep.subr.mxu0 0.0
        %964 = vmatpush2.msra.mxu0 %v912
        %965 = vmatprep.subr.mxu0 0.0
        %966 = vmatpush2.msra.mxu0 %v911
        %967 = vmatprep.subr.mxu0 0.0
        %968 = vmatpush2.msra.mxu0 %v910
        %969 = vmatprep.subr.mxu0 0.0
        %970 = vmatpush2.msra.mxu0 %v909
        %971 = vmatprep.subr.mxu0 0.0
        %972 = vmatpush2.msra.mxu0 %v908
        %973 = vmatprep.subr.mxu0 0.0
        %974 = vmatpush2.msra.mxu0 %v907
        %975 = vmatprep.subr.mxu0 0.0
        %976 = vmatpush2.msra.mxu0 %v906
        %977 = vmatprep.subr.mxu0 0.0
        %978 = vmatpush2.msra.mxu0 %v905
        %979 = vmatprep.subr.mxu0 0.0
        %980 = vmatpush2.msra.mxu0 %v904
        %981 = vmatprep.subr.mxu0 0.0
        %982 = vmatpush2.msra.mxu0 %v903
        %983 = vmatprep.subr.mxu0 0.0
        %984 = vmatpush2.msra.mxu0 %v902
        %985 = vmatprep.subr.mxu0 0.0
        %986 = vmatpush2.msra.mxu0 %v901
        %987 = vmatprep.subr.mxu0 0.0
        %988 = vmatpush2.msra.mxu0 %v900
        %989 = vmatprep.subr.mxu0 0.0
        %990 = vmatpush2.msra.mxu0 %v899
        %991 = vmatprep.mubr.f32.mxu0 %v924
        %992 = vmatmul.mubr.f32.gmra.mxu0 %v920
        %v993 = vpop.f32.mrf.mxu0
        %v994 = vadd.f32 %v915, %v993
        %v995 = vpop.f32.mrf.mxu0
        %996 = vdwg.mxu0
        %v997 = vmax.f32 %v994, 0.0
        %v998 = vld [vmem:[%s5] sm:$0xff]
        %v999 = vld [vmem:[%s5 + $0x8] sm:$0xff]
        %v1000 = vld [vmem:[%s5 + $0x10] sm:$0xff]
        %v1001 = vld [vmem:[%s5 + $0x18] sm:$0xff]
        %v1002 = vld [vmem:[%s5 + $0x20] sm:$0xff]
        %v1003 = vld [vmem:[%s5 + $0x28] sm:$0xff]
        %v1004 = vld [vmem:[%s5 + $0x30] sm:$0xff]
        %v1005 = vld [vmem:[%s5 + $0x38] sm:$0xff]
        %v1006 = vld [vmem:[%s5 + $0x40] sm:$0xff]
        %v1007 = vld [vmem:[%s5 + $0x48] sm:$0xff]
        %v1008 = vld [vmem:[%s5 + $0x50] sm:$0xff]
        %v1009 = vld [vmem:[%s5 + $0x58] sm:$0xff]
        %v1010 = vld [vmem:[%s5 + $0x60] sm:$0xff]
        %v1011 = vld [vmem:[%s5 + $0x68] sm:$0xff]
        %v1012 = vld [vmem:[%s5 + $0x70] sm:$0xff]
        %v1013 = vld [vmem:[%s5 + $0x78] sm:$0xff]
        %v1014 = vld [vmem:[%s6 + $0x1] sm:$0x1]
        %1015 = vmatprep.subr.mxu0 0.0
        %1016 = vmatpush1.msra.mxu0 %v1013
        %1017 = vmatprep.subr.mxu0 0.0
        %1018 = vmatpush1.msra.mxu0 %v1012
        %1019 = vmatprep.subr.mxu0 0.0
        %1020 = vmatpush1.msra.mxu0 %v1011
        %1021 = vmatprep.subr.mxu0 0.0
        %1022 = vmatpush1.msra.mxu0 %v1010
        %1023 = vmatprep.subr.mxu0 0.0
        %1024 = vmatpush1.msra.mxu0 %v1009
        %1025 = vmatprep.subr.mxu0 0.0
        %1026 = vmatpush1.msra.mxu0 %v1008
        %1027 = vmatprep.subr.mxu0 0.0
        %1028 = vmatpush1.msra.mxu0 %v1007
        %1029 = vmatprep.subr.mxu0 0.0
        %1030 = vmatpush1.msra.mxu0 %v1006
        %1031 = vmatprep.subr.mxu0 0.0
        %1032 = vmatpush1.msra.mxu0 %v1005
        %1033 = vmatprep.subr.mxu0 0.0
        %1034 = vmatpush1.msra.mxu0 %v1004
        %1035 = vmatprep.subr.mxu0 0.0
        %1036 = vmatpush1.msra.mxu0 %v1003
        %1037 = vmatprep.subr.mxu0 0.0
        %1038 = vmatpush1.msra.mxu0 %v1002
        %1039 = vmatprep.subr.mxu0 0.0
        %1040 = vmatpush1.msra.mxu0 %v1001
        %1041 = vmatprep.subr.mxu0 0.0
        %1042 = vmatpush1.msra.mxu0 %v1000
        %1043 = vmatprep.subr.mxu0 0.0
        %1044 = vmatpush1.msra.mxu0 %v999
        %1045 = vmatprep.subr.mxu0 0.0
        %1046 = vmatpush1.msra.mxu0 %v998
        %1047 = vmatprep.subr.mxu0 0.0
        %1048 = vmatpush2.msra.mxu0 0.0
        %1049 = vmatprep.subr.mxu0 0.0
        %1050 = vmatpush2.msra.mxu0 0.0
        %1051 = vmatprep.subr.mxu0 0.0
        %1052 = vmatpush2.msra.mxu0 0.0
        %1053 = vmatprep.subr.mxu0 0.0
        %1054 = vmatpush2.msra.mxu0 0.0
        %1055 = vmatprep.subr.mxu0 0.0
        %1056 = vmatpush2.msra.mxu0 0.0
        %1057 = vmatprep.subr.mxu0 0.0
        %1058 = vmatpush2.msra.mxu0 0.0
        %1059 = vmatprep.subr.mxu0 0.0
        %1060 = vmatpush2.msra.mxu0 0.0
        %1061 = vmatprep.subr.mxu0 0.0
        %1062 = vmatpush2.msra.mxu0 0.0
        %1063 = vmatprep.subr.mxu0 0.0
        %1064 = vmatpush2.msra.mxu0 0.0
        %1065 = vmatprep.subr.mxu0 0.0
        %1066 = vmatpush2.msra.mxu0 0.0
        %1067 = vmatprep.subr.mxu0 0.0
        %1068 = vmatpush2.msra.mxu0 0.0
        %1069 = vmatprep.subr.mxu0 0.0
        %1070 = vmatpush2.msra.mxu0 0.0
        %1071 = vmatprep.subr.mxu0 0.0
        %1072 = vmatpush2.msra.mxu0 0.0
        %1073 = vmatprep.subr.mxu0 0.0
        %1074 = vmatpush2.msra.mxu0 0.0
        %1075 = vmatprep.subr.mxu0 0.0
        %1076 = vmatpush2.msra.mxu0 0.0
        %1077 = vmatprep.subr.mxu0 0.0
        %1078 = vmatpush2.msra.mxu0 0.0
        %1079 = vmatprep.mubr.f32.mxu0 0.0
        %1080 = vmatmul.mubr.f32.gmra.mxu0 %v997
        %v1081 = vpop.f32.mrf.mxu0
        %v1082 = vadd.f32 %v1014, %v1081
        %v1083 = vpop.f32.mrf.mxu0
        %1084 = vdwg.mxu0
        %1085 = vst [vmem:[%s297] sm:$0x1] %v1082
      $region56: #{mtan_rec_unet_forward.7} parent=47 // pred_fallthru
        _
      %p1086 = scmp.lt.s32.totalorder %s22, 1
      %s1087 = scalar_select %p1086, %s22, 1
      %s1088 = scalar_lea.vmem %s7, %s1087
      // Predicated region
      $region57: #{mtan_rec_unet_forward.7} parent=47 // pred_check
        %p1089 = pneg %p202
      $region58: #{mtan_rec_unet_forward.7} parent=47 // pred_check_branch
        %1091 = sbr.rel (%p1089) target = $region60
      $region59: #{mtan_rec_unet_forward.7} parent=47 // pred_region
        _
      $region60: #{mtan_rec_unet_forward.7} parent=47 // pred_fallthru
        _
    $region48: #{mtan_rec_unet_forward.7} parent=5 // pred_fallthru
      _
    %p1092 = scmp.le.s32.totalorder 2, %s13
    // Predicated region
    $region61: #{mtan_rec_unet_forward.7} parent=5 // pred_check
      %p1093 = pneg %p1092
    $region62: #{mtan_rec_unet_forward.7} parent=5 // pred_check_branch
      %1095 = sbr.rel (%p1093) target = $region64
    $region63: #{mtan_rec_unet_forward.7} parent=5 // pred_region
      %s1096 = ssub.s32 %s13, 2
      // Predicated region
      $region65: #{mtan_rec_unet_forward.7} parent=63 // pred_check
        %p1097 = pneg %p208
      $region66: #{mtan_rec_unet_forward.7} parent=63 // pred_check_branch
        %1099 = sbr.rel (%p1097) target = $region68
      $region67: #{mtan_rec_unet_forward.7} parent=63 // pred_region
        %p1100 = scmp.lt.s32.totalorder %s24, 1
        %s1101 = scalar_select %p1100, %s24, 1
        %s1102 = scalar_lea.vmem %s7, %s1101
      $region68: #{mtan_rec_unet_forward.7} parent=63 // pred_fallthru
        _
    $region64: #{mtan_rec_unet_forward.7} parent=5 // pred_fallthru
      _
  $region6: #{mtan_rec_unet_forward.7} parent=0 // loop_footer
    %s17 = sadd.s32 1, %s13
  $region7: #{mtan_rec_unet_forward.7} parent=0 // loop_footer_branch
    %12 = sbr.rel target = $region3
  $region8: #{mtan_rec_unet_forward.7} parent=0 // loop_exit
    _

// kernel: mtan_rec_unet_forward.6
$region0: #{mtan_rec_unet_forward.6}
  #allocation0 [shape = 'u32[]', space=smem, size = 0x4, offset = 0x4, fixed_abs, tag = 'smem constant byte address 0x4 - core index']
  #allocation1 [shape = 'u32[144,128]{1,0:T(1,128)}', space=vmem, size = 0x12000, scoped, tag = 'internal scratch']
  #allocation2 [shape = 'f32[1,256]{1,0:T(1,128)}', space=vmem, size = 0x400, scoped, tag = 'scratch operand']
  %s0 = inlined_call_operand.vmem [shape: bf16[2,1,256], index: 0, kind: input, shape index: {}]
  %s1 = inlined_call_operand.vmem [shape: bf16[256,256], index: 1, kind: input, shape index: {}]
  %s2 = inlined_call_operand.vmem [shape: bf16[256,256], index: 2, kind: input, shape index: {}]
  %s3 = inlined_call_operand.vmem [shape: f32[2,256], index: 3, kind: input, shape index: {}]
  %s4 = inlined_call_operand.vmem [shape: f32[256,64], index: 4, kind: input, shape index: {}]
  %s5 = inlined_call_operand.vmem [shape: f32[64,64], index: 5, kind: input, shape index: {}]
  %s6 = inlined_call_operand.vmem [shape: f32[2,64], index: 6, kind: input, shape index: {}]
  %s7 = inlined_call_operand.vmem [shape: f32[2,1,64], index: 7, kind: output, shape index: {}]
  %s8 = sld [smem:[#allocation0]]
  $region69: #{mtan_rec_unet_forward.6} parent=0
    _
  %s10 = ssub.s32 1, %s8
  %s11 = scalar_select 0, %s10, %s8
  loop: start=0, step=1, limit=4
  $region2: #{mtan_rec_unet_forward.6} parent=0 // loop_pre_header
    _
  $region3: #{mtan_rec_unet_forward.6} parent=0 // loop_header
    %s13 = sphi 0, %s17
    %p14 = scmp.ge.s32.totalorder %s13, 4
    %s20 = sphi 0, %s32
    %s21 = sphi 0, %s28
    %s22 = sphi 0, %s20
    %s23 = sphi 0, %s21
    %s24 = sphi 0, %s22
    %s25 = sphi 0, %s23
    %s37 = sphi 0, %s39
    %s40 = sphi 0, %s37
    %s41 = sphi 0, %s40
    %s57 = sphi 0, %s41
    %s61 = sphi 0, %s61
    %s63 = sphi 0, %s61
    %s64 = sphi 0, %s63
    %s78 = sphi 0, %s64
    %s82 = sphi 0, %s82
    %s84 = sphi 0, %s82
    %s85 = sphi 0, %s84
    %s99 = sphi 0, %s85
    %s103 = sphi 0, %s103
    %s105 = sphi 0, %s103
    %s106 = sphi 0, %s105
    %s120 = sphi 0, %s106
    %s124 = sphi 0, %s124
    %s126 = sphi 0, %s124
    %s127 = sphi 0, %s126
    %s141 = sphi 0, %s127
    %s145 = sphi 0, %s145
    %s147 = sphi 0, %s145
    %s148 = sphi 0, %s147
    %s162 = sphi 0, %s148
    %s166 = sphi 0, %s166
    %s168 = sphi 0, %s166
    %s169 = sphi 0, %s168
    %s183 = sphi 0, %s169
    %s189 = sphi 0, %s191
    %s192 = sphi 0, %s189
    %s193 = sphi 0, %s192
    %s209 = sphi 0, %s193
  $region4: #{mtan_rec_unet_forward.6} parent=0 // loop_header_branch
    %16 = sbr.rel (%p14) target = $region8
  $region5: #{mtan_rec_unet_forward.6} parent=0 // loop_body
    %s18 = ssub.s32 %s13, 1
    %s19 = ssub.s32 %s13, 2
    %s26 = sadd.s32 1, %s21
    %p27 = scmp.ge.s32.totalorder %s26, 1
    %s28 = scalar_select %p27, 0, %s26
    %s29 = sadd.s32 1, %s20
    %s30 = scalar_select %p27, %s29, %s20
    %p31 = scmp.ge.s32.totalorder %s30, 2
    %s32 = scalar_select %p31, 0, %s30
    %s33 = ssub.s32 %s20, %s32
    %s34 = ssub.s32 %s21, %s28
    %s35 = sor.u32 %s33, %s34
    %p36 = scmp.eq.s32.totalorder %s35, 0
    %s38 = sadd.s32 %s37, 1
    %s39 = scalar_select %p36, %s37, %s38
    %p42 = pneg %p36
    %p43 = scmp.eq.s32.totalorder %s13, 1
    %p44 = por %p42, %p43
    %p45 = scmp.ne.s32.totalorder %s37, %s40
    %p46 = scmp.eq.s32.totalorder %s13, 0
    %p47 = por %p45, %p46
    %p48 = scmp.ne.s32.totalorder %s37, %s40
    %p49 = scmp.eq.s32.totalorder %s18, 1
    %p50 = por %p48, %p49
    %p51 = scmp.ne.s32.totalorder %s40, %s41
    %p52 = scmp.eq.s32.totalorder %s18, 0
    %p53 = por %p51, %p52
    %p54 = scmp.ne.s32.totalorder %s40, %s41
    %p55 = scmp.eq.s32.totalorder %s19, 1
    %p56 = por %p54, %p55
    %p58 = scmp.ne.s32.totalorder %s41, %s57
    %p59 = scmp.eq.s32.totalorder %s19, 0
    %p60 = por %p58, %p59
    %s62 = sadd.s32 %s61, 1
    %p65 = scmp.eq.s32.totalorder %s13, 1
    %p66 = scmp.ne.s32.totalorder %s61, %s63
    %p67 = scmp.eq.s32.totalorder %s13, 0
    %p68 = por %p66, %p67
    %p69 = scmp.ne.s32.totalorder %s61, %s63
    %p70 = scmp.eq.s32.totalorder %s18, 1
    %p71 = por %p69, %p70
    %p72 = scmp.ne.s32.totalorder %s63, %s64
    %p73 = scmp.eq.s32.totalorder %s18, 0
    %p74 = por %p72, %p73
    %p75 = scmp.ne.s32.totalorder %s63, %s64
    %p76 = scmp.eq.s32.totalorder %s19, 1
    %p77 = por %p75, %p76
    %p79 = scmp.ne.s32.totalorder %s64, %s78
    %p80 = scmp.eq.s32.totalorder %s19, 0
    %p81 = por %p79, %p80
    %s83 = sadd.s32 %s82, 1
    %p86 = scmp.eq.s32.totalorder %s13, 1
    %p87 = scmp.ne.s32.totalorder %s82, %s84
    %p88 = scmp.eq.s32.totalorder %s13, 0
    %p89 = por %p87, %p88
    %p90 = scmp.ne.s32.totalorder %s82, %s84
    %p91 = scmp.eq.s32.totalorder %s18, 1
    %p92 = por %p90, %p91
    %p93 = scmp.ne.s32.totalorder %s84, %s85
    %p94 = scmp.eq.s32.totalorder %s18, 0
    %p95 = por %p93, %p94
    %p96 = scmp.ne.s32.totalorder %s84, %s85
    %p97 = scmp.eq.s32.totalorder %s19, 1
    %p98 = por %p96, %p97
    %p100 = scmp.ne.s32.totalorder %s85, %s99
    %p101 = scmp.eq.s32.totalorder %s19, 0
    %p102 = por %p100, %p101
    %s104 = sadd.s32 %s103, 1
    %p107 = scmp.eq.s32.totalorder %s13, 1
    %p108 = scmp.ne.s32.totalorder %s103, %s105
    %p109 = scmp.eq.s32.totalorder %s13, 0
    %p110 = por %p108, %p109
    %p111 = scmp.ne.s32.totalorder %s103, %s105
    %p112 = scmp.eq.s32.totalorder %s18, 1
    %p113 = por %p111, %p112
    %p114 = scmp.ne.s32.totalorder %s105, %s106
    %p115 = scmp.eq.s32.totalorder %s18, 0
    %p116 = por %p114, %p115
    %p117 = scmp.ne.s32.totalorder %s105, %s106
    %p118 = scmp.eq.s32.totalorder %s19, 1
    %p119 = por %p117, %p118
    %p121 = scmp.ne.s32.totalorder %s106, %s120
    %p122 = scmp.eq.s32.totalorder %s19, 0
    %p123 = por %p121, %p122
    %s125 = sadd.s32 %s124, 1
    %p128 = scmp.eq.s32.totalorder %s13, 1
    %p129 = scmp.ne.s32.totalorder %s124, %s126
    %p130 = scmp.eq.s32.totalorder %s13, 0
    %p131 = por %p129, %p130
    %p132 = scmp.ne.s32.totalorder %s124, %s126
    %p133 = scmp.eq.s32.totalorder %s18, 1
    %p134 = por %p132, %p133
    %p135 = scmp.ne.s32.totalorder %s126, %s127
    %p136 = scmp.eq.s32.totalorder %s18, 0
    %p137 = por %p135, %p136
    %p138 = scmp.ne.s32.totalorder %s126, %s127
    %p139 = scmp.eq.s32.totalorder %s19, 1
    %p140 = por %p138, %p139
    %p142 = scmp.ne.s32.totalorder %s127, %s141
    %p143 = scmp.eq.s32.totalorder %s19, 0
    %p144 = por %p142, %p143
    %s146 = sadd.s32 %s145, 1
    %p149 = scmp.eq.s32.totalorder %s13, 1
    %p150 = scmp.ne.s32.totalorder %s145, %s147
    %p151 = scmp.eq.s32.totalorder %s13, 0
    %p152 = por %p150, %p151
    %p153 = scmp.ne.s32.totalorder %s145, %s147
    %p154 = scmp.eq.s32.totalorder %s18, 1
    %p155 = por %p153, %p154
    %p156 = scmp.ne.s32.totalorder %s147, %s148
    %p157 = scmp.eq.s32.totalorder %s18, 0
    %p158 = por %p156, %p157
    %p159 = scmp.ne.s32.totalorder %s147, %s148
    %p160 = scmp.eq.s32.totalorder %s19, 1
    %p161 = por %p159, %p160
    %p163 = scmp.ne.s32.totalorder %s148, %s162
    %p164 = scmp.eq.s32.totalorder %s19, 0
    %p165 = por %p163, %p164
    %s167 = sadd.s32 %s166, 1
    %p170 = scmp.eq.s32.totalorder %s13, 1
    %p171 = scmp.ne.s32.totalorder %s166, %s168
    %p172 = scmp.eq.s32.totalorder %s13, 0
    %p173 = por %p171, %p172
    %p174 = scmp.ne.s32.totalorder %s166, %s168
    %p175 = scmp.eq.s32.totalorder %s18, 1
    %p176 = por %p174, %p175
    %p177 = scmp.ne.s32.totalorder %s168, %s169
    %p178 = scmp.eq.s32.totalorder %s18, 0
    %p179 = por %p177, %p178
    %p180 = scmp.ne.s32.totalorder %s168, %s169
    %p181 = scmp.eq.s32.totalorder %s19, 1
    %p182 = por %p180, %p181
    %p184 = scmp.ne.s32.totalorder %s169, %s183
    %p185 = scmp.eq.s32.totalorder %s19, 0
    %p186 = por %p184, %p185
    %s187 = ssub.s32 %s20, %s32
    %p188 = scmp.eq.s32.totalorder %s187, 0
    %s190 = sadd.s32 %s189, 1
    %s191 = scalar_select %p188, %s189, %s190
    %p194 = pneg %p188
    %p195 = scmp.eq.s32.totalorder %s13, 1
    %p196 = por %p194, %p195
    %p197 = scmp.ne.s32.totalorder %s189, %s192
    %p198 = scmp.eq.s32.totalorder %s13, 0
    %p199 = por %p197, %p198
    %p200 = scmp.ne.s32.totalorder %s189, %s192
    %p201 = scmp.eq.s32.totalorder %s18, 1
    %p202 = por %p200, %p201
    %p203 = scmp.ne.s32.totalorder %s192, %s193
    %p204 = scmp.eq.s32.totalorder %s18, 0
    %p205 = por %p203, %p204
    %p206 = scmp.ne.s32.totalorder %s192, %s193
    %p207 = scmp.eq.s32.totalorder %s19, 1
    %p208 = por %p206, %p207
    %p210 = scmp.ne.s32.totalorder %s193, %s209
    %p211 = scmp.eq.s32.totalorder %s19, 0
    %p212 = por %p210, %p211
    %p213 = scmp.le.s32.totalorder 1, %s13
    %p214 = scmp.lt.s32.totalorder %s13, 3
    %p215 = pnand %p213, %p214
    %p216 = pneg %p215
    // Predicated region
    $region9: #{mtan_rec_unet_forward.6} parent=5 // pred_check
      _
    $region10: #{mtan_rec_unet_forward.6} parent=5 // pred_check_branch
      %218 = sbr.rel (%p215) target = $region12
    $region11: #{mtan_rec_unet_forward.6} parent=5 // pred_region
      %s219 = ssub.s32 %s13, 1
      // Predicated region
      $region13: #{mtan_rec_unet_forward.6} parent=11 // pred_check
        %p220 = pneg %p74
      $region14: #{mtan_rec_unet_forward.6} parent=11 // pred_check_branch
        %222 = sbr.rel (%p220) target = $region16
      $region15: #{mtan_rec_unet_forward.6} parent=11 // pred_region
        _
      $region16: #{mtan_rec_unet_forward.6} parent=11 // pred_fallthru
        _
      // Predicated region
      $region17: #{mtan_rec_unet_forward.6} parent=11 // pred_check
        %p223 = pneg %p95
      $region18: #{mtan_rec_unet_forward.6} parent=11 // pred_check_branch
        %225 = sbr.rel (%p223) target = $region20
      $region19: #{mtan_rec_unet_forward.6} parent=11 // pred_region
        _
      $region20: #{mtan_rec_unet_forward.6} parent=11 // pred_fallthru
        _
      // Predicated region
      $region21: #{mtan_rec_unet_forward.6} parent=11 // pred_check
        %p226 = pneg %p116
      $region22: #{mtan_rec_unet_forward.6} parent=11 // pred_check_branch
        %228 = sbr.rel (%p226) target = $region24
      $region23: #{mtan_rec_unet_forward.6} parent=11 // pred_region
        _
      $region24: #{mtan_rec_unet_forward.6} parent=11 // pred_fallthru
        _
      // Predicated region
      $region25: #{mtan_rec_unet_forward.6} parent=11 // pred_check
        %p229 = pneg %p137
      $region26: #{mtan_rec_unet_forward.6} parent=11 // pred_check_branch
        %231 = sbr.rel (%p229) target = $region28
      $region27: #{mtan_rec_unet_forward.6} parent=11 // pred_region
        _
      $region28: #{mtan_rec_unet_forward.6} parent=11 // pred_fallthru
        _
      // Predicated region
      $region29: #{mtan_rec_unet_forward.6} parent=11 // pred_check
        %p232 = pneg %p158
      $region30: #{mtan_rec_unet_forward.6} parent=11 // pred_check_branch
        %234 = sbr.rel (%p232) target = $region32
      $region31: #{mtan_rec_unet_forward.6} parent=11 // pred_region
        _
      $region32: #{mtan_rec_unet_forward.6} parent=11 // pred_fallthru
        _
      // Predicated region
      $region33: #{mtan_rec_unet_forward.6} parent=11 // pred_check
        %p235 = pneg %p179
      $region34: #{mtan_rec_unet_forward.6} parent=11 // pred_check_branch
        %237 = sbr.rel (%p235) target = $region36
      $region35: #{mtan_rec_unet_forward.6} parent=11 // pred_region
        _
      $region36: #{mtan_rec_unet_forward.6} parent=11 // pred_fallthru
        _
    $region12: #{mtan_rec_unet_forward.6} parent=5 // pred_fallthru
      _
    %p238 = scmp.lt.s32.totalorder %s13, 2
    // Predicated region
    $region37: #{mtan_rec_unet_forward.6} parent=5 // pred_check
      %p239 = pneg %p238
    $region38: #{mtan_rec_unet_forward.6} parent=5 // pred_check_branch
      %241 = sbr.rel (%p239) target = $region40
    $region39: #{mtan_rec_unet_forward.6} parent=5 // pred_region
      // Predicated region
      $region41: #{mtan_rec_unet_forward.6} parent=39 // pred_check
        %p242 = pneg %p47
      $region42: #{mtan_rec_unet_forward.6} parent=39 // pred_check_branch
        %244 = sbr.rel (%p242) target = $region44
      $region43: #{mtan_rec_unet_forward.6} parent=39 // pred_region
        %p245 = scmp.lt.s32.totalorder %s20, 1
        %s246 = scalar_select %p245, %s20, 1
        %p247 = scmp.lt.s32.totalorder %s21, 0
        %s248 = scalar_select %p247, %s21, 0
        %s249 = smul.addr %s248, 2
        %s250 = smul.addr %s246, 2
        %s251 = sadd.s32 %s249, %s250
        %s252 = scalar_lea.vmem %s0, %s251
      $region44: #{mtan_rec_unet_forward.6} parent=39 // pred_fallthru
        _
    $region40: #{mtan_rec_unet_forward.6} parent=5 // pred_fallthru
      _
    %p253 = scmp.le.s32.totalorder 1, %s13
    %p254 = scmp.lt.s32.totalorder %s13, 3
    %p255 = pnand %p253, %p254
    %p256 = pneg %p255
    // Predicated region
    $region45: #{mtan_rec_unet_forward.6} parent=5 // pred_check
      _
    $region46: #{mtan_rec_unet_forward.6} parent=5 // pred_check_branch
      %258 = sbr.rel (%p255) target = $region48
    $region47: #{mtan_rec_unet_forward.6} parent=5 // pred_region
      %s259 = ssub.s32 %s13, 1
      %p260 = scmp.lt.s32.totalorder %s22, 1
      %s261 = scalar_select %p260, %s22, 1
      %p262 = scmp.lt.s32.totalorder %s23, 0
      %s263 = scalar_select %p262, %s23, 0
      %s264 = smul.addr %s263, 2
      %s265 = smul.addr %s261, 2
      %s266 = sadd.s32 %s264, %s265
      %s267 = scalar_lea.vmem %s0, %s266
      %p268 = pneg %p53
      %p269 = pneg %p50
      %p270 = pneg %p74
      %p271 = pneg %p71
      %p272 = pneg %p95
      %p273 = pneg %p92
      %p274 = pneg %p116
      %p275 = pneg %p113
      %p276 = pneg %p137
      %p277 = pneg %p134
      %p278 = pneg %p158
      %p279 = pneg %p155
      %p280 = pneg %p179
      %p281 = pneg %p176
      %p282 = pneg %p205
      %p283 = pneg %p202
      %p284 = scmp.lt.s32.totalorder %s22, 1
      %s285 = scalar_select %p284, %s22, 1
      %s286 = scalar_lea.vmem %s7, %s285
      %p287 = scmp.lt.s32.totalorder %s22, 1
      %s288 = scalar_select %p287, %s22, 1
      %p289 = scmp.lt.s32.totalorder %s23, 0
      %s290 = scalar_select %p289, %s23, 0
      %s291 = smul.addr %s290, 2
      %s292 = smul.addr %s288, 2
      %s293 = sadd.s32 %s291, %s292
      %s294 = scalar_lea.vmem %s0, %s293
      %p295 = scmp.lt.s32.totalorder %s22, 1
      %s296 = scalar_select %p295, %s22, 1
      %s297 = scalar_lea.vmem %s7, %s296
      %p298 = scmp.eq.s32.totalorder %s23, 0
      // Predicated region
      $region49: #{mtan_rec_unet_forward.6} parent=47 // pred_check
        %p299 = pneg %p298
      $region50: #{mtan_rec_unet_forward.6} parent=47 // pred_check_branch
        %301 = sbr.rel (%p299) target = $region52
      $region51: #{mtan_rec_unet_forward.6} parent=47 // pred_region
        %v302 = vlaneseq
        %vm303 = vcmp.ge.s32.totalorder %v302, 0
        %vm304 = vcmp.lt.s32.totalorder %v302, 256
        %vm305 = vmand %vm303, %vm304
        %306 = vst.msk [vmem:[#allocation2] sm:$0x3] %vm305, 0.0
      $region52: #{mtan_rec_unet_forward.6} parent=47 // pred_fallthru
        _
      %v307 = vld [vmem:[%s294] sm:$0x3]
      %v308 = vld [vmem:[%s1] sm:$0xff]
      %v309 = vld [vmem:[%s1 + $0x8] sm:$0xff]
      %v310 = vld [vmem:[%s1 + $0x10] sm:$0xff]
      %v311 = vld [vmem:[%s1 + $0x18] sm:$0xff]
      %v312 = vld [vmem:[%s1 + $0x20] sm:$0xff]
      %v313 = vld [vmem:[%s1 + $0x28] sm:$0xff]
      %v314 = vld [vmem:[%s1 + $0x30] sm:$0xff]
      %v315 = vld [vmem:[%s1 + $0x38] sm:$0xff]
      %v316 = vld [vmem:[%s1 + $0x40] sm:$0xff]
      %v317 = vld [vmem:[%s1 + $0x48] sm:$0xff]
      %v318 = vld [vmem:[%s1 + $0x50] sm:$0xff]
      %v319 = vld [vmem:[%s1 + $0x58] sm:$0xff]
      %v320 = vld [vmem:[%s1 + $0x60] sm:$0xff]
      %v321 = vld [vmem:[%s1 + $0x68] sm:$0xff]
      %v322 = vld [vmem:[%s1 + $0x70] sm:$0xff]
      %v323 = vld [vmem:[%s1 + $0x78] sm:$0xff]
      %v324 = vld [vmem:[%s1 + $0x80] sm:$0xff]
      %v325 = vld [vmem:[%s1 + $0x88] sm:$0xff]
      %v326 = vld [vmem:[%s1 + $0x90] sm:$0xff]
      %v327 = vld [vmem:[%s1 + $0x98] sm:$0xff]
      %v328 = vld [vmem:[%s1 + $0xa0] sm:$0xff]
      %v329 = vld [vmem:[%s1 + $0xa8] sm:$0xff]
      %v330 = vld [vmem:[%s1 + $0xb0] sm:$0xff]
      %v331 = vld [vmem:[%s1 + $0xb8] sm:$0xff]
      %v332 = vld [vmem:[%s1 + $0xc0] sm:$0xff]
      %v333 = vld [vmem:[%s1 + $0xc8] sm:$0xff]
      %v334 = vld [vmem:[%s1 + $0xd0] sm:$0xff]
      %v335 = vld [vmem:[%s1 + $0xd8] sm:$0xff]
      %v336 = vld [vmem:[%s1 + $0xe0] sm:$0xff]
      %v337 = vld [vmem:[%s1 + $0xe8] sm:$0xff]
      %v338 = vld [vmem:[%s1 + $0xf0] sm:$0xff]
      %v339 = vld [vmem:[%s1 + $0xf8] sm:$0xff]
      %v340 = vld [vmem:[%s3] ss:$2 sm:$0x3]
      %v343 = vunpack.c.l.s4 1966171168
      %v344 = vunpack.c.0.s8 %v343
      %v345 = vlaneseq
      %v346 = vshrl.u32 %v345, 7
      %v347 = vsub.s32 %v344, %v346
      %v348 = vrot.slane %v307, %v347
      %v349 = vcombine.high %v348, %v348
      %v351 = vunpack.c.l.s4 1966171168
      %v352 = vunpack.c.0.s8 %v351
      %v353 = vlaneseq
      %v354 = vshrl.u32 %v353, 7
      %v355 = vsub.s32 %v352, %v354
      %v356 = vrot.slane %v348, %v355
      %v358 = vunpack.c.l.s4 1966171168
      %v359 = vunpack.c.0.s8 %v358
      %v360 = vlaneseq
      %v361 = vshrl.u32 %v360, 7
      %v362 = vsub.s32 %v359, %v361
      %v363 = vrot.slane %v349, %v362
      %v398 = vunpack.c.l.b16 %v308
      %v399 = vunpack.c.h.b16 %v308
      %v400 = vunpack.c.l.b16 %v309
      %v401 = vunpack.c.h.b16 %v309
      %v402 = vunpack.c.l.b16 %v310
      %v403 = vunpack.c.h.b16 %v310
      %v404 = vunpack.c.l.b16 %v311
      %v405 = vunpack.c.h.b16 %v311
      %v406 = vunpack.c.l.b16 %v312
      %v407 = vunpack.c.h.b16 %v312
      %v408 = vunpack.c.l.b16 %v313
      %v409 = vunpack.c.h.b16 %v313
      %v410 = vunpack.c.l.b16 %v314
      %v411 = vunpack.c.h.b16 %v314
      %v412 = vunpack.c.l.b16 %v315
      %v413 = vunpack.c.h.b16 %v315
      %v414 = vunpack.c.l.b16 %v316
      %v415 = vunpack.c.h.b16 %v316
      %v416 = vunpack.c.l.b16 %v317
      %v417 = vunpack.c.h.b16 %v317
      %v418 = vunpack.c.l.b16 %v318
      %v419 = vunpack.c.h.b16 %v318
      %v420 = vunpack.c.l.b16 %v319
      %v421 = vunpack.c.h.b16 %v319
      %v422 = vunpack.c.l.b16 %v320
      %v423 = vunpack.c.h.b16 %v320
      %v424 = vunpack.c.l.b16 %v321
      %v425 = vunpack.c.h.b16 %v321
      %v426 = vunpack.c.l.b16 %v322
      %v427 = vunpack.c.h.b16 %v322
      %v428 = vunpack.c.l.b16 %v323
      %v429 = vunpack.c.h.b16 %v323
      %v430 = vunpack.c.l.b16 %v324
      %v431 = vunpack.c.h.b16 %v324
      %v432 = vunpack.c.l.b16 %v325
      %v433 = vunpack.c.h.b16 %v325
      %v434 = vunpack.c.l.b16 %v326
      %v435 = vunpack.c.h.b16 %v326
      %v436 = vunpack.c.l.b16 %v327
      %v437 = vunpack.c.h.b16 %v327
      %v438 = vunpack.c.l.b16 %v328
      %v439 = vunpack.c.h.b16 %v328
      %v440 = vunpack.c.l.b16 %v329
      %v441 = vunpack.c.h.b16 %v329
      %v442 = vunpack.c.l.b16 %v330
      %v443 = vunpack.c.h.b16 %v330
      %v444 = vunpack.c.l.b16 %v331
      %v445 = vunpack.c.h.b16 %v331
      %v446 = vunpack.c.l.b16 %v332
      %v447 = vunpack.c.h.b16 %v332
      %v448 = vunpack.c.l.b16 %v333
      %v449 = vunpack.c.h.b16 %v333
      %v450 = vunpack.c.l.b16 %v334
      %v451 = vunpack.c.h.b16 %v334
      %v452 = vunpack.c.l.b16 %v335
      %v453 = vunpack.c.h.b16 %v335
      %v454 = vunpack.c.l.b16 %v336
      %v455 = vunpack.c.h.b16 %v336
      %v456 = vunpack.c.l.b16 %v337
      %v457 = vunpack.c.h.b16 %v337
      %v458 = vunpack.c.l.b16 %v338
      %v459 = vunpack.c.h.b16 %v338
      %v460 = vunpack.c.l.b16 %v339
      %v461 = vunpack.c.h.b16 %v339
      %v462 = vpack.c.b16 %v400, %v398
      %v463 = vpack.c.b16 %v401, %v399
      %v464 = vpack.c.b16 %v404, %v402
      %v465 = vpack.c.b16 %v405, %v403
      %v466 = vpack.c.b16 %v408, %v406
      %v467 = vpack.c.b16 %v409, %v407
      %v468 = vpack.c.b16 %v412, %v410
      %v469 = vpack.c.b16 %v413, %v411
      %v470 = vpack.c.b16 %v416, %v414
      %v471 = vpack.c.b16 %v417, %v415
      %v472 = vpack.c.b16 %v420, %v418
      %v473 = vpack.c.b16 %v421, %v419
      %v474 = vpack.c.b16 %v424, %v422
      %v475 = vpack.c.b16 %v425, %v423
      %v476 = vpack.c.b16 %v428, %v426
      %v477 = vpack.c.b16 %v429, %v427
      %v478 = vpack.c.b16 %v432, %v430
      %v479 = vpack.c.b16 %v433, %v431
      %v480 = vpack.c.b16 %v436, %v434
      %v481 = vpack.c.b16 %v437, %v435
      %v482 = vpack.c.b16 %v440, %v438
      %v483 = vpack.c.b16 %v441, %v439
      %v484 = vpack.c.b16 %v444, %v442
      %v485 = vpack.c.b16 %v445, %v443
      %v486 = vpack.c.b16 %v448, %v446
      %v487 = vpack.c.b16 %v449, %v447
      %v488 = vpack.c.b16 %v452, %v450
      %v489 = vpack.c.b16 %v453, %v451
      %v490 = vpack.c.b16 %v456, %v454
      %v491 = vpack.c.b16 %v457, %v455
      %v492 = vpack.c.b16 %v460, %v458
      %v493 = vpack.c.b16 %v461, %v459
      %v527 = vlaneseq
      %v528 = vshrl.u32 %v527, 7
      %v529 = vsub.s32 0, %v528
      %v530 = vrot.slane %v340, %v529
      %v531 = vlaneseq
      %v532 = vshrl.u32 %v531, 7
      %v533 = vsub.s32 1, %v532
      %v534 = vrot.slane %v340, %v533
      %537 = vmatprep.subr.bf16.mxu0 %v477
      %538 = vmatpush1.bf16.msra.mxu0 %v476
      %539 = vmatprep.subr.bf16.mxu0 %v475
      %540 = vmatpush1.bf16.msra.mxu0 %v474
      %541 = vmatprep.subr.bf16.mxu0 %v473
      %542 = vmatpush1.bf16.msra.mxu0 %v472
      %543 = vmatprep.subr.bf16.mxu0 %v471
      %544 = vmatpush1.bf16.msra.mxu0 %v470
      %545 = vmatprep.subr.bf16.mxu0 %v469
      %546 = vmatpush1.bf16.msra.mxu0 %v468
      %547 = vmatprep.subr.bf16.mxu0 %v467
      %548 = vmatpush1.bf16.msra.mxu0 %v466
      %549 = vmatprep.subr.bf16.mxu0 %v465
      %550 = vmatpush1.bf16.msra.mxu0 %v464
      %551 = vmatprep.subr.bf16.mxu0 %v463
      %552 = vmatpush1.bf16.msra.mxu0 %v462
      %553 = vmatprep.subr.bf16.mxu0 %v493
      %554 = vmatpush2.bf16.msra.mxu0 %v492
      %555 = vmatprep.subr.bf16.mxu0 %v491
      %556 = vmatpush2.bf16.msra.mxu0 %v490
      %557 = vmatprep.subr.bf16.mxu0 %v489
      %558 = vmatpush2.bf16.msra.mxu0 %v488
      %559 = vmatprep.subr.bf16.mxu0 %v487
      %560 = vmatpush2.bf16.msra.mxu0 %v486
      %561 = vmatprep.subr.bf16.mxu0 %v485
      %562 = vmatpush2.bf16.msra.mxu0 %v484
      %563 = vmatprep.subr.bf16.mxu0 %v483
      %564 = vmatpush2.bf16.msra.mxu0 %v482
      %565 = vmatprep.subr.bf16.mxu0 %v481
      %566 = vmatpush2.bf16.msra.mxu0 %v480
      %567 = vmatprep.subr.bf16.mxu0 %v479
      %568 = vmatpush2.bf16.msra.mxu0 %v478
      %569 = vmatprep.mubr.bf16.mxu0 %v363
      %570 = vmatmul.mubr.bf16.gmra.mxu0 %v356
      %v571 = vpop.f32.mrf.mxu0
      %v572 = vadd.f32 %v530, %v571
      %v573 = vpop.f32.mrf.mxu0
      %v574 = vadd.f32 %v534, %v573
      %v575 = vpop.f32.mrf.mxu0
      %v576 = vpop.f32.mrf.mxu0
      %577 = vdwg.mxu0
      %v578 = vmax.f32 %v572, 0.0
      %v579 = vmax.f32 %v574, 0.0
      %v580 = vpack.c.bf16 %v578, %v578
      %v581 = vpack.c.bf16 %v579, %v579
      %v582 = vld [vmem:[%s2] sm:$0xff]
      %v583 = vld [vmem:[%s2 + $0x8] sm:$0xff]
      %v584 = vld [vmem:[%s2 + $0x10] sm:$0xff]
      %v585 = vld [vmem:[%s2 + $0x18] sm:$0xff]
      %v586 = vld [vmem:[%s2 + $0x20] sm:$0xff]
      %v587 = vld [vmem:[%s2 + $0x28] sm:$0xff]
      %v588 = vld [vmem:[%s2 + $0x30] sm:$0xff]
      %v589 = vld [vmem:[%s2 + $0x38] sm:$0xff]
      %v590 = vld [vmem:[%s2 + $0x40] sm:$0xff]
      %v591 = vld [vmem:[%s2 + $0x48] sm:$0xff]
      %v592 = vld [vmem:[%s2 + $0x50] sm:$0xff]
      %v593 = vld [vmem:[%s2 + $0x58] sm:$0xff]
      %v594 = vld [vmem:[%s2 + $0x60] sm:$0xff]
      %v595 = vld [vmem:[%s2 + $0x68] sm:$0xff]
      %v596 = vld [vmem:[%s2 + $0x70] sm:$0xff]
      %v597 = vld [vmem:[%s2 + $0x78] sm:$0xff]
      %v598 = vld [vmem:[%s2 + $0x80] sm:$0xff]
      %v599 = vld [vmem:[%s2 + $0x88] sm:$0xff]
      %v600 = vld [vmem:[%s2 + $0x90] sm:$0xff]
      %v601 = vld [vmem:[%s2 + $0x98] sm:$0xff]
      %v602 = vld [vmem:[%s2 + $0xa0] sm:$0xff]
      %v603 = vld [vmem:[%s2 + $0xa8] sm:$0xff]
      %v604 = vld [vmem:[%s2 + $0xb0] sm:$0xff]
      %v605 = vld [vmem:[%s2 + $0xb8] sm:$0xff]
      %v606 = vld [vmem:[%s2 + $0xc0] sm:$0xff]
      %v607 = vld [vmem:[%s2 + $0xc8] sm:$0xff]
      %v608 = vld [vmem:[%s2 + $0xd0] sm:$0xff]
      %v609 = vld [vmem:[%s2 + $0xd8] sm:$0xff]
      %v610 = vld [vmem:[%s2 + $0xe0] sm:$0xff]
      %v611 = vld [vmem:[%s2 + $0xe8] sm:$0xff]
      %v612 = vld [vmem:[%s2 + $0xf0] sm:$0xff]
      %v613 = vld [vmem:[%s2 + $0xf8] sm:$0xff]
      %s614 = scalar_lea.vmem %s3, 1
      %v615 = vld [vmem:[%s614] ss:$2 sm:$0x3]
      %v648 = vunpack.c.l.b16 %v582
      %v649 = vunpack.c.h.b16 %v582
      %v650 = vunpack.c.l.b16 %v583
      %v651 = vunpack.c.h.b16 %v583
      %v652 = vunpack.c.l.b16 %v584
      %v653 = vunpack.c.h.b16 %v584
      %v654 = vunpack.c.l.b16 %v585
      %v655 = vunpack.c.h.b16 %v585
      %v656 = vunpack.c.l.b16 %v586
      %v657 = vunpack.c.h.b16 %v586
      %v658 = vunpack.c.l.b16 %v587
      %v659 = vunpack.c.h.b16 %v587
      %v660 = vunpack.c.l.b16 %v588
      %v661 = vunpack.c.h.b16 %v588
      %v662 = vunpack.c.l.b16 %v589
      %v663 = vunpack.c.h.b16 %v589
      %v664 = vunpack.c.l.b16 %v590
      %v665 = vunpack.c.h.b16 %v590
      %v666 = vunpack.c.l.b16 %v591
      %v667 = vunpack.c.h.b16 %v591
      %v668 = vunpack.c.l.b16 %v592
      %v669 = vunpack.c.h.b16 %v592
      %v670 = vunpack.c.l.b16 %v593
      %v671 = vunpack.c.h.b16 %v593
      %v672 = vunpack.c.l.b16 %v594
      %v673 = vunpack.c.h.b16 %v594
      %v674 = vunpack.c.l.b16 %v595
      %v675 = vunpack.c.h.b16 %v595
      %v676 = vunpack.c.l.b16 %v596
      %v677 = vunpack.c.h.b16 %v596
      %v678 = vunpack.c.l.b16 %v597
      %v679 = vunpack.c.h.b16 %v597
      %v680 = vunpack.c.l.b16 %v598
      %v681 = vunpack.c.h.b16 %v598
      %v682 = vunpack.c.l.b16 %v599
      %v683 = vunpack.c.h.b16 %v599
      %v684 = vunpack.c.l.b16 %v600
      %v685 = vunpack.c.h.b16 %v600
      %v686 = vunpack.c.l.b16 %v601
      %v687 = vunpack.c.h.b16 %v601
      %v688 = vunpack.c.l.b16 %v602
      %v689 = vunpack.c.h.b16 %v602
      %v690 = vunpack.c.l.b16 %v603
      %v691 = vunpack.c.h.b16 %v603
      %v692 = vunpack.c.l.b16 %v604
      %v693 = vunpack.c.h.b16 %v604
      %v694 = vunpack.c.l.b16 %v605
      %v695 = vunpack.c.h.b16 %v605
      %v696 = vunpack.c.l.b16 %v606
      %v697 = vunpack.c.h.b16 %v606
      %v698 = vunpack.c.l.b16 %v607
      %v699 = vunpack.c.h.b16 %v607
      %v700 = vunpack.c.l.b16 %v608
      %v701 = vunpack.c.h.b16 %v608
      %v702 = vunpack.c.l.b16 %v609
      %v703 = vunpack.c.h.b16 %v609
      %v704 = vunpack.c.l.b16 %v610
      %v705 = vunpack.c.h.b16 %v610
      %v706 = vunpack.c.l.b16 %v611
      %v707 = vunpack.c.h.b16 %v611
      %v708 = vunpack.c.l.b16 %v612
      %v709 = vunpack.c.h.b16 %v612
      %v710 = vunpack.c.l.b16 %v613
      %v711 = vunpack.c.h.b16 %v613
      %v712 = vpack.c.b16 %v650, %v648
      %v713 = vpack.c.b16 %v651, %v649
      %v714 = vpack.c.b16 %v654, %v652
      %v715 = vpack.c.b16 %v655, %v653
      %v716 = vpack.c.b16 %v658, %v656
      %v717 = vpack.c.b16 %v659, %v657
      %v718 = vpack.c.b16 %v662, %v660
      %v719 = vpack.c.b16 %v663, %v661
      %v720 = vpack.c.b16 %v666, %v664
      %v721 = vpack.c.b16 %v667, %v665
      %v722 = vpack.c.b16 %v670, %v668
      %v723 = vpack.c.b16 %v671, %v669
      %v724 = vpack.c.b16 %v674, %v672
      %v725 = vpack.c.b16 %v675, %v673
      %v726 = vpack.c.b16 %v678, %v676
      %v727 = vpack.c.b16 %v679, %v677
      %v728 = vpack.c.b16 %v682, %v680
      %v729 = vpack.c.b16 %v683, %v681
      %v730 = vpack.c.b16 %v686, %v684
      %v731 = vpack.c.b16 %v687, %v685
      %v732 = vpack.c.b16 %v690, %v688
      %v733 = vpack.c.b16 %v691, %v689
      %v734 = vpack.c.b16 %v694, %v692
      %v735 = vpack.c.b16 %v695, %v693
      %v736 = vpack.c.b16 %v698, %v696
      %v737 = vpack.c.b16 %v699, %v697
      %v738 = vpack.c.b16 %v702, %v700
      %v739 = vpack.c.b16 %v703, %v701
      %v740 = vpack.c.b16 %v706, %v704
      %v741 = vpack.c.b16 %v707, %v705
      %v742 = vpack.c.b16 %v710, %v708
      %v743 = vpack.c.b16 %v711, %v709
      %v777 = vlaneseq
      %v778 = vshrl.u32 %v777, 7
      %v779 = vsub.s32 0, %v778
      %v780 = vrot.slane %v615, %v779
      %v781 = vlaneseq
      %v782 = vshrl.u32 %v781, 7
      %v783 = vsub.s32 1, %v782
      %v784 = vrot.slane %v615, %v783
      %787 = vmatprep.subr.bf16.mxu0 %v727
      %788 = vmatpush1.bf16.msra.mxu0 %v726
      %789 = vmatprep.subr.bf16.mxu0 %v725
      %790 = vmatpush1.bf16.msra.mxu0 %v724
      %791 = vmatprep.subr.bf16.mxu0 %v723
      %792 = vmatpush1.bf16.msra.mxu0 %v722
      %793 = vmatprep.subr.bf16.mxu0 %v721
      %794 = vmatpush1.bf16.msra.mxu0 %v720
      %795 = vmatprep.subr.bf16.mxu0 %v719
      %796 = vmatpush1.bf16.msra.mxu0 %v718
      %797 = vmatprep.subr.bf16.mxu0 %v717
      %798 = vmatpush1.bf16.msra.mxu0 %v716
      %799 = vmatprep.subr.bf16.mxu0 %v715
      %800 = vmatpush1.bf16.msra.mxu0 %v714
      %801 = vmatprep.subr.bf16.mxu0 %v713
      %802 = vmatpush1.bf16.msra.mxu0 %v712
      %803 = vmatprep.subr.bf16.mxu0 %v743
      %804 = vmatpush2.bf16.msra.mxu0 %v742
      %805 = vmatprep.subr.bf16.mxu0 %v741
      %806 = vmatpush2.bf16.msra.mxu0 %v740
      %807 = vmatprep.subr.bf16.mxu0 %v739
      %808 = vmatpush2.bf16.msra.mxu0 %v738
      %809 = vmatprep.subr.bf16.mxu0 %v737
      %810 = vmatpush2.bf16.msra.mxu0 %v736
      %811 = vmatprep.subr.bf16.mxu0 %v735
      %812 = vmatpush2.bf16.msra.mxu0 %v734
      %813 = vmatprep.subr.bf16.mxu0 %v733
      %814 = vmatpush2.bf16.msra.mxu0 %v732
      %815 = vmatprep.subr.bf16.mxu0 %v731
      %816 = vmatpush2.bf16.msra.mxu0 %v730
      %817 = vmatprep.subr.bf16.mxu0 %v729
      %818 = vmatpush2.bf16.msra.mxu0 %v728
      %819 = vmatprep.mubr.bf16.mxu0 %v581
      %820 = vmatmul.mubr.bf16.gmra.mxu0 %v580
      %v821 = vpop.f32.mrf.mxu0
      %v822 = vadd.f32 %v780, %v821
      %v823 = vpop.f32.mrf.mxu0
      %v824 = vadd.f32 %v784, %v823
      %v825 = vpop.f32.mrf.mxu0
      %v826 = vpop.f32.mrf.mxu0
      %827 = vdwg.mxu0
      %v828 = vsub.f32 0.0, %v822
      %v829 = vsub.f32 0.0, %v824
      %v830 = vmul.f32 %v828, 1.442695
      %v831 = vpow.pop %v830
      %v832 = vmul.f32 %v829, 1.442695
      %v833 = vpow.pop %v832
      %v834 = vadd.f32 %v831, 1.0
      %v835 = vadd.f32 %v833, 1.0
      %v836 = vrcp.pop %v834
      %v837 = vrcp.pop %v835
      %v838 = vunpack.c.l.bf16 %v307
      %v840 = vlaneseq
      %v841 = vshrl.u32 %v840, 7
      %v842 = vsub.s32 0, %v841
      %v843 = vrot.slane %v838, %v842
      %v844 = vlaneseq
      %v845 = vshrl.u32 %v844, 7
      %v846 = vsub.s32 2, %v845
      %v847 = vrot.slane %v838, %v846
      %v850 = vmul.f32 %v836, %v843
      %v851 = vmul.f32 %v837, %v847
      %v852 = vld [vmem:[#allocation2] sm:$0x3]
      %v853 = vadd.f32 %v850, 0.0
      %v854 = vadd.f32 %v851, 0.0
      %v857 = vcombine.low %v853, %v854
      %v859 = vunpack.c.l.s4 1966171168
      %v860 = vunpack.c.0.s8 %v859
      %v861 = vlaneseq
      %v862 = vshrl.u32 %v861, 7
      %v863 = vsub.s32 %v860, %v862
      %v864 = vrot.slane %v857, %v863
      %v866 = vunpack.c.l.s4 1966171168
      %v867 = vunpack.c.0.s8 %v866
      %v868 = vlaneseq
      %v869 = vshrl.u32 %v868, 7
      %v870 = vsub.s32 %v867, %v869
      %v871 = vrot.slane %v864, %v870
      %v873 = vadd.f32 %v852, %v871
      %v874 = vlaneseq
      %vm875 = vcmp.ge.s32.totalorder %v874, 0
      %vm876 = vcmp.lt.s32.totalorder %v874, 256
      %vm877 = vmand %vm875, %vm876
      %878 = vst.msk [vmem:[#allocation2] sm:$0x3] %vm877, %v873
      // Predicated region
      $region53: #{mtan_rec_unet_forward.6} parent=47 // pred_check
        %p879 = pneg %p298
      $region54: #{mtan_rec_unet_forward.6} parent=47 // pred_check_branch
        %881 = sbr.rel (%p879) target = $region56
      $region55: #{mtan_rec_unet_forward.6} parent=47 // pred_region
        %v882 = vld [vmem:[#allocation2] sm:$0x3]
        %v883 = vld [vmem:[%s4] sm:$0xff]
        %v884 = vld [vmem:[%s4 + $0x8] sm:$0xff]
        %v885 = vld [vmem:[%s4 + $0x10] sm:$0xff]
        %v886 = vld [vmem:[%s4 + $0x18] sm:$0xff]
        %v887 = vld [vmem:[%s4 + $0x20] sm:$0xff]
        %v888 = vld [vmem:[%s4 + $0x28] sm:$0xff]
        %v889 = vld [vmem:[%s4 + $0x30] sm:$0xff]
        %v890 = vld [vmem:[%s4 + $0x38] sm:$0xff]
        %v891 = vld [vmem:[%s4 + $0x40] sm:$0xff]
        %v892 = vld [vmem:[%s4 + $0x48] sm:$0xff]
        %v893 = vld [vmem:[%s4 + $0x50] sm:$0xff]
        %v894 = vld [vmem:[%s4 + $0x58] sm:$0xff]
        %v895 = vld [vmem:[%s4 + $0x60] sm:$0xff]
        %v896 = vld [vmem:[%s4 + $0x68] sm:$0xff]
        %v897 = vld [vmem:[%s4 + $0x70] sm:$0xff]
        %v898 = vld [vmem:[%s4 + $0x78] sm:$0xff]
        %v899 = vld [vmem:[%s4 + $0x80] sm:$0xff]
        %v900 = vld [vmem:[%s4 + $0x88] sm:$0xff]
        %v901 = vld [vmem:[%s4 + $0x90] sm:$0xff]
        %v902 = vld [vmem:[%s4 + $0x98] sm:$0xff]
        %v903 = vld [vmem:[%s4 + $0xa0] sm:$0xff]
        %v904 = vld [vmem:[%s4 + $0xa8] sm:$0xff]
        %v905 = vld [vmem:[%s4 + $0xb0] sm:$0xff]
        %v906 = vld [vmem:[%s4 + $0xb8] sm:$0xff]
        %v907 = vld [vmem:[%s4 + $0xc0] sm:$0xff]
        %v908 = vld [vmem:[%s4 + $0xc8] sm:$0xff]
        %v909 = vld [vmem:[%s4 + $0xd0] sm:$0xff]
        %v910 = vld [vmem:[%s4 + $0xd8] sm:$0xff]
        %v911 = vld [vmem:[%s4 + $0xe0] sm:$0xff]
        %v912 = vld [vmem:[%s4 + $0xe8] sm:$0xff]
        %v913 = vld [vmem:[%s4 + $0xf0] sm:$0xff]
        %v914 = vld [vmem:[%s4 + $0xf8] sm:$0xff]
        %v915 = vld [vmem:[%s6] sm:$0x1]
        %v917 = vlaneseq
        %v918 = vshrl.u32 %v917, 7
        %v919 = vsub.s32 0, %v918
        %v920 = vrot.slane %v882, %v919
        %v921 = vlaneseq
        %v922 = vshrl.u32 %v921, 7
        %v923 = vsub.s32 1, %v922
        %v924 = vrot.slane %v882, %v923
        %927 = vmatprep.subr.mxu0 0.0
        %928 = vmatpush1.msra.mxu0 %v898
        %929 = vmatprep.subr.mxu0 0.0
        %930 = vmatpush1.msra.mxu0 %v897
        %931 = vmatprep.subr.mxu0 0.0
        %932 = vmatpush1.msra.mxu0 %v896
        %933 = vmatprep.subr.mxu0 0.0
        %934 = vmatpush1.msra.mxu0 %v895
        %935 = vmatprep.subr.mxu0 0.0
        %936 = vmatpush1.msra.mxu0 %v894
        %937 = vmatprep.subr.mxu0 0.0
        %938 = vmatpush1.msra.mxu0 %v893
        %939 = vmatprep.subr.mxu0 0.0
        %940 = vmatpush1.msra.mxu0 %v892
        %941 = vmatprep.subr.mxu0 0.0
        %942 = vmatpush1.msra.mxu0 %v891
        %943 = vmatprep.subr.mxu0 0.0
        %944 = vmatpush1.msra.mxu0 %v890
        %945 = vmatprep.subr.mxu0 0.0
        %946 = vmatpush1.msra.mxu0 %v889
        %947 = vmatprep.subr.mxu0 0.0
        %948 = vmatpush1.msra.mxu0 %v888
        %949 = vmatprep.subr.mxu0 0.0
        %950 = vmatpush1.msra.mxu0 %v887
        %951 = vmatprep.subr.mxu0 0.0
        %952 = vmatpush1.msra.mxu0 %v886
        %953 = vmatprep.subr.mxu0 0.0
        %954 = vmatpush1.msra.mxu0 %v885
        %955 = vmatprep.subr.mxu0 0.0
        %956 = vmatpush1.msra.mxu0 %v884
        %957 = vmatprep.subr.mxu0 0.0
        %958 = vmatpush1.msra.mxu0 %v883
        %959 = vmatprep.subr.mxu0 0.0
        %960 = vmatpush2.msra.mxu0 %v914
        %961 = vmatprep.subr.mxu0 0.0
        %962 = vmatpush2.msra.mxu0 %v913
        %963 = vmatprep.subr.mxu0 0.0
        %964 = vmatpush2.msra.mxu0 %v912
        %965 = vmatprep.subr.mxu0 0.0
        %966 = vmatpush2.msra.mxu0 %v911
        %967 = vmatprep.subr.mxu0 0.0
        %968 = vmatpush2.msra.mxu0 %v910
        %969 = vmatprep.subr.mxu0 0.0
        %970 = vmatpush2.msra.mxu0 %v909
        %971 = vmatprep.subr.mxu0 0.0
        %972 = vmatpush2.msra.mxu0 %v908
        %973 = vmatprep.subr.mxu0 0.0
        %974 = vmatpush2.msra.mxu0 %v907
        %975 = vmatprep.subr.mxu0 0.0
        %976 = vmatpush2.msra.mxu0 %v906
        %977 = vmatprep.subr.mxu0 0.0
        %978 = vmatpush2.msra.mxu0 %v905
        %979 = vmatprep.subr.mxu0 0.0
        %980 = vmatpush2.msra.mxu0 %v904
        %981 = vmatprep.subr.mxu0 0.0
        %982 = vmatpush2.msra.mxu0 %v903
        %983 = vmatprep.subr.mxu0 0.0
        %984 = vmatpush2.msra.mxu0 %v902
        %985 = vmatprep.subr.mxu0 0.0
        %986 = vmatpush2.msra.mxu0 %v901
        %987 = vmatprep.subr.mxu0 0.0
        %988 = vmatpush2.msra.mxu0 %v900
        %989 = vmatprep.subr.mxu0 0.0
        %990 = vmatpush2.msra.mxu0 %v899
        %991 = vmatprep.mubr.f32.mxu0 %v924
        %992 = vmatmul.mubr.f32.gmra.mxu0 %v920
        %v993 = vpop.f32.mrf.mxu0
        %v994 = vadd.f32 %v915, %v993
        %v995 = vpop.f32.mrf.mxu0
        %996 = vdwg.mxu0
        %v997 = vmax.f32 %v994, 0.0
        %v998 = vld [vmem:[%s5] sm:$0xff]
        %v999 = vld [vmem:[%s5 + $0x8] sm:$0xff]
        %v1000 = vld [vmem:[%s5 + $0x10] sm:$0xff]
        %v1001 = vld [vmem:[%s5 + $0x18] sm:$0xff]
        %v1002 = vld [vmem:[%s5 + $0x20] sm:$0xff]
        %v1003 = vld [vmem:[%s5 + $0x28] sm:$0xff]
        %v1004 = vld [vmem:[%s5 + $0x30] sm:$0xff]
        %v1005 = vld [vmem:[%s5 + $0x38] sm:$0xff]
        %v1006 = vld [vmem:[%s6 + $0x1] sm:$0x1]
        %vm1007 = vcmask 523264
        %v1009 = vsel %vm1007, %v997, 0
        %1011 = vmatprep.subr.mxu0 0.0
        %1012 = vmatpush1.msra.mxu0 0.0
        %1013 = vmatprep.subr.mxu0 0.0
        %1014 = vmatpush1.msra.mxu0 0.0
        %1015 = vmatprep.subr.mxu0 0.0
        %1016 = vmatpush1.msra.mxu0 0.0
        %1017 = vmatprep.subr.mxu0 0.0
        %1018 = vmatpush1.msra.mxu0 0.0
        %1019 = vmatprep.subr.mxu0 0.0
        %1020 = vmatpush1.msra.mxu0 0.0
        %1021 = vmatprep.subr.mxu0 0.0
        %1022 = vmatpush1.msra.mxu0 0.0
        %1023 = vmatprep.subr.mxu0 0.0
        %1024 = vmatpush1.msra.mxu0 0.0
        %1025 = vmatprep.subr.mxu0 0.0
        %1026 = vmatpush1.msra.mxu0 0.0
        %1027 = vmatprep.subr.mxu0 0.0
        %1028 = vmatpush1.msra.mxu0 %v1005
        %1029 = vmatprep.subr.mxu0 0.0
        %1030 = vmatpush1.msra.mxu0 %v1004
        %1031 = vmatprep.subr.mxu0 0.0
        %1032 = vmatpush1.msra.mxu0 %v1003
        %1033 = vmatprep.subr.mxu0 0.0
        %1034 = vmatpush1.msra.mxu0 %v1002
        %1035 = vmatprep.subr.mxu0 0.0
        %1036 = vmatpush1.msra.mxu0 %v1001
        %1037 = vmatprep.subr.mxu0 0.0
        %1038 = vmatpush1.msra.mxu0 %v1000
        %1039 = vmatprep.subr.mxu0 0.0
        %1040 = vmatpush1.msra.mxu0 %v999
        %1041 = vmatprep.subr.mxu0 0.0
        %1042 = vmatpush1.msra.mxu0 %v998
        %1043 = vmatprep.subr.mxu0 0.0
        %1044 = vmatpush2.msra.mxu0 0.0
        %1045 = vmatprep.subr.mxu0 0.0
        %1046 = vmatpush2.msra.mxu0 0.0
        %1047 = vmatprep.subr.mxu0 0.0
        %1048 = vmatpush2.msra.mxu0 0.0
        %1049 = vmatprep.subr.mxu0 0.0
        %1050 = vmatpush2.msra.mxu0 0.0
        %1051 = vmatprep.subr.mxu0 0.0
        %1052 = vmatpush2.msra.mxu0 0.0
        %1053 = vmatprep.subr.mxu0 0.0
        %1054 = vmatpush2.msra.mxu0 0.0
        %1055 = vmatprep.subr.mxu0 0.0
        %1056 = vmatpush2.msra.mxu0 0.0
        %1057 = vmatprep.subr.mxu0 0.0
        %1058 = vmatpush2.msra.mxu0 0.0
        %1059 = vmatprep.subr.mxu0 0.0
        %1060 = vmatpush2.msra.mxu0 0.0
        %1061 = vmatprep.subr.mxu0 0.0
        %1062 = vmatpush2.msra.mxu0 0.0
        %1063 = vmatprep.subr.mxu0 0.0
        %1064 = vmatpush2.msra.mxu0 0.0
        %1065 = vmatprep.subr.mxu0 0.0
        %1066 = vmatpush2.msra.mxu0 0.0
        %1067 = vmatprep.subr.mxu0 0.0
        %1068 = vmatpush2.msra.mxu0 0.0
        %1069 = vmatprep.subr.mxu0 0.0
        %1070 = vmatpush2.msra.mxu0 0.0
        %1071 = vmatprep.subr.mxu0 0.0
        %1072 = vmatpush2.msra.mxu0 0.0
        %1073 = vmatprep.subr.mxu0 0.0
        %1074 = vmatpush2.msra.mxu0 0.0
        %1075 = vmatprep.mubr.f32.mxu0 0.0
        %1076 = vmatmul.mubr.f32.gmra.mxu0 %v1009
        %v1077 = vpop.f32.mrf.mxu0
        %v1078 = vadd.f32 %v1006, %v1077
        %v1079 = vpop.f32.mrf.mxu0
        %1080 = vdwg.mxu0
        %vm1081 = vcmask 516096
        %1082 = vst.msk [vmem:[%s297] sm:$0x1] %vm1081, %v1078
      $region56: #{mtan_rec_unet_forward.6} parent=47 // pred_fallthru
        _
      %p1083 = scmp.lt.s32.totalorder %s22, 1
      %s1084 = scalar_select %p1083, %s22, 1
      %s1085 = scalar_lea.vmem %s7, %s1084
      // Predicated region
      $region57: #{mtan_rec_unet_forward.6} parent=47 // pred_check
        %p1086 = pneg %p202
      $region58: #{mtan_rec_unet_forward.6} parent=47 // pred_check_branch
        %1088 = sbr.rel (%p1086) target = $region60
      $region59: #{mtan_rec_unet_forward.6} parent=47 // pred_region
        _
      $region60: #{mtan_rec_unet_forward.6} parent=47 // pred_fallthru
        _
    $region48: #{mtan_rec_unet_forward.6} parent=5 // pred_fallthru
      _
    %p1089 = scmp.le.s32.totalorder 2, %s13
    // Predicated region
    $region61: #{mtan_rec_unet_forward.6} parent=5 // pred_check
      %p1090 = pneg %p1089
    $region62: #{mtan_rec_unet_forward.6} parent=5 // pred_check_branch
      %1092 = sbr.rel (%p1090) target = $region64
    $region63: #{mtan_rec_unet_forward.6} parent=5 // pred_region
      %s1093 = ssub.s32 %s13, 2
      // Predicated region
      $region65: #{mtan_rec_unet_forward.6} parent=63 // pred_check
        %p1094 = pneg %p208
      $region66: #{mtan_rec_unet_forward.6} parent=63 // pred_check_branch
        %1096 = sbr.rel (%p1094) target = $region68
      $region67: #{mtan_rec_unet_forward.6} parent=63 // pred_region
        %p1097 = scmp.lt.s32.totalorder %s24, 1
        %s1098 = scalar_select %p1097, %s24, 1
        %s1099 = scalar_lea.vmem %s7, %s1098
      $region68: #{mtan_rec_unet_forward.6} parent=63 // pred_fallthru
        _
    $region64: #{mtan_rec_unet_forward.6} parent=5 // pred_fallthru
      _
  $region6: #{mtan_rec_unet_forward.6} parent=0 // loop_footer
    %s17 = sadd.s32 1, %s13
  $region7: #{mtan_rec_unet_forward.6} parent=0 // loop_footer_branch
    %12 = sbr.rel target = $region3
  $region8: #{mtan_rec_unet_forward.6} parent=0 // loop_exit
    _

</llo_original>
